<compile_context>
chip_gen: v6e
topology: v6e:2x2x1
jax: 0.10.0
libtpu: 0.0.40
codegen_flags: <defaults>
</compile_context>

<pallas_src>
import numpy as np
import jax
import jax.numpy as jnp
from jax import lax
from jax.experimental import pallas as pl
from jax.experimental.pallas import tpu as pltpu


# ----------------------------- Pallas kernel -------------------------------

def _make_conv_kernel(stride, Ho, Wo, Ph, Cp_in, Cp_out, with_prelu, with_shortcut):
    """Fused 3x3-conv (+BN bias, +PReLU, +fused-shortcut dot) kernel body.

    Input block  : [1, stride*stride*Ph, Pw, Cp_in]  phase-decomposed padded img
    Weight block : [9*Cp_in, Cp_out]                 BN scale pre-folded
    Output block : [1, Ho*Wo, Cp_out]                lane-dense (Cp_out % 128 == 0)
    """
    M = Ho * Wo

    def kernel(*refs):
        refs = list(refs)
        x_ref, w_ref, b_ref = refs[0], refs[1], refs[2]
        pos = 3
        a_ref = None
        if with_prelu:
            a_ref = refs[pos]; pos += 1
        xs_ref = ws_ref = None
        if with_shortcut:
            xs_ref, ws_ref = refs[pos], refs[pos + 1]; pos += 2
        o_ref = refs[pos]

        acc = None
        if with_shortcut:
            # shortcut fused as an extra MXU dot (K-concat with the conv patches)
            acc = jnp.dot(xs_ref[0], ws_ref[...], preferred_element_type=jnp.float32)

        # 9 accumulated dots over the (kh, kw) shifts -> no im2col in HBM.
        for kh in range(3):
            for kw in range(3):
                row0 = ((kh % stride) * stride + (kw % stride)) * Ph + kh // stride
                col0 = kw // stride
                patch = x_ref[0, row0:row0 + Ho, col0:col0 + Wo, :]
                patch = patch.reshape(M, Cp_in)
                k0 = (kh * 3 + kw) * Cp_in
                t = jnp.dot(patch, w_ref[k0:k0 + Cp_in, :],
                            preferred_element_type=jnp.float32)
                acc = t if acc is None else acc + t

        y = acc + b_ref[...]                      # f32 epilogue (v5e-safe)
        if with_prelu:
            y = jnp.where(y > 0.0, y, a_ref[...] * y)
        o_ref[0] = y.astype(o_ref.dtype)

    return kernel


def fused_conv3x3(xph, w, bias, *, stride, Ho, Wo, Ph, alpha=None, xs=None, ws=None):
    """Fused 3x3 conv over a phase-decomposed, channel-padded NHWC input.

    xph  : [N, stride*stride*Ph, Pw, Cp_in]
    w    : [9*Cp_in, Cp_out]   (BN scale folded into columns)
    bias : [1, Cp_out] f32
    alpha: [1, Cp_out] f32     optional PReLU slope
    xs   : [N, Ho*Wo, Cs]      optional fused-shortcut input
    ws   : [Cs, Cp_out]        optional fused-shortcut weight
    returns [N, Ho*Wo, Cp_out] f32
    """
    N, SSPh, Pw, Cp_in = xph.shape
    Cp_out = w.shape[1]
    kernel = _make_conv_kernel(stride, Ho, Wo, Ph, Cp_in, Cp_out,
                               with_prelu=alpha is not None,
                               with_shortcut=xs is not None)
    in_specs = [
        pl.BlockSpec((1, SSPh, Pw, Cp_in), lambda n: (n, 0, 0, 0)),
        pl.BlockSpec(tuple(w.shape), lambda n: (0, 0)),
        pl.BlockSpec((1, Cp_out), lambda n: (0, 0)),
    ]
    args = [xph, w, bias]
    if alpha is not None:
        in_specs.append(pl.BlockSpec((1, Cp_out), lambda n: (0, 0)))
        args.append(alpha)
    if xs is not None:
        in_specs.append(pl.BlockSpec((1, Ho * Wo, xs.shape[-1]), lambda n: (n, 0, 0)))
        in_specs.append(pl.BlockSpec(tuple(ws.shape), lambda n: (0, 0)))
        args += [xs, ws]

    return pl.pallas_call(
        kernel,
        out_shape=jax.ShapeDtypeStruct((N, Ho * Wo, Cp_out), jnp.float32),
        grid=(N,),     # >= 2 grid steps -> shards cleanly across v7x's 2 TCs
        in_specs=in_specs,
        out_specs=pl.BlockSpec((1, Ho * Wo, Cp_out), lambda n: (n, 0, 0)),
        compiler_params=pltpu.CompilerParams(dimension_semantics=("parallel",)),
    )(*args)


# ------------------------------ JAX glue ----------------------------------

def _round_up(x, m):
    return (x + m - 1) // m * m


def _pad_vec(v, n, fill=0.0):
    return jnp.pad(v, (0, n - v.shape[0]), constant_values=fill)


def fold_bn(bn, eps=1e-5):
    gamma, beta, mean, var = bn
    scale = gamma / jnp.sqrt(var + eps)
    return scale, beta - mean * scale


def build_border_frame(udp, C, H, W, pad=1):
    """Reproduces `meta_frame[index] = udp` from attach_udp_input: udp entries
    are written, in row-major order of a [C, H+2p, W+2p] tensor, into the
    border positions (interior stays zero)."""
    Hp, Wp = H + 2 * pad, W + 2 * pad
    mask = np.ones((C, Hp, Wp), dtype=bool)
    mask[:, pad:H + pad, pad:W + pad] = False
    idx = jnp.asarray(np.flatnonzero(mask))
    flat = jnp.zeros((C * Hp * Wp,), dtype=udp.dtype).at[idx].set(udp)
    return flat.reshape(C, Hp, Wp)


def attach_udp(x_pad, udp, c_real, scale=None, bias=None, pad=1):
    """UDP border attach on a channel-padded NHWC activation.  Optionally
    fuses a per-channel affine (folded BatchNorm) into the interior write."""
    N, H, W, Cp = x_pad.shape
    frame = build_border_frame(udp, c_real, H, W, pad)        # [c_real, Hp, Wp]
    frame = jnp.transpose(frame, (1, 2, 0))                   # [Hp, Wp, c_real]
    frame = jnp.pad(frame, ((0, 0), (0, 0), (0, Cp - c_real)))
    out = jnp.broadcast_to(frame[None], (N, H + 2 * pad, W + 2 * pad, Cp))
    interior = x_pad if scale is None else x_pad * scale + bias
    return out.at[:, pad:H + pad, pad:W + pad, :].set(interior)


def phase_decompose(xp, s):
    """[N, Hp, Wp, C] -> ([N, s*s*Ph, Pw, C], Ph, Pw).  Stride-s phase split so
    the conv kernel only needs contiguous (stride-1) slices of its VMEM block."""
    N, Hp, Wp, C = xp.shape
    Ph, Pw = -(-Hp // s), -(-Wp // s)
    if s == 1:
        return xp, Ph, Pw
    xp = jnp.pad(xp, ((0, 0), (0, s * Ph - Hp), (0, s * Pw - Wp), (0, 0)))
    xp = xp.reshape(N, Ph, s, Pw, s, C).transpose(0, 2, 4, 1, 3, 5)
    return xp.reshape(N, s * s * Ph, Pw, C), Ph, Pw


def prep_conv3x3_w(w_oihw, bn_scale, Cp_in, Cp_out):
    """[Cout, Cin, 3, 3] -> [9*Cp_in, Cp_out] with BN scale folded into columns
    and channels zero-padded (dead lanes stay exactly zero)."""
    Co, Ci, kh, kw = w_oihw.shape
    w = jnp.transpose(w_oihw, (2, 3, 1, 0)) * bn_scale[None, None, None, :]
    w = jnp.pad(w, ((0, 0), (0, 0), (0, Cp_in - Ci), (0, Cp_out - Co)))
    return w.reshape(kh * kw * Cp_in, Cp_out)


def bottleneck_ir_udp_forward(x_nchw, udp1, udp2, params, stride, dim_match,
                              compute_dtype=jnp.bfloat16):
    N, Cin, H, W = x_nchw.shape
    Cout = params['conv1_w'].shape[0]
    Cp_in, Cp_out = _round_up(Cin, 128), _round_up(Cout, 128)
    if dim_match:
        assert Cin == Cout and stride == 1, "identity shortcut needs matching shapes"

    x_nhwc = jnp.transpose(x_nchw, (0, 2, 3, 1))
    x_p = jnp.pad(x_nhwc, ((0, 0), (0, 0), (0, 0), (0, Cp_in - Cin)))

    # folded BN affines (eval mode); pads chosen so dead lanes stay zero
    s0, b0 = fold_bn(params['bn0'])
    s0, b0 = _pad_vec(s0, Cp_in, 1.0), _pad_vec(b0, Cp_in, 0.0)
    s1, b1 = fold_bn(params['bn1'])
    s2, b2 = fold_bn(params['bn2'])

    w1 = prep_conv3x3_w(params['conv1_w'], s1, Cp_in, Cp_out)
    b1 = _pad_vec(b1, Cp_out).reshape(1, -1)
    alpha = _pad_vec(params['prelu'], Cp_out).reshape(1, -1)
    w2 = prep_conv3x3_w(params['conv2_w'], s2, Cp_out, Cp_out)

    Ho = (H - 1) // stride + 1
    Wo = (W - 1) // stride + 1

    if dim_match:
        # identity shortcut, fused as an exact eye-matmul into the conv2 kernel
        ws = jnp.eye(Cp_in, Cp_out, dtype=jnp.float32)
        xs = x_p.reshape(N, H * W, Cp_in)
        bias2 = _pad_vec(b2, Cp_out).reshape(1, -1)
    else:
        # 1x1-conv + BN shortcut, fused into conv2 (K-concat) -> no extra pass
        ssc, bsc = fold_bn(params['bn_sc'])
        ws = params['conv_sc_w'][:, :, 0, 0].T * ssc[None, :]
        ws = jnp.pad(ws, ((0, Cp_in - Cin), (0, Cp_out - Cout)))
        xs = x_p[:, ::stride, ::stride, :].reshape(N, Ho * Wo, Cp_in)
        bias2 = (_pad_vec(b2, Cp_out) + _pad_vec(bsc, Cp_out)).reshape(1, -1)

    # ---- conv1: UDP attach (BN0 fused into interior write) + conv/BN/PReLU ----
    xp1 = attach_udp(x_p, udp1, Cin, scale=s0, bias=b0)
    ph1, Ph1, _ = phase_decompose(xp1, 1)
    y1 = fused_conv3x3(ph1.astype(compute_dtype), w1.astype(compute_dtype), b1,
                       stride=1, Ho=H, Wo=W, Ph=Ph1, alpha=alpha)
    y1 = y1.reshape(N, H, W, Cp_out)

    # ---- conv2: UDP attach + conv/BN + fused shortcut add ----
    yp2 = attach_udp(y1, udp2, Cout)
    ph2, Ph2, _ = phase_decompose(yp2, stride)
    out = fused_conv3x3(ph2.astype(compute_dtype), w2.astype(compute_dtype), bias2,
                        stride=stride, Ho=Ho, Wo=Wo, Ph=Ph2,
                        xs=xs.astype(compute_dtype), ws=ws.astype(compute_dtype))
    out = out.reshape(N, Ho, Wo, Cp_out)[:, :, :, :Cout]
    return jnp.transpose(out, (0, 3, 1, 2))                  # back to NCHW


# -------------------------- pure-JAX reference -----------------------------

def reference_forward(x, udp1, udp2, params, stride, dim_match):
    def bn(t, p, eps=1e-5):
        g, b, m, v = p
        return ((t - m[None, :, None, None]) / jnp.sqrt(v[None, :, None, None] + eps)
                * g[None, :, None, None] + b[None, :, None, None])

    def attach(t, udp, pad=1):
        N, C, H, W = t.shape
        frame = build_border_frame(udp, C, H, W, pad)
        padded = jnp.broadcast_to(frame[None], (N, C, H + 2 * pad, W + 2 * pad))
        return padded.at[:, :, pad:H + pad, pad:W + pad].set(t)

    def conv(t, w, s):
        return lax.conv_general_dilated(
            t, w, (s, s), 'VALID', dimension_numbers=('NCHW', 'OIHW', 'NCHW'))

    r = bn(x, params['bn0'])
    r = conv(attach(r, udp1), params['conv1_w'], 1)
    r = bn(r, params['bn1'])
    a = params['prelu'][None, :, None, None]
    r = jnp.where(r > 0, r, a * r)
    r = conv(attach(r, udp2), params['conv2_w'], stride)
    r = bn(r, params['bn2'])
    if dim_match:
        sc = x
    else:
        sc = bn(conv(x, params['conv_sc_w'], stride), params['bn_sc'])
    return sc + r


# --------------------------------- main ------------------------------------

def _bn_params(k, C):
    k1, k2, k3, k4 = jax.random.split(k, 4)
    gamma = 1.0 + 0.1 * jax.random.normal(k1, (C,), jnp.float32)
    beta = 0.1 * jax.random.normal(k2, (C,), jnp.float32)
    mean = 0.1 * jax.random.normal(k3, (C,), jnp.float32)
    var = 1.0 + 0.1 * jax.random.uniform(k4, (C,), jnp.float32)
    return (gamma, beta, mean, var)


def _make_case(key, N, Cin, Cout, H, W):
    keys = jax.random.split(key, 11)
    params = {
        'bn0':       _bn_params(keys[0], Cin),
        'conv1_w':   0.1 * jax.random.normal(keys[1], (Cout, Cin, 3, 3), jnp.float32),
        'bn1':       _bn_params(keys[2], Cout),
        'prelu':     0.25 + 0.05 * jax.random.normal(keys[3], (Cout,), jnp.float32),
        'conv2_w':   0.1 * jax.random.normal(keys[4], (Cout, Cout, 3, 3), jnp.float32),
        'bn2':       _bn_params(keys[5], Cout),
        'conv_sc_w': 0.1 * jax.random.normal(keys[6], (Cout, Cin, 1, 1), jnp.float32),
        'bn_sc':     _bn_params(keys[7], Cout),
    }
    x = jax.random.normal(keys[8], (N, Cin, H, W), jnp.float32)
    n_border = (H + 2) * (W + 2) - H * W                      # 68 cells / channel
    udp1 = 0.1 * jax.random.normal(keys[9], (Cin * n_border,), jnp.float32)
    udp2 = 0.1 * jax.random.normal(keys[10], (Cout * n_border,), jnp.float32)
    return x, udp1, udp2, params


if __name__ == "__main__":
    N, H, W = 2, 16, 16
    fwd = jax.jit(bottleneck_ir_udp_forward, static_argnums=(4, 5, 6))

    cases = [
        # (dim_match, stride, Cin, Cout)
        (False, 2, 4, 8),   # stride-2, channel-expanding -> fused 1x1-conv shortcut
        (True,  1, 8, 8),   # identity shortcut fused as an extra MXU dot
    ]
    key = jax.random.PRNGKey(0)
    for idx, (dim_match, stride, Cin, Cout) in enumerate(cases):
        x, udp1, udp2, params = _make_case(jax.random.fold_in(key, idx),
                                           N, Cin, Cout, H, W)
        ref = np.asarray(reference_forward(x, udp1, udp2, params, stride, dim_match))
        # f32 MXU inputs: tight check;  bf16 MXU inputs (fast path): loose check
        for dt, tol in ((jnp.float32, 2e-3), (jnp.bfloat16, 5e-2)):
            out = fwd(x, udp1, udp2, params, stride, dim_match, dt)
            out = np.asarray(jax.block_until_ready(out))
            np.testing.assert_allclose(out, ref, rtol=tol, atol=tol)

    print("KERNEL_OK")
</pallas_src>

<mosaic_0001>
module attributes {stable_mosaic.version = 11 : i64} {
  func.func @kernel(%arg0: i32, %arg1: memref<1x18x18x128xf32, #tpu.memory_space<vmem>>, %arg2: memref<1152x128xf32, #tpu.memory_space<vmem>>, %arg3: memref<1x128xf32, #tpu.memory_space<vmem>>, %arg4: memref<1x128xf32, #tpu.memory_space<vmem>>, %arg5: memref<1x256x128xf32, #tpu.memory_space<vmem>>) attributes {dimension_semantics = [#tpu.dimension_semantics<parallel>], iteration_bounds = array<i64: 2>, scalar_prefetch = 0 : i64, scratch_operands = 0 : i64, tpu.core_type = #tpu.core_type<tc>, window_params = [{transform_indices = @transform_0, window_bounds = array<i64: 1, 18, 18, 128>}, {pipeline_mode = #tpu.pipeline_mode<synchronous>, transform_indices = @transform_1, window_bounds = array<i64: 1152, 128>}, {pipeline_mode = #tpu.pipeline_mode<synchronous>, transform_indices = @transform_2, window_bounds = array<i64: 1, 128>}, {pipeline_mode = #tpu.pipeline_mode<synchronous>, transform_indices = @transform_3, window_bounds = array<i64: 1, 128>}, {transform_indices = @transform_4, window_bounds = array<i64: 1, 256, 128>}]} {
    %c0 = arith.constant 0 : index
    %c0_0 = arith.constant 0 : index
    %c0_1 = arith.constant 0 : index
    %c0_2 = arith.constant 0 : index
    %0 = vector.load %arg1[%c0, %c0_0, %c0_1, %c0_2] : memref<1x18x18x128xf32, #tpu.memory_space<vmem>>, vector<1x16x16x128xf32>
    %1 = vector.shape_cast %0 : vector<1x16x16x128xf32> to vector<16x16x128xf32>
    %2 = vector.shape_cast %1 : vector<16x16x128xf32> to vector<256x128xf32>
    %c0_3 = arith.constant 0 : index
    %c0_4 = arith.constant 0 : index
    %3 = vector.load %arg2[%c0_3, %c0_4] : memref<1152x128xf32, #tpu.memory_space<vmem>>, vector<128x128xf32>
    %cst = arith.constant dense<0.000000e+00> : vector<256x128xf32>
    %4 = tpu.matmul %2, %3, %cst {dimension_numbers = #tpu.dot_dimension_numbers<[1], [0], [0], [1], [0, 0, 1, 1], [], []>} : vector<256x128xf32>, vector<128x128xf32>, vector<256x128xf32> -> vector<256x128xf32>
    %c0_5 = arith.constant 0 : index
    %c0_6 = arith.constant 0 : index
    %c1 = arith.constant 1 : index
    %c0_7 = arith.constant 0 : index
    %5 = vector.load %arg1[%c0_5, %c0_6, %c1, %c0_7] : memref<1x18x18x128xf32, #tpu.memory_space<vmem>>, vector<1x16x16x128xf32>
    %6 = vector.shape_cast %5 : vector<1x16x16x128xf32> to vector<16x16x128xf32>
    %7 = vector.shape_cast %6 : vector<16x16x128xf32> to vector<256x128xf32>
    %c128 = arith.constant 128 : index
    %c0_8 = arith.constant 0 : index
    %8 = vector.load %arg2[%c128, %c0_8] : memref<1152x128xf32, #tpu.memory_space<vmem>>, vector<128x128xf32>
    %cst_9 = arith.constant dense<0.000000e+00> : vector<256x128xf32>
    %9 = tpu.matmul %7, %8, %cst_9 {dimension_numbers = #tpu.dot_dimension_numbers<[1], [0], [0], [1], [0, 0, 1, 1], [], []>} : vector<256x128xf32>, vector<128x128xf32>, vector<256x128xf32> -> vector<256x128xf32>
    %10 = arith.addf %4, %9 : vector<256x128xf32>
    %c0_10 = arith.constant 0 : index
    %c0_11 = arith.constant 0 : index
    %c2 = arith.constant 2 : index
    %c0_12 = arith.constant 0 : index
    %11 = vector.load %arg1[%c0_10, %c0_11, %c2, %c0_12] : memref<1x18x18x128xf32, #tpu.memory_space<vmem>>, vector<1x16x16x128xf32>
    %12 = vector.shape_cast %11 : vector<1x16x16x128xf32> to vector<16x16x128xf32>
    %13 = vector.shape_cast %12 : vector<16x16x128xf32> to vector<256x128xf32>
    %c256 = arith.constant 256 : index
    %c0_13 = arith.constant 0 : index
    %14 = vector.load %arg2[%c256, %c0_13] : memref<1152x128xf32, #tpu.memory_space<vmem>>, vector<128x128xf32>
    %cst_14 = arith.constant dense<0.000000e+00> : vector<256x128xf32>
    %15 = tpu.matmul %13, %14, %cst_14 {dimension_numbers = #tpu.dot_dimension_numbers<[1], [0], [0], [1], [0, 0, 1, 1], [], []>} : vector<256x128xf32>, vector<128x128xf32>, vector<256x128xf32> -> vector<256x128xf32>
    %16 = arith.addf %10, %15 : vector<256x128xf32>
    %c0_15 = arith.constant 0 : index
    %c1_16 = arith.constant 1 : index
    %c0_17 = arith.constant 0 : index
    %c0_18 = arith.constant 0 : index
    %17 = vector.load %arg1[%c0_15, %c1_16, %c0_17, %c0_18] : memref<1x18x18x128xf32, #tpu.memory_space<vmem>>, vector<1x16x16x128xf32>
    %18 = vector.shape_cast %17 : vector<1x16x16x128xf32> to vector<16x16x128xf32>
    %19 = vector.shape_cast %18 : vector<16x16x128xf32> to vector<256x128xf32>
    %c384 = arith.constant 384 : index
    %c0_19 = arith.constant 0 : index
    %20 = vector.load %arg2[%c384, %c0_19] : memref<1152x128xf32, #tpu.memory_space<vmem>>, vector<128x128xf32>
    %cst_20 = arith.constant dense<0.000000e+00> : vector<256x128xf32>
    %21 = tpu.matmul %19, %20, %cst_20 {dimension_numbers = #tpu.dot_dimension_numbers<[1], [0], [0], [1], [0, 0, 1, 1], [], []>} : vector<256x128xf32>, vector<128x128xf32>, vector<256x128xf32> -> vector<256x128xf32>
    %22 = arith.addf %16, %21 : vector<256x128xf32>
    %c0_21 = arith.constant 0 : index
    %c1_22 = arith.constant 1 : index
    %c1_23 = arith.constant 1 : index
    %c0_24 = arith.constant 0 : index
    %23 = vector.load %arg1[%c0_21, %c1_22, %c1_23, %c0_24] : memref<1x18x18x128xf32, #tpu.memory_space<vmem>>, vector<1x16x16x128xf32>
    %24 = vector.shape_cast %23 : vector<1x16x16x128xf32> to vector<16x16x128xf32>
    %25 = vector.shape_cast %24 : vector<16x16x128xf32> to vector<256x128xf32>
    %c512 = arith.constant 512 : index
    %c0_25 = arith.constant 0 : index
    %26 = vector.load %arg2[%c512, %c0_25] : memref<1152x128xf32, #tpu.memory_space<vmem>>, vector<128x128xf32>
    %cst_26 = arith.constant dense<0.000000e+00> : vector<256x128xf32>
    %27 = tpu.matmul %25, %26, %cst_26 {dimension_numbers = #tpu.dot_dimension_numbers<[1], [0], [0], [1], [0, 0, 1, 1], [], []>} : vector<256x128xf32>, vector<128x128xf32>, vector<256x128xf32> -> vector<256x128xf32>
    %28 = arith.addf %22, %27 : vector<256x128xf32>
    %c0_27 = arith.constant 0 : index
    %c1_28 = arith.constant 1 : index
    %c2_29 = arith.constant 2 : index
    %c0_30 = arith.constant 0 : index
    %29 = vector.load %arg1[%c0_27, %c1_28, %c2_29, %c0_30] : memref<1x18x18x128xf32, #tpu.memory_space<vmem>>, vector<1x16x16x128xf32>
    %30 = vector.shape_cast %29 : vector<1x16x16x128xf32> to vector<16x16x128xf32>
    %31 = vector.shape_cast %30 : vector<16x16x128xf32> to vector<256x128xf32>
    %c640 = arith.constant 640 : index
    %c0_31 = arith.constant 0 : index
    %32 = vector.load %arg2[%c640, %c0_31] : memref<1152x128xf32, #tpu.memory_space<vmem>>, vector<128x128xf32>
    %cst_32 = arith.constant dense<0.000000e+00> : vector<256x128xf32>
    %33 = tpu.matmul %31, %32, %cst_32 {dimension_numbers = #tpu.dot_dimension_numbers<[1], [0], [0], [1], [0, 0, 1, 1], [], []>} : vector<256x128xf32>, vector<128x128xf32>, vector<256x128xf32> -> vector<256x128xf32>
    %34 = arith.addf %28, %33 : vector<256x128xf32>
    %c0_33 = arith.constant 0 : index
    %c2_34 = arith.constant 2 : index
    %c0_35 = arith.constant 0 : index
    %c0_36 = arith.constant 0 : index
    %35 = vector.load %arg1[%c0_33, %c2_34, %c0_35, %c0_36] : memref<1x18x18x128xf32, #tpu.memory_space<vmem>>, vector<1x16x16x128xf32>
    %36 = vector.shape_cast %35 : vector<1x16x16x128xf32> to vector<16x16x128xf32>
    %37 = vector.shape_cast %36 : vector<16x16x128xf32> to vector<256x128xf32>
    %c768 = arith.constant 768 : index
    %c0_37 = arith.constant 0 : index
    %38 = vector.load %arg2[%c768, %c0_37] : memref<1152x128xf32, #tpu.memory_space<vmem>>, vector<128x128xf32>
    %cst_38 = arith.constant dense<0.000000e+00> : vector<256x128xf32>
    %39 = tpu.matmul %37, %38, %cst_38 {dimension_numbers = #tpu.dot_dimension_numbers<[1], [0], [0], [1], [0, 0, 1, 1], [], []>} : vector<256x128xf32>, vector<128x128xf32>, vector<256x128xf32> -> vector<256x128xf32>
    %40 = arith.addf %34, %39 : vector<256x128xf32>
    %c0_39 = arith.constant 0 : index
    %c2_40 = arith.constant 2 : index
    %c1_41 = arith.constant 1 : index
    %c0_42 = arith.constant 0 : index
    %41 = vector.load %arg1[%c0_39, %c2_40, %c1_41, %c0_42] : memref<1x18x18x128xf32, #tpu.memory_space<vmem>>, vector<1x16x16x128xf32>
    %42 = vector.shape_cast %41 : vector<1x16x16x128xf32> to vector<16x16x128xf32>
    %43 = vector.shape_cast %42 : vector<16x16x128xf32> to vector<256x128xf32>
    %c896 = arith.constant 896 : index
    %c0_43 = arith.constant 0 : index
    %44 = vector.load %arg2[%c896, %c0_43] : memref<1152x128xf32, #tpu.memory_space<vmem>>, vector<128x128xf32>
    %cst_44 = arith.constant dense<0.000000e+00> : vector<256x128xf32>
    %45 = tpu.matmul %43, %44, %cst_44 {dimension_numbers = #tpu.dot_dimension_numbers<[1], [0], [0], [1], [0, 0, 1, 1], [], []>} : vector<256x128xf32>, vector<128x128xf32>, vector<256x128xf32> -> vector<256x128xf32>
    %46 = arith.addf %40, %45 : vector<256x128xf32>
    %c0_45 = arith.constant 0 : index
    %c2_46 = arith.constant 2 : index
    %c2_47 = arith.constant 2 : index
    %c0_48 = arith.constant 0 : index
    %47 = vector.load %arg1[%c0_45, %c2_46, %c2_47, %c0_48] : memref<1x18x18x128xf32, #tpu.memory_space<vmem>>, vector<1x16x16x128xf32>
    %48 = vector.shape_cast %47 : vector<1x16x16x128xf32> to vector<16x16x128xf32>
    %49 = vector.shape_cast %48 : vector<16x16x128xf32> to vector<256x128xf32>
    %c1024 = arith.constant 1024 : index
    %c0_49 = arith.constant 0 : index
    %50 = vector.load %arg2[%c1024, %c0_49] : memref<1152x128xf32, #tpu.memory_space<vmem>>, vector<128x128xf32>
    %cst_50 = arith.constant dense<0.000000e+00> : vector<256x128xf32>
    %51 = tpu.matmul %49, %50, %cst_50 {dimension_numbers = #tpu.dot_dimension_numbers<[1], [0], [0], [1], [0, 0, 1, 1], [], []>} : vector<256x128xf32>, vector<128x128xf32>, vector<256x128xf32> -> vector<256x128xf32>
    %52 = arith.addf %46, %51 : vector<256x128xf32>
    %c0_51 = arith.constant 0 : index
    %c0_52 = arith.constant 0 : index
    %53 = vector.load %arg3[%c0_51, %c0_52] : memref<1x128xf32, #tpu.memory_space<vmem>>, vector<1x128xf32>
    %54 = vector.broadcast %53 : vector<1x128xf32> to vector<256x128xf32>
    %55 = arith.addf %52, %54 : vector<256x128xf32>
    %cst_53 = arith.constant 0.000000e+00 : f32
    %56 = vector.broadcast %cst_53 : f32 to vector<256x128xf32>
    %57 = arith.cmpf ogt, %55, %56 : vector<256x128xf32>
    %c0_54 = arith.constant 0 : index
    %c0_55 = arith.constant 0 : index
    %58 = vector.load %arg4[%c0_54, %c0_55] : memref<1x128xf32, #tpu.memory_space<vmem>>, vector<1x128xf32>
    %59 = vector.broadcast %58 : vector<1x128xf32> to vector<256x128xf32>
    %60 = arith.mulf %59, %55 : vector<256x128xf32>
    %61 = arith.select %57, %55, %60 : vector<256x128xi1>, vector<256x128xf32>
    %c0_56 = arith.constant 0 : index
    %c0_57 = arith.constant 0 : index
    %c0_58 = arith.constant 0 : index
    %62 = vector.load %arg5[%c0_56, %c0_57, %c0_58] : memref<1x256x128xf32, #tpu.memory_space<vmem>>, vector<1x256x128xf32>
    %63 = vector.shape_cast %62 : vector<1x256x128xf32> to vector<256x128xf32>
    %64 = vector.shape_cast %61 : vector<256x128xf32> to vector<1x256x128xf32>
    tpu.vector_store %arg5[%c0_56, %c0_57, %c0_58], %64 {strides = array<i32>} : memref<1x256x128xf32, #tpu.memory_space<vmem>>, vector<1x256x128xf32>,
    return
  }
  func.func @transform_0(%arg0: i32) -> (i32, i32, i32, i32) {
    %c0_i32 = arith.constant 0 : i32
    %c0_i32_0 = arith.constant 0 : i32
    %c0_i32_1 = arith.constant 0 : i32
    %c0_i32_2 = arith.constant 0 : i32
    return %arg0, %c0_i32, %c0_i32_0, %c0_i32_1 : i32, i32, i32, i32
  }
  func.func @transform_1(%arg0: i32) -> (i32, i32) {
    %c0_i32 = arith.constant 0 : i32
    %c0_i32_0 = arith.constant 0 : i32
    %c0_i32_1 = arith.constant 0 : i32
    return %c0_i32, %c0_i32_0 : i32, i32
  }
  func.func @transform_2(%arg0: i32) -> (i32, i32) {
    %c0_i32 = arith.constant 0 : i32
    %c0_i32_0 = arith.constant 0 : i32
    %c0_i32_1 = arith.constant 0 : i32
    return %c0_i32, %c0_i32_0 : i32, i32
  }
  func.func @transform_3(%arg0: i32) -> (i32, i32) {
    %c0_i32 = arith.constant 0 : i32
    %c0_i32_0 = arith.constant 0 : i32
    %c0_i32_1 = arith.constant 0 : i32
    return %c0_i32, %c0_i32_0 : i32, i32
  }
  func.func @transform_4(%arg0: i32) -> (i32, i32, i32) {
    %c0_i32 = arith.constant 0 : i32
    %c0_i32_0 = arith.constant 0 : i32
    %c0_i32_1 = arith.constant 0 : i32
    return %arg0, %c0_i32, %c0_i32_0 : i32, i32, i32
  }
}

module attributes {stable_mosaic.version = 11 : i64} {
  func.func @kernel(%arg0: i32, %arg1: memref<1x36x9x128xf32, #tpu.memory_space<vmem>>, %arg2: memref<1152x128xf32, #tpu.memory_space<vmem>>, %arg3: memref<1x128xf32, #tpu.memory_space<vmem>>, %arg4: memref<1x64x128xf32, #tpu.memory_space<vmem>>, %arg5: memref<128x128xf32, #tpu.memory_space<vmem>>, %arg6: memref<1x64x128xf32, #tpu.memory_space<vmem>>) attributes {dimension_semantics = [#tpu.dimension_semantics<parallel>], iteration_bounds = array<i64: 2>, scalar_prefetch = 0 : i64, scratch_operands = 0 : i64, tpu.core_type = #tpu.core_type<tc>, window_params = [{transform_indices = @transform_0, window_bounds = array<i64: 1, 36, 9, 128>}, {pipeline_mode = #tpu.pipeline_mode<synchronous>, transform_indices = @transform_1, window_bounds = array<i64: 1152, 128>}, {pipeline_mode = #tpu.pipeline_mode<synchronous>, transform_indices = @transform_2, window_bounds = array<i64: 1, 128>}, {transform_indices = @transform_3, window_bounds = array<i64: 1, 64, 128>}, {pipeline_mode = #tpu.pipeline_mode<synchronous>, transform_indices = @transform_4, window_bounds = array<i64: 128, 128>}, {transform_indices = @transform_5, window_bounds = array<i64: 1, 64, 128>}]} {
    %c0 = arith.constant 0 : index
    %c0_0 = arith.constant 0 : index
    %c0_1 = arith.constant 0 : index
    %0 = vector.load %arg4[%c0, %c0_0, %c0_1] : memref<1x64x128xf32, #tpu.memory_space<vmem>>, vector<1x64x128xf32>
    %1 = vector.shape_cast %0 : vector<1x64x128xf32> to vector<64x128xf32>
    %c0_2 = arith.constant 0 : index
    %c0_3 = arith.constant 0 : index
    %2 = vector.load %arg5[%c0_2, %c0_3] : memref<128x128xf32, #tpu.memory_space<vmem>>, vector<128x128xf32>
    %cst = arith.constant dense<0.000000e+00> : vector<64x128xf32>
    %3 = tpu.matmul %1, %2, %cst {dimension_numbers = #tpu.dot_dimension_numbers<[1], [0], [0], [1], [0, 0, 1, 1], [], []>} : vector<64x128xf32>, vector<128x128xf32>, vector<64x128xf32> -> vector<64x128xf32>
    %c0_4 = arith.constant 0 : index
    %c0_5 = arith.constant 0 : index
    %c0_6 = arith.constant 0 : index
    %c0_7 = arith.constant 0 : index
    %4 = vector.load %arg1[%c0_4, %c0_5, %c0_6, %c0_7] : memref<1x36x9x128xf32, #tpu.memory_space<vmem>>, vector<1x8x8x128xf32>
    %5 = vector.shape_cast %4 : vector<1x8x8x128xf32> to vector<8x8x128xf32>
    %6 = vector.shape_cast %5 : vector<8x8x128xf32> to vector<64x128xf32>
    %c0_8 = arith.constant 0 : index
    %c0_9 = arith.constant 0 : index
    %7 = vector.load %arg2[%c0_8, %c0_9] : memref<1152x128xf32, #tpu.memory_space<vmem>>, vector<128x128xf32>
    %cst_10 = arith.constant dense<0.000000e+00> : vector<64x128xf32>
    %8 = tpu.matmul %6, %7, %cst_10 {dimension_numbers = #tpu.dot_dimension_numbers<[1], [0], [0], [1], [0, 0, 1, 1], [], []>} : vector<64x128xf32>, vector<128x128xf32>, vector<64x128xf32> -> vector<64x128xf32>
    %9 = arith.addf %3, %8 : vector<64x128xf32>
    %c0_11 = arith.constant 0 : index
    %c9 = arith.constant 9 : index
    %c0_12 = arith.constant 0 : index
    %c0_13 = arith.constant 0 : index
    %10 = vector.load %arg1[%c0_11, %c9, %c0_12, %c0_13] : memref<1x36x9x128xf32, #tpu.memory_space<vmem>>, vector<1x8x8x128xf32>
    %11 = vector.shape_cast %10 : vector<1x8x8x128xf32> to vector<8x8x128xf32>
    %12 = vector.shape_cast %11 : vector<8x8x128xf32> to vector<64x128xf32>
    %c128 = arith.constant 128 : index
    %c0_14 = arith.constant 0 : index
    %13 = vector.load %arg2[%c128, %c0_14] : memref<1152x128xf32, #tpu.memory_space<vmem>>, vector<128x128xf32>
    %cst_15 = arith.constant dense<0.000000e+00> : vector<64x128xf32>
    %14 = tpu.matmul %12, %13, %cst_15 {dimension_numbers = #tpu.dot_dimension_numbers<[1], [0], [0], [1], [0, 0, 1, 1], [], []>} : vector<64x128xf32>, vector<128x128xf32>, vector<64x128xf32> -> vector<64x128xf32>
    %15 = arith.addf %9, %14 : vector<64x128xf32>
    %c0_16 = arith.constant 0 : index
    %c0_17 = arith.constant 0 : index
    %c1 = arith.constant 1 : index
    %c0_18 = arith.constant 0 : index
    %16 = vector.load %arg1[%c0_16, %c0_17, %c1, %c0_18] : memref<1x36x9x128xf32, #tpu.memory_space<vmem>>, vector<1x8x8x128xf32>
    %17 = vector.shape_cast %16 : vector<1x8x8x128xf32> to vector<8x8x128xf32>
    %18 = vector.shape_cast %17 : vector<8x8x128xf32> to vector<64x128xf32>
    %c256 = arith.constant 256 : index
    %c0_19 = arith.constant 0 : index
    %19 = vector.load %arg2[%c256, %c0_19] : memref<1152x128xf32, #tpu.memory_space<vmem>>, vector<128x128xf32>
    %cst_20 = arith.constant dense<0.000000e+00> : vector<64x128xf32>
    %20 = tpu.matmul %18, %19, %cst_20 {dimension_numbers = #tpu.dot_dimension_numbers<[1], [0], [0], [1], [0, 0, 1, 1], [], []>} : vector<64x128xf32>, vector<128x128xf32>, vector<64x128xf32> -> vector<64x128xf32>
    %21 = arith.addf %15, %20 : vector<64x128xf32>
    %c0_21 = arith.constant 0 : index
    %c18 = arith.constant 18 : index
    %c0_22 = arith.constant 0 : index
    %c0_23 = arith.constant 0 : index
    %22 = vector.load %arg1[%c0_21, %c18, %c0_22, %c0_23] : memref<1x36x9x128xf32, #tpu.memory_space<vmem>>, vector<1x8x8x128xf32>
    %23 = vector.shape_cast %22 : vector<1x8x8x128xf32> to vector<8x8x128xf32>
    %24 = vector.shape_cast %23 : vector<8x8x128xf32> to vector<64x128xf32>
    %c384 = arith.constant 384 : index
    %c0_24 = arith.constant 0 : index
    %25 = vector.load %arg2[%c384, %c0_24] : memref<1152x128xf32, #tpu.memory_space<vmem>>, vector<128x128xf32>
    %cst_25 = arith.constant dense<0.000000e+00> : vector<64x128xf32>
    %26 = tpu.matmul %24, %25, %cst_25 {dimension_numbers = #tpu.dot_dimension_numbers<[1], [0], [0], [1], [0, 0, 1, 1], [], []>} : vector<64x128xf32>, vector<128x128xf32>, vector<64x128xf32> -> vector<64x128xf32>
    %27 = arith.addf %21, %26 : vector<64x128xf32>
    %c0_26 = arith.constant 0 : index
    %c27 = arith.constant 27 : index
    %c0_27 = arith.constant 0 : index
    %c0_28 = arith.constant 0 : index
    %28 = vector.load %arg1[%c0_26, %c27, %c0_27, %c0_28] : memref<1x36x9x128xf32, #tpu.memory_space<vmem>>, vector<1x8x8x128xf32>
    %29 = vector.shape_cast %28 : vector<1x8x8x128xf32> to vector<8x8x128xf32>
    %30 = vector.shape_cast %29 : vector<8x8x128xf32> to vector<64x128xf32>
    %c512 = arith.constant 512 : index
    %c0_29 = arith.constant 0 : index
    %31 = vector.load %arg2[%c512, %c0_29] : memref<1152x128xf32, #tpu.memory_space<vmem>>, vector<128x128xf32>
    %cst_30 = arith.constant dense<0.000000e+00> : vector<64x128xf32>
    %32 = tpu.matmul %30, %31, %cst_30 {dimension_numbers = #tpu.dot_dimension_numbers<[1], [0], [0], [1], [0, 0, 1, 1], [], []>} : vector<64x128xf32>, vector<128x128xf32>, vector<64x128xf32> -> vector<64x128xf32>
    %33 = arith.addf %27, %32 : vector<64x128xf32>
    %c0_31 = arith.constant 0 : index
    %c18_32 = arith.constant 18 : index
    %c1_33 = arith.constant 1 : index
    %c0_34 = arith.constant 0 : index
    %34 = vector.load %arg1[%c0_31, %c18_32, %c1_33, %c0_34] : memref<1x36x9x128xf32, #tpu.memory_space<vmem>>, vector<1x8x8x128xf32>
    %35 = vector.shape_cast %34 : vector<1x8x8x128xf32> to vector<8x8x128xf32>
    %36 = vector.shape_cast %35 : vector<8x8x128xf32> to vector<64x128xf32>
    %c640 = arith.constant 640 : index
    %c0_35 = arith.constant 0 : index
    %37 = vector.load %arg2[%c640, %c0_35] : memref<1152x128xf32, #tpu.memory_space<vmem>>, vector<128x128xf32>
    %cst_36 = arith.constant dense<0.000000e+00> : vector<64x128xf32>
    %38 = tpu.matmul %36, %37, %cst_36 {dimension_numbers = #tpu.dot_dimension_numbers<[1], [0], [0], [1], [0, 0, 1, 1], [], []>} : vector<64x128xf32>, vector<128x128xf32>, vector<64x128xf32> -> vector<64x128xf32>
    %39 = arith.addf %33, %38 : vector<64x128xf32>
    %c0_37 = arith.constant 0 : index
    %c1_38 = arith.constant 1 : index
    %c0_39 = arith.constant 0 : index
    %c0_40 = arith.constant 0 : index
    %40 = vector.load %arg1[%c0_37, %c1_38, %c0_39, %c0_40] : memref<1x36x9x128xf32, #tpu.memory_space<vmem>>, vector<1x8x8x128xf32>
    %41 = vector.shape_cast %40 : vector<1x8x8x128xf32> to vector<8x8x128xf32>
    %42 = vector.shape_cast %41 : vector<8x8x128xf32> to vector<64x128xf32>
    %c768 = arith.constant 768 : index
    %c0_41 = arith.constant 0 : index
    %43 = vector.load %arg2[%c768, %c0_41] : memref<1152x128xf32, #tpu.memory_space<vmem>>, vector<128x128xf32>
    %cst_42 = arith.constant dense<0.000000e+00> : vector<64x128xf32>
    %44 = tpu.matmul %42, %43, %cst_42 {dimension_numbers = #tpu.dot_dimension_numbers<[1], [0], [0], [1], [0, 0, 1, 1], [], []>} : vector<64x128xf32>, vector<128x128xf32>, vector<64x128xf32> -> vector<64x128xf32>
    %45 = arith.addf %39, %44 : vector<64x128xf32>
    %c0_43 = arith.constant 0 : index
    %c10 = arith.constant 10 : index
    %c0_44 = arith.constant 0 : index
    %c0_45 = arith.constant 0 : index
    %46 = vector.load %arg1[%c0_43, %c10, %c0_44, %c0_45] : memref<1x36x9x128xf32, #tpu.memory_space<vmem>>, vector<1x8x8x128xf32>
    %47 = vector.shape_cast %46 : vector<1x8x8x128xf32> to vector<8x8x128xf32>
    %48 = vector.shape_cast %47 : vector<8x8x128xf32> to vector<64x128xf32>
    %c896 = arith.constant 896 : index
    %c0_46 = arith.constant 0 : index
    %49 = vector.load %arg2[%c896, %c0_46] : memref<1152x128xf32, #tpu.memory_space<vmem>>, vector<128x128xf32>
    %cst_47 = arith.constant dense<0.000000e+00> : vector<64x128xf32>
    %50 = tpu.matmul %48, %49, %cst_47 {dimension_numbers = #tpu.dot_dimension_numbers<[1], [0], [0], [1], [0, 0, 1, 1], [], []>} : vector<64x128xf32>, vector<128x128xf32>, vector<64x128xf32> -> vector<64x128xf32>
    %51 = arith.addf %45, %50 : vector<64x128xf32>
    %c0_48 = arith.constant 0 : index
    %c1_49 = arith.constant 1 : index
    %c1_50 = arith.constant 1 : index
    %c0_51 = arith.constant 0 : index
    %52 = vector.load %arg1[%c0_48, %c1_49, %c1_50, %c0_51] : memref<1x36x9x128xf32, #tpu.memory_space<vmem>>, vector<1x8x8x128xf32>
    %53 = vector.shape_cast %52 : vector<1x8x8x128xf32> to vector<8x8x128xf32>
    %54 = vector.shape_cast %53 : vector<8x8x128xf32> to vector<64x128xf32>
    %c1024 = arith.constant 1024 : index
    %c0_52 = arith.constant 0 : index
    %55 = vector.load %arg2[%c1024, %c0_52] : memref<1152x128xf32, #tpu.memory_space<vmem>>, vector<128x128xf32>
    %cst_53 = arith.constant dense<0.000000e+00> : vector<64x128xf32>
    %56 = tpu.matmul %54, %55, %cst_53 {dimension_numbers = #tpu.dot_dimension_numbers<[1], [0], [0], [1], [0, 0, 1, 1], [], []>} : vector<64x128xf32>, vector<128x128xf32>, vector<64x128xf32> -> vector<64x128xf32>
    %57 = arith.addf %51, %56 : vector<64x128xf32>
    %c0_54 = arith.constant 0 : index
    %c0_55 = arith.constant 0 : index
    %58 = vector.load %arg3[%c0_54, %c0_55] : memref<1x128xf32, #tpu.memory_space<vmem>>, vector<1x128xf32>
    %59 = vector.broadcast %58 : vector<1x128xf32> to vector<64x128xf32>
    %60 = arith.addf %57, %59 : vector<64x128xf32>
    %c0_56 = arith.constant 0 : index
    %c0_57 = arith.constant 0 : index
    %c0_58 = arith.constant 0 : index
    %61 = vector.load %arg6[%c0_56, %c0_57, %c0_58] : memref<1x64x128xf32, #tpu.memory_space<vmem>>, vector<1x64x128xf32>
    %62 = vector.shape_cast %61 : vector<1x64x128xf32> to vector<64x128xf32>
    %63 = vector.shape_cast %60 : vector<64x128xf32> to vector<1x64x128xf32>
    tpu.vector_store %arg6[%c0_56, %c0_57, %c0_58], %63 {strides = array<i32>} : memref<1x64x128xf32, #tpu.memory_space<vmem>>, vector<1x64x128xf32>,
    return
  }
  func.func @transform_0(%arg0: i32) -> (i32, i32, i32, i32) {
    %c0_i32 = arith.constant 0 : i32
    %c0_i32_0 = arith.constant 0 : i32
    %c0_i32_1 = arith.constant 0 : i32
    %c0_i32_2 = arith.constant 0 : i32
    return %arg0, %c0_i32, %c0_i32_0, %c0_i32_1 : i32, i32, i32, i32
  }
  func.func @transform_1(%arg0: i32) -> (i32, i32) {
    %c0_i32 = arith.constant 0 : i32
    %c0_i32_0 = arith.constant 0 : i32
    %c0_i32_1 = arith.constant 0 : i32
    return %c0_i32, %c0_i32_0 : i32, i32
  }
  func.func @transform_2(%arg0: i32) -> (i32, i32) {
    %c0_i32 = arith.constant 0 : i32
    %c0_i32_0 = arith.constant 0 : i32
    %c0_i32_1 = arith.constant 0 : i32
    return %c0_i32, %c0_i32_0 : i32, i32
  }
  func.func @transform_3(%arg0: i32) -> (i32, i32, i32) {
    %c0_i32 = arith.constant 0 : i32
    %c0_i32_0 = arith.constant 0 : i32
    %c0_i32_1 = arith.constant 0 : i32
    return %arg0, %c0_i32, %c0_i32_0 : i32, i32, i32
  }
  func.func @transform_4(%arg0: i32) -> (i32, i32) {
    %c0_i32 = arith.constant 0 : i32
    %c0_i32_0 = arith.constant 0 : i32
    %c0_i32_1 = arith.constant 0 : i32
    return %c0_i32, %c0_i32_0 : i32, i32
  }
  func.func @transform_5(%arg0: i32) -> (i32, i32, i32) {
    %c0_i32 = arith.constant 0 : i32
    %c0_i32_0 = arith.constant 0 : i32
    %c0_i32_1 = arith.constant 0 : i32
    return %arg0, %c0_i32, %c0_i32_0 : i32, i32, i32
  }
}

</mosaic_0001>

<llo_original>
// kernel: bottleneck_ir_udp_forward.2
$region0: #{bottleneck_ir_udp_forward.2}
  #allocation0 [shape = 'u32[]', space=smem, size = 0x4, offset = 0x4, fixed_abs, tag = 'smem constant byte address 0x4 - core index']
  #allocation1 [shape = 'u32[144,128]{1,0:T(1,128)}', space=vmem, size = 0x12000, scoped, tag = 'internal scratch']
  %s0 = inlined_call_operand.vmem [shape: f32[2,18,18,128], index: 0, kind: input, shape index: {}]
  %s1 = inlined_call_operand.vmem [shape: f32[1152,128], index: 1, kind: input, shape index: {}]
  %s2 = inlined_call_operand.vmem [shape: f32[1,128], index: 2, kind: input, shape index: {}]
  %s3 = inlined_call_operand.vmem [shape: f32[1,128], index: 3, kind: input, shape index: {}]
  %s4 = inlined_call_operand.vmem [shape: f32[2,256,128], index: 4, kind: output, shape index: {}]
  %s5 = sld [smem:[#allocation0]]
  $region49: #{bottleneck_ir_udp_forward.2} parent=0
    _
  %s7 = ssub.s32 1, %s5
  %s8 = scalar_select 0, %s7, %s5
  loop: start=0, step=1, limit=4
  $region2: #{bottleneck_ir_udp_forward.2} parent=0 // loop_pre_header
    _
  $region3: #{bottleneck_ir_udp_forward.2} parent=0 // loop_header
    %s10 = sphi 0, %s14
    %p11 = scmp.ge.s32.totalorder %s10, 4
    %s20 = sphi 0, %s22
    %s23 = sphi 0, %s20
    %s24 = sphi 0, %s23
    %s40 = sphi 0, %s24
    %s44 = sphi 0, %s44
    %s46 = sphi 0, %s44
    %s47 = sphi 0, %s46
    %s61 = sphi 0, %s47
    %s65 = sphi 0, %s65
    %s67 = sphi 0, %s65
    %s68 = sphi 0, %s67
    %s82 = sphi 0, %s68
    %s86 = sphi 0, %s86
    %s88 = sphi 0, %s86
    %s89 = sphi 0, %s88
    %s103 = sphi 0, %s89
    %s109 = sphi 0, %s111
    %s112 = sphi 0, %s109
    %s113 = sphi 0, %s112
    %s129 = sphi 0, %s113
  $region4: #{bottleneck_ir_udp_forward.2} parent=0 // loop_header_branch
    %13 = sbr.rel (%p11) target = $region8
  $region5: #{bottleneck_ir_udp_forward.2} parent=0 // loop_body
    %s15 = ssub.s32 %s10, 1
    %s16 = ssub.s32 %s10, 2
    %s17 = sadd.s32 %s10, 1
    %s18 = ssub.s32 %s10, %s17
    %p19 = scmp.eq.s32.totalorder %s18, 0
    %s21 = sadd.s32 %s20, 1
    %s22 = scalar_select %p19, %s20, %s21
    %p25 = pneg %p19
    %p26 = scmp.eq.s32.totalorder %s10, 1
    %p27 = por %p25, %p26
    %p28 = scmp.ne.s32.totalorder %s20, %s23
    %p29 = scmp.eq.s32.totalorder %s10, 0
    %p30 = por %p28, %p29
    %p31 = scmp.ne.s32.totalorder %s20, %s23
    %p32 = scmp.eq.s32.totalorder %s15, 1
    %p33 = por %p31, %p32
    %p34 = scmp.ne.s32.totalorder %s23, %s24
    %p35 = scmp.eq.s32.totalorder %s15, 0
    %p36 = por %p34, %p35
    %p37 = scmp.ne.s32.totalorder %s23, %s24
    %p38 = scmp.eq.s32.totalorder %s16, 1
    %p39 = por %p37, %p38
    %p41 = scmp.ne.s32.totalorder %s24, %s40
    %p42 = scmp.eq.s32.totalorder %s16, 0
    %p43 = por %p41, %p42
    %s45 = sadd.s32 %s44, 1
    %p48 = scmp.eq.s32.totalorder %s10, 1
    %p49 = scmp.ne.s32.totalorder %s44, %s46
    %p50 = scmp.eq.s32.totalorder %s10, 0
    %p51 = por %p49, %p50
    %p52 = scmp.ne.s32.totalorder %s44, %s46
    %p53 = scmp.eq.s32.totalorder %s15, 1
    %p54 = por %p52, %p53
    %p55 = scmp.ne.s32.totalorder %s46, %s47
    %p56 = scmp.eq.s32.totalorder %s15, 0
    %p57 = por %p55, %p56
    %p58 = scmp.ne.s32.totalorder %s46, %s47
    %p59 = scmp.eq.s32.totalorder %s16, 1
    %p60 = por %p58, %p59
    %p62 = scmp.ne.s32.totalorder %s47, %s61
    %p63 = scmp.eq.s32.totalorder %s16, 0
    %p64 = por %p62, %p63
    %s66 = sadd.s32 %s65, 1
    %p69 = scmp.eq.s32.totalorder %s10, 1
    %p70 = scmp.ne.s32.totalorder %s65, %s67
    %p71 = scmp.eq.s32.totalorder %s10, 0
    %p72 = por %p70, %p71
    %p73 = scmp.ne.s32.totalorder %s65, %s67
    %p74 = scmp.eq.s32.totalorder %s15, 1
    %p75 = por %p73, %p74
    %p76 = scmp.ne.s32.totalorder %s67, %s68
    %p77 = scmp.eq.s32.totalorder %s15, 0
    %p78 = por %p76, %p77
    %p79 = scmp.ne.s32.totalorder %s67, %s68
    %p80 = scmp.eq.s32.totalorder %s16, 1
    %p81 = por %p79, %p80
    %p83 = scmp.ne.s32.totalorder %s68, %s82
    %p84 = scmp.eq.s32.totalorder %s16, 0
    %p85 = por %p83, %p84
    %s87 = sadd.s32 %s86, 1
    %p90 = scmp.eq.s32.totalorder %s10, 1
    %p91 = scmp.ne.s32.totalorder %s86, %s88
    %p92 = scmp.eq.s32.totalorder %s10, 0
    %p93 = por %p91, %p92
    %p94 = scmp.ne.s32.totalorder %s86, %s88
    %p95 = scmp.eq.s32.totalorder %s15, 1
    %p96 = por %p94, %p95
    %p97 = scmp.ne.s32.totalorder %s88, %s89
    %p98 = scmp.eq.s32.totalorder %s15, 0
    %p99 = por %p97, %p98
    %p100 = scmp.ne.s32.totalorder %s88, %s89
    %p101 = scmp.eq.s32.totalorder %s16, 1
    %p102 = por %p100, %p101
    %p104 = scmp.ne.s32.totalorder %s89, %s103
    %p105 = scmp.eq.s32.totalorder %s16, 0
    %p106 = por %p104, %p105
    %s107 = ssub.s32 %s10, %s17
    %p108 = scmp.eq.s32.totalorder %s107, 0
    %s110 = sadd.s32 %s109, 1
    %s111 = scalar_select %p108, %s109, %s110
    %p114 = pneg %p108
    %p115 = scmp.eq.s32.totalorder %s10, 1
    %p116 = por %p114, %p115
    %p117 = scmp.ne.s32.totalorder %s109, %s112
    %p118 = scmp.eq.s32.totalorder %s10, 0
    %p119 = por %p117, %p118
    %p120 = scmp.ne.s32.totalorder %s109, %s112
    %p121 = scmp.eq.s32.totalorder %s15, 1
    %p122 = por %p120, %p121
    %p123 = scmp.ne.s32.totalorder %s112, %s113
    %p124 = scmp.eq.s32.totalorder %s15, 0
    %p125 = por %p123, %p124
    %p126 = scmp.ne.s32.totalorder %s112, %s113
    %p127 = scmp.eq.s32.totalorder %s16, 1
    %p128 = por %p126, %p127
    %p130 = scmp.ne.s32.totalorder %s113, %s129
    %p131 = scmp.eq.s32.totalorder %s16, 0
    %p132 = por %p130, %p131
    %p133 = scmp.le.s32.totalorder 1, %s10
    %p134 = scmp.lt.s32.totalorder %s10, 3
    %p135 = pnand %p133, %p134
    %p136 = pneg %p135
    // Predicated region
    $region9: #{bottleneck_ir_udp_forward.2} parent=5 // pred_check
      _
    $region10: #{bottleneck_ir_udp_forward.2} parent=5 // pred_check_branch
      %138 = sbr.rel (%p135) target = $region12
    $region11: #{bottleneck_ir_udp_forward.2} parent=5 // pred_region
      %s139 = ssub.s32 %s10, 1
      // Predicated region
      $region13: #{bottleneck_ir_udp_forward.2} parent=11 // pred_check
        %p140 = pneg %p57
      $region14: #{bottleneck_ir_udp_forward.2} parent=11 // pred_check_branch
        %142 = sbr.rel (%p140) target = $region16
      $region15: #{bottleneck_ir_udp_forward.2} parent=11 // pred_region
        _
      $region16: #{bottleneck_ir_udp_forward.2} parent=11 // pred_fallthru
        _
      // Predicated region
      $region17: #{bottleneck_ir_udp_forward.2} parent=11 // pred_check
        %p143 = pneg %p78
      $region18: #{bottleneck_ir_udp_forward.2} parent=11 // pred_check_branch
        %145 = sbr.rel (%p143) target = $region20
      $region19: #{bottleneck_ir_udp_forward.2} parent=11 // pred_region
        _
      $region20: #{bottleneck_ir_udp_forward.2} parent=11 // pred_fallthru
        _
      // Predicated region
      $region21: #{bottleneck_ir_udp_forward.2} parent=11 // pred_check
        %p146 = pneg %p99
      $region22: #{bottleneck_ir_udp_forward.2} parent=11 // pred_check_branch
        %148 = sbr.rel (%p146) target = $region24
      $region23: #{bottleneck_ir_udp_forward.2} parent=11 // pred_region
        _
      $region24: #{bottleneck_ir_udp_forward.2} parent=11 // pred_fallthru
        _
    $region12: #{bottleneck_ir_udp_forward.2} parent=5 // pred_fallthru
      _
    %p149 = scmp.lt.s32.totalorder %s10, 2
    // Predicated region
    $region25: #{bottleneck_ir_udp_forward.2} parent=5 // pred_check
      %p150 = pneg %p149
    $region26: #{bottleneck_ir_udp_forward.2} parent=5 // pred_check_branch
      %152 = sbr.rel (%p150) target = $region28
    $region27: #{bottleneck_ir_udp_forward.2} parent=5 // pred_region
      // Predicated region
      $region29: #{bottleneck_ir_udp_forward.2} parent=27 // pred_check
        %p153 = pneg %p30
      $region30: #{bottleneck_ir_udp_forward.2} parent=27 // pred_check_branch
        %155 = sbr.rel (%p153) target = $region32
      $region31: #{bottleneck_ir_udp_forward.2} parent=27 // pred_region
        %p156 = scmp.lt.s32.totalorder %s10, 1
        %s157 = scalar_select %p156, %s10, 1
        %s158 = smul.addr %s157, 54
        %s159 = smul.addr %s158, 8
        %s160 = scalar_lea.vmem %s0, %s159
      $region32: #{bottleneck_ir_udp_forward.2} parent=27 // pred_fallthru
        _
    $region28: #{bottleneck_ir_udp_forward.2} parent=5 // pred_fallthru
      _
    %p161 = scmp.le.s32.totalorder 1, %s10
    %p162 = scmp.lt.s32.totalorder %s10, 3
    %p163 = pnand %p161, %p162
    %p164 = pneg %p163
    // Predicated region
    $region33: #{bottleneck_ir_udp_forward.2} parent=5 // pred_check
      _
    $region34: #{bottleneck_ir_udp_forward.2} parent=5 // pred_check_branch
      %166 = sbr.rel (%p163) target = $region36
    $region35: #{bottleneck_ir_udp_forward.2} parent=5 // pred_region
      %s167 = ssub.s32 %s10, 1
      %p168 = scmp.lt.s32.totalorder %s15, 1
      %s169 = scalar_select %p168, %s15, 1
      %s170 = smul.addr %s169, 54
      %s171 = smul.addr %s170, 8
      %s172 = scalar_lea.vmem %s0, %s171
      %p173 = pneg %p36
      %p174 = pneg %p33
      %p175 = pneg %p57
      %p176 = pneg %p54
      %p177 = pneg %p78
      %p178 = pneg %p75
      %p179 = pneg %p99
      %p180 = pneg %p96
      %p181 = pneg %p125
      %p182 = pneg %p122
      %p183 = scmp.lt.s32.totalorder %s15, 1
      %s184 = scalar_select %p183, %s15, 1
      %s185 = smul.addr %s184, 32
      %s186 = smul.addr %s185, 8
      %s187 = scalar_lea.vmem %s4, %s186
      %p188 = scmp.lt.s32.totalorder %s15, 1
      %s189 = scalar_select %p188, %s15, 1
      %s190 = smul.addr %s189, 54
      %s191 = smul.addr %s190, 8
      %s192 = scalar_lea.vmem %s0, %s191
      %p193 = scmp.lt.s32.totalorder %s15, 1
      %s194 = scalar_select %p193, %s15, 1
      %s195 = smul.addr %s194, 32
      %s196 = smul.addr %s195, 8
      %s197 = scalar_lea.vmem %s4, %s196
      %v198 = vld [vmem:[%s192] sm:$0xff]
      %v199 = vld [vmem:[%s192 + $0x8] sm:$0xff]
      %v200 = vld [vmem:[%s192 + $0x18] sm:$0xff]
      %v201 = vld [vmem:[%s192 + $0x20] sm:$0xff]
      %v202 = vld [vmem:[%s192 + $0x30] sm:$0xff]
      %v203 = vld [vmem:[%s192 + $0x38] sm:$0xff]
      %v204 = vld [vmem:[%s192 + $0x48] sm:$0xff]
      %v205 = vld [vmem:[%s192 + $0x50] sm:$0xff]
      %v206 = vld [vmem:[%s192 + $0x60] sm:$0xff]
      %v207 = vld [vmem:[%s192 + $0x68] sm:$0xff]
      %v208 = vld [vmem:[%s192 + $0x78] sm:$0xff]
      %v209 = vld [vmem:[%s192 + $0x80] sm:$0xff]
      %v210 = vld [vmem:[%s192 + $0x90] sm:$0xff]
      %v211 = vld [vmem:[%s192 + $0x98] sm:$0xff]
      %v212 = vld [vmem:[%s192 + $0xa8] sm:$0xff]
      %v213 = vld [vmem:[%s192 + $0xb0] sm:$0xff]
      %v214 = vld [vmem:[%s192 + $0xc0] sm:$0xff]
      %v215 = vld [vmem:[%s192 + $0xc8] sm:$0xff]
      %v216 = vld [vmem:[%s192 + $0xd8] sm:$0xff]
      %v217 = vld [vmem:[%s192 + $0xe0] sm:$0xff]
      %v218 = vld [vmem:[%s192 + $0xf0] sm:$0xff]
      %v219 = vld [vmem:[%s192 + $0xf8] sm:$0xff]
      %v220 = vld [vmem:[%s192 + $0x108] sm:$0xff]
      %v221 = vld [vmem:[%s192 + $0x110] sm:$0xff]
      %v222 = vld [vmem:[%s192 + $0x120] sm:$0xff]
      %v223 = vld [vmem:[%s192 + $0x128] sm:$0xff]
      %v224 = vld [vmem:[%s192 + $0x138] sm:$0xff]
      %v225 = vld [vmem:[%s192 + $0x140] sm:$0xff]
      %v226 = vld [vmem:[%s192 + $0x150] sm:$0xff]
      %v227 = vld [vmem:[%s192 + $0x158] sm:$0xff]
      %v228 = vld [vmem:[%s192 + $0x168] sm:$0xff]
      %v229 = vld [vmem:[%s192 + $0x170] sm:$0xff]
      %v230 = vld [vmem:[%s1] sm:$0xff]
      %v231 = vld [vmem:[%s1 + $0x8] sm:$0xff]
      %v232 = vld [vmem:[%s1 + $0x10] sm:$0xff]
      %v233 = vld [vmem:[%s1 + $0x18] sm:$0xff]
      %v234 = vld [vmem:[%s1 + $0x20] sm:$0xff]
      %v235 = vld [vmem:[%s1 + $0x28] sm:$0xff]
      %v236 = vld [vmem:[%s1 + $0x30] sm:$0xff]
      %v237 = vld [vmem:[%s1 + $0x38] sm:$0xff]
      %v238 = vld [vmem:[%s1 + $0x40] sm:$0xff]
      %v239 = vld [vmem:[%s1 + $0x48] sm:$0xff]
      %v240 = vld [vmem:[%s1 + $0x50] sm:$0xff]
      %v241 = vld [vmem:[%s1 + $0x58] sm:$0xff]
      %v242 = vld [vmem:[%s1 + $0x60] sm:$0xff]
      %v243 = vld [vmem:[%s1 + $0x68] sm:$0xff]
      %v244 = vld [vmem:[%s1 + $0x70] sm:$0xff]
      %v245 = vld [vmem:[%s1 + $0x78] sm:$0xff]
      %v246 = vld [vmem:[%s192 + $0x1] sm:$0xff]
      %v247 = vld [vmem:[%s192 + $0x9] sm:$0xff]
      %v248 = vld [vmem:[%s192 + $0x19] sm:$0xff]
      %v249 = vld [vmem:[%s192 + $0x21] sm:$0xff]
      %v250 = vld [vmem:[%s192 + $0x31] sm:$0xff]
      %v251 = vld [vmem:[%s192 + $0x39] sm:$0xff]
      %v252 = vld [vmem:[%s192 + $0x49] sm:$0xff]
      %v253 = vld [vmem:[%s192 + $0x51] sm:$0xff]
      %v254 = vld [vmem:[%s192 + $0x61] sm:$0xff]
      %v255 = vld [vmem:[%s192 + $0x69] sm:$0xff]
      %v256 = vld [vmem:[%s192 + $0x79] sm:$0xff]
      %v257 = vld [vmem:[%s192 + $0x81] sm:$0xff]
      %v258 = vld [vmem:[%s192 + $0x91] sm:$0xff]
      %v259 = vld [vmem:[%s192 + $0x99] sm:$0xff]
      %v260 = vld [vmem:[%s192 + $0xa9] sm:$0xff]
      %v261 = vld [vmem:[%s192 + $0xb1] sm:$0xff]
      %v262 = vld [vmem:[%s192 + $0xc1] sm:$0xff]
      %v263 = vld [vmem:[%s192 + $0xc9] sm:$0xff]
      %v264 = vld [vmem:[%s192 + $0xd9] sm:$0xff]
      %v265 = vld [vmem:[%s192 + $0xe1] sm:$0xff]
      %v266 = vld [vmem:[%s192 + $0xf1] sm:$0xff]
      %v267 = vld [vmem:[%s192 + $0xf9] sm:$0xff]
      %v268 = vld [vmem:[%s192 + $0x109] sm:$0xff]
      %v269 = vld [vmem:[%s192 + $0x111] sm:$0xff]
      %v270 = vld [vmem:[%s192 + $0x121] sm:$0xff]
      %v271 = vld [vmem:[%s192 + $0x129] sm:$0xff]
      %v272 = vld [vmem:[%s192 + $0x139] sm:$0xff]
      %v273 = vld [vmem:[%s192 + $0x141] sm:$0xff]
      %v274 = vld [vmem:[%s192 + $0x151] sm:$0xff]
      %v275 = vld [vmem:[%s192 + $0x159] sm:$0xff]
      %v276 = vld [vmem:[%s192 + $0x169] sm:$0xff]
      %v277 = vld [vmem:[%s192 + $0x171] sm:$0xff]
      %v278 = vld [vmem:[%s1 + $0x80] sm:$0xff]
      %v279 = vld [vmem:[%s1 + $0x88] sm:$0xff]
      %v280 = vld [vmem:[%s1 + $0x90] sm:$0xff]
      %v281 = vld [vmem:[%s1 + $0x98] sm:$0xff]
      %v282 = vld [vmem:[%s1 + $0xa0] sm:$0xff]
      %v283 = vld [vmem:[%s1 + $0xa8] sm:$0xff]
      %v284 = vld [vmem:[%s1 + $0xb0] sm:$0xff]
      %v285 = vld [vmem:[%s1 + $0xb8] sm:$0xff]
      %v286 = vld [vmem:[%s1 + $0xc0] sm:$0xff]
      %v287 = vld [vmem:[%s1 + $0xc8] sm:$0xff]
      %v288 = vld [vmem:[%s1 + $0xd0] sm:$0xff]
      %v289 = vld [vmem:[%s1 + $0xd8] sm:$0xff]
      %v290 = vld [vmem:[%s1 + $0xe0] sm:$0xff]
      %v291 = vld [vmem:[%s1 + $0xe8] sm:$0xff]
      %v292 = vld [vmem:[%s1 + $0xf0] sm:$0xff]
      %v293 = vld [vmem:[%s1 + $0xf8] sm:$0xff]
      %294 = vmatprep.subr.mxu0 0.0
      %295 = vmatpush1.msra.mxu0 %v293
      %296 = vmatprep.subr.mxu0 0.0
      %297 = vmatpush1.msra.mxu0 %v292
      %298 = vmatprep.subr.mxu0 0.0
      %299 = vmatpush1.msra.mxu0 %v291
      %300 = vmatprep.subr.mxu0 0.0
      %301 = vmatpush1.msra.mxu0 %v290
      %302 = vmatprep.subr.mxu0 0.0
      %303 = vmatpush1.msra.mxu0 %v289
      %304 = vmatprep.subr.mxu0 0.0
      %305 = vmatpush1.msra.mxu0 %v288
      %306 = vmatprep.subr.mxu0 0.0
      %307 = vmatpush1.msra.mxu0 %v287
      %308 = vmatprep.subr.mxu0 0.0
      %309 = vmatpush1.msra.mxu0 %v286
      %310 = vmatprep.subr.mxu0 0.0
      %311 = vmatpush1.msra.mxu0 %v285
      %312 = vmatprep.subr.mxu0 0.0
      %313 = vmatpush1.msra.mxu0 %v284
      %314 = vmatprep.subr.mxu0 0.0
      %315 = vmatpush1.msra.mxu0 %v283
      %316 = vmatprep.subr.mxu0 0.0
      %317 = vmatpush1.msra.mxu0 %v282
      %318 = vmatprep.subr.mxu0 0.0
      %319 = vmatpush1.msra.mxu0 %v281
      %320 = vmatprep.subr.mxu0 0.0
      %321 = vmatpush1.msra.mxu0 %v280
      %322 = vmatprep.subr.mxu0 0.0
      %323 = vmatpush1.msra.mxu0 %v279
      %324 = vmatprep.subr.mxu0 0.0
      %325 = vmatpush1.msra.mxu0 %v278
      %326 = vmatprep.subr.mxu0 0.0
      %327 = vmatpush2.msra.mxu0 0.0
      %328 = vmatprep.subr.mxu0 0.0
      %329 = vmatpush2.msra.mxu0 0.0
      %330 = vmatprep.subr.mxu0 0.0
      %331 = vmatpush2.msra.mxu0 0.0
      %332 = vmatprep.subr.mxu0 0.0
      %333 = vmatpush2.msra.mxu0 0.0
      %334 = vmatprep.subr.mxu0 0.0
      %335 = vmatpush2.msra.mxu0 0.0
      %336 = vmatprep.subr.mxu0 0.0
      %337 = vmatpush2.msra.mxu0 0.0
      %338 = vmatprep.subr.mxu0 0.0
      %339 = vmatpush2.msra.mxu0 0.0
      %340 = vmatprep.subr.mxu0 0.0
      %341 = vmatpush2.msra.mxu0 0.0
      %342 = vmatprep.subr.mxu0 0.0
      %343 = vmatpush2.msra.mxu0 0.0
      %344 = vmatprep.subr.mxu0 0.0
      %345 = vmatpush2.msra.mxu0 0.0
      %346 = vmatprep.subr.mxu0 0.0
      %347 = vmatpush2.msra.mxu0 0.0
      %348 = vmatprep.subr.mxu0 0.0
      %349 = vmatpush2.msra.mxu0 0.0
      %350 = vmatprep.subr.mxu0 0.0
      %351 = vmatpush2.msra.mxu0 0.0
      %352 = vmatprep.subr.mxu0 0.0
      %353 = vmatpush2.msra.mxu0 0.0
      %354 = vmatprep.subr.mxu0 0.0
      %355 = vmatpush2.msra.mxu0 0.0
      %356 = vmatprep.subr.mxu0 0.0
      %357 = vmatpush2.msra.mxu0 0.0
      %358 = vmatprep.mubr.f32.mxu0 0.0
      %359 = vmatmul.mubr.f32.gmra.mxu0 %v246
      %v360 = vpop.f32.mrf.mxu0
      %v361 = vadd.f32 0.0, %v360
      %v362 = vpop.f32.mrf.mxu0
      %363 = vmatprep.mubr.f32.mxu0 0.0
      %364 = vmatmul.mubr.f32.gmra.mxu0 %v247
      %v365 = vpop.f32.mrf.mxu0
      %v366 = vadd.f32 0.0, %v365
      %v367 = vpop.f32.mrf.mxu0
      %368 = vmatprep.mubr.f32.mxu0 0.0
      %369 = vmatmul.mubr.f32.gmra.mxu0 %v248
      %v370 = vpop.f32.mrf.mxu0
      %v371 = vadd.f32 0.0, %v370
      %v372 = vpop.f32.mrf.mxu0
      %373 = vmatprep.mubr.f32.mxu0 0.0
      %374 = vmatmul.mubr.f32.gmra.mxu0 %v249
      %v375 = vpop.f32.mrf.mxu0
      %v376 = vadd.f32 0.0, %v375
      %v377 = vpop.f32.mrf.mxu0
      %378 = vmatprep.mubr.f32.mxu0 0.0
      %379 = vmatmul.mubr.f32.gmra.mxu0 %v250
      %v380 = vpop.f32.mrf.mxu0
      %v381 = vadd.f32 0.0, %v380
      %v382 = vpop.f32.mrf.mxu0
      %383 = vmatprep.mubr.f32.mxu0 0.0
      %384 = vmatmul.mubr.f32.gmra.mxu0 %v251
      %v385 = vpop.f32.mrf.mxu0
      %v386 = vadd.f32 0.0, %v385
      %v387 = vpop.f32.mrf.mxu0
      %388 = vmatprep.mubr.f32.mxu0 0.0
      %389 = vmatmul.mubr.f32.gmra.mxu0 %v252
      %v390 = vpop.f32.mrf.mxu0
      %v391 = vadd.f32 0.0, %v390
      %v392 = vpop.f32.mrf.mxu0
      %393 = vmatprep.mubr.f32.mxu0 0.0
      %394 = vmatmul.mubr.f32.gmra.mxu0 %v253
      %v395 = vpop.f32.mrf.mxu0
      %v396 = vadd.f32 0.0, %v395
      %v397 = vpop.f32.mrf.mxu0
      %398 = vmatprep.mubr.f32.mxu0 0.0
      %399 = vmatmul.mubr.f32.gmra.mxu0 %v254
      %v400 = vpop.f32.mrf.mxu0
      %v401 = vadd.f32 0.0, %v400
      %v402 = vpop.f32.mrf.mxu0
      %403 = vmatprep.mubr.f32.mxu0 0.0
      %404 = vmatmul.mubr.f32.gmra.mxu0 %v255
      %v405 = vpop.f32.mrf.mxu0
      %v406 = vadd.f32 0.0, %v405
      %v407 = vpop.f32.mrf.mxu0
      %408 = vmatprep.mubr.f32.mxu0 0.0
      %409 = vmatmul.mubr.f32.gmra.mxu0 %v256
      %v410 = vpop.f32.mrf.mxu0
      %v411 = vadd.f32 0.0, %v410
      %v412 = vpop.f32.mrf.mxu0
      %413 = vmatprep.mubr.f32.mxu0 0.0
      %414 = vmatmul.mubr.f32.gmra.mxu0 %v257
      %v415 = vpop.f32.mrf.mxu0
      %v416 = vadd.f32 0.0, %v415
      %v417 = vpop.f32.mrf.mxu0
      %418 = vmatprep.mubr.f32.mxu0 0.0
      %419 = vmatmul.mubr.f32.gmra.mxu0 %v258
      %v420 = vpop.f32.mrf.mxu0
      %v421 = vadd.f32 0.0, %v420
      %v422 = vpop.f32.mrf.mxu0
      %423 = vmatprep.mubr.f32.mxu0 0.0
      %424 = vmatmul.mubr.f32.gmra.mxu0 %v259
      %v425 = vpop.f32.mrf.mxu0
      %v426 = vadd.f32 0.0, %v425
      %v427 = vpop.f32.mrf.mxu0
      %428 = vmatprep.mubr.f32.mxu0 0.0
      %429 = vmatmul.mubr.f32.gmra.mxu0 %v260
      %v430 = vpop.f32.mrf.mxu0
      %v431 = vadd.f32 0.0, %v430
      %v432 = vpop.f32.mrf.mxu0
      %433 = vmatprep.mubr.f32.mxu0 0.0
      %434 = vmatmul.mubr.f32.gmra.mxu0 %v261
      %v435 = vpop.f32.mrf.mxu0
      %v436 = vadd.f32 0.0, %v435
      %v437 = vpop.f32.mrf.mxu0
      %438 = vmatprep.mubr.f32.mxu0 0.0
      %439 = vmatmul.mubr.f32.gmra.mxu0 %v262
      %v440 = vpop.f32.mrf.mxu0
      %v441 = vadd.f32 0.0, %v440
      %v442 = vpop.f32.mrf.mxu0
      %443 = vmatprep.mubr.f32.mxu0 0.0
      %444 = vmatmul.mubr.f32.gmra.mxu0 %v263
      %v445 = vpop.f32.mrf.mxu0
      %v446 = vadd.f32 0.0, %v445
      %v447 = vpop.f32.mrf.mxu0
      %448 = vmatprep.mubr.f32.mxu0 0.0
      %449 = vmatmul.mubr.f32.gmra.mxu0 %v264
      %v450 = vpop.f32.mrf.mxu0
      %v451 = vadd.f32 0.0, %v450
      %v452 = vpop.f32.mrf.mxu0
      %453 = vmatprep.mubr.f32.mxu0 0.0
      %454 = vmatmul.mubr.f32.gmra.mxu0 %v265
      %v455 = vpop.f32.mrf.mxu0
      %v456 = vadd.f32 0.0, %v455
      %v457 = vpop.f32.mrf.mxu0
      %458 = vmatprep.mubr.f32.mxu0 0.0
      %459 = vmatmul.mubr.f32.gmra.mxu0 %v266
      %v460 = vpop.f32.mrf.mxu0
      %v461 = vadd.f32 0.0, %v460
      %v462 = vpop.f32.mrf.mxu0
      %463 = vmatprep.mubr.f32.mxu0 0.0
      %464 = vmatmul.mubr.f32.gmra.mxu0 %v267
      %v465 = vpop.f32.mrf.mxu0
      %v466 = vadd.f32 0.0, %v465
      %v467 = vpop.f32.mrf.mxu0
      %468 = vmatprep.mubr.f32.mxu0 0.0
      %469 = vmatmul.mubr.f32.gmra.mxu0 %v268
      %v470 = vpop.f32.mrf.mxu0
      %v471 = vadd.f32 0.0, %v470
      %v472 = vpop.f32.mrf.mxu0
      %473 = vmatprep.mubr.f32.mxu0 0.0
      %474 = vmatmul.mubr.f32.gmra.mxu0 %v269
      %v475 = vpop.f32.mrf.mxu0
      %v476 = vadd.f32 0.0, %v475
      %v477 = vpop.f32.mrf.mxu0
      %478 = vmatprep.mubr.f32.mxu0 0.0
      %479 = vmatmul.mubr.f32.gmra.mxu0 %v270
      %v480 = vpop.f32.mrf.mxu0
      %v481 = vadd.f32 0.0, %v480
      %v482 = vpop.f32.mrf.mxu0
      %483 = vmatprep.mubr.f32.mxu0 0.0
      %484 = vmatmul.mubr.f32.gmra.mxu0 %v271
      %v485 = vpop.f32.mrf.mxu0
      %v486 = vadd.f32 0.0, %v485
      %v487 = vpop.f32.mrf.mxu0
      %488 = vmatprep.mubr.f32.mxu0 0.0
      %489 = vmatmul.mubr.f32.gmra.mxu0 %v272
      %v490 = vpop.f32.mrf.mxu0
      %v491 = vadd.f32 0.0, %v490
      %v492 = vpop.f32.mrf.mxu0
      %493 = vmatprep.mubr.f32.mxu0 0.0
      %494 = vmatmul.mubr.f32.gmra.mxu0 %v273
      %v495 = vpop.f32.mrf.mxu0
      %v496 = vadd.f32 0.0, %v495
      %v497 = vpop.f32.mrf.mxu0
      %498 = vmatprep.mubr.f32.mxu0 0.0
      %499 = vmatmul.mubr.f32.gmra.mxu0 %v274
      %v500 = vpop.f32.mrf.mxu0
      %v501 = vadd.f32 0.0, %v500
      %v502 = vpop.f32.mrf.mxu0
      %503 = vmatprep.mubr.f32.mxu0 0.0
      %504 = vmatmul.mubr.f32.gmra.mxu0 %v275
      %v505 = vpop.f32.mrf.mxu0
      %v506 = vadd.f32 0.0, %v505
      %v507 = vpop.f32.mrf.mxu0
      %508 = vmatprep.mubr.f32.mxu0 0.0
      %509 = vmatmul.mubr.f32.gmra.mxu0 %v276
      %v510 = vpop.f32.mrf.mxu0
      %v511 = vadd.f32 0.0, %v510
      %v512 = vpop.f32.mrf.mxu0
      %513 = vmatprep.mubr.f32.mxu0 0.0
      %514 = vmatmul.mubr.f32.gmra.mxu0 %v277
      %v515 = vpop.f32.mrf.mxu0
      %v516 = vadd.f32 0.0, %v515
      %v517 = vpop.f32.mrf.mxu0
      %518 = vdwg.mxu0
      %519 = vmatprep.subr.mxu0 0.0
      %520 = vmatpush1.msra.mxu0 %v245
      %521 = vmatprep.subr.mxu0 0.0
      %522 = vmatpush1.msra.mxu0 %v244
      %523 = vmatprep.subr.mxu0 0.0
      %524 = vmatpush1.msra.mxu0 %v243
      %525 = vmatprep.subr.mxu0 0.0
      %526 = vmatpush1.msra.mxu0 %v242
      %527 = vmatprep.subr.mxu0 0.0
      %528 = vmatpush1.msra.mxu0 %v241
      %529 = vmatprep.subr.mxu0 0.0
      %530 = vmatpush1.msra.mxu0 %v240
      %531 = vmatprep.subr.mxu0 0.0
      %532 = vmatpush1.msra.mxu0 %v239
      %533 = vmatprep.subr.mxu0 0.0
      %534 = vmatpush1.msra.mxu0 %v238
      %535 = vmatprep.subr.mxu0 0.0
      %536 = vmatpush1.msra.mxu0 %v237
      %537 = vmatprep.subr.mxu0 0.0
      %538 = vmatpush1.msra.mxu0 %v236
      %539 = vmatprep.subr.mxu0 0.0
      %540 = vmatpush1.msra.mxu0 %v235
      %541 = vmatprep.subr.mxu0 0.0
      %542 = vmatpush1.msra.mxu0 %v234
      %543 = vmatprep.subr.mxu0 0.0
      %544 = vmatpush1.msra.mxu0 %v233
      %545 = vmatprep.subr.mxu0 0.0
      %546 = vmatpush1.msra.mxu0 %v232
      %547 = vmatprep.subr.mxu0 0.0
      %548 = vmatpush1.msra.mxu0 %v231
      %549 = vmatprep.subr.mxu0 0.0
      %550 = vmatpush1.msra.mxu0 %v230
      %551 = vmatprep.subr.mxu0 0.0
      %552 = vmatpush2.msra.mxu0 0.0
      %553 = vmatprep.subr.mxu0 0.0
      %554 = vmatpush2.msra.mxu0 0.0
      %555 = vmatprep.subr.mxu0 0.0
      %556 = vmatpush2.msra.mxu0 0.0
      %557 = vmatprep.subr.mxu0 0.0
      %558 = vmatpush2.msra.mxu0 0.0
      %559 = vmatprep.subr.mxu0 0.0
      %560 = vmatpush2.msra.mxu0 0.0
      %561 = vmatprep.subr.mxu0 0.0
      %562 = vmatpush2.msra.mxu0 0.0
      %563 = vmatprep.subr.mxu0 0.0
      %564 = vmatpush2.msra.mxu0 0.0
      %565 = vmatprep.subr.mxu0 0.0
      %566 = vmatpush2.msra.mxu0 0.0
      %567 = vmatprep.subr.mxu0 0.0
      %568 = vmatpush2.msra.mxu0 0.0
      %569 = vmatprep.subr.mxu0 0.0
      %570 = vmatpush2.msra.mxu0 0.0
      %571 = vmatprep.subr.mxu0 0.0
      %572 = vmatpush2.msra.mxu0 0.0
      %573 = vmatprep.subr.mxu0 0.0
      %574 = vmatpush2.msra.mxu0 0.0
      %575 = vmatprep.subr.mxu0 0.0
      %576 = vmatpush2.msra.mxu0 0.0
      %577 = vmatprep.subr.mxu0 0.0
      %578 = vmatpush2.msra.mxu0 0.0
      %579 = vmatprep.subr.mxu0 0.0
      %580 = vmatpush2.msra.mxu0 0.0
      %581 = vmatprep.subr.mxu0 0.0
      %582 = vmatpush2.msra.mxu0 0.0
      %583 = vmatprep.mubr.f32.mxu0 0.0
      %584 = vmatmul.mubr.f32.gmra.mxu0 %v198
      %v585 = vpop.f32.mrf.mxu0
      %v586 = vadd.f32 %v361, %v585
      %v587 = vpop.f32.mrf.mxu0
      %588 = vmatprep.mubr.f32.mxu0 0.0
      %589 = vmatmul.mubr.f32.gmra.mxu0 %v199
      %v590 = vpop.f32.mrf.mxu0
      %v591 = vadd.f32 %v366, %v590
      %v592 = vpop.f32.mrf.mxu0
      %593 = vmatprep.mubr.f32.mxu0 0.0
      %594 = vmatmul.mubr.f32.gmra.mxu0 %v200
      %v595 = vpop.f32.mrf.mxu0
      %v596 = vadd.f32 %v371, %v595
      %v597 = vpop.f32.mrf.mxu0
      %598 = vmatprep.mubr.f32.mxu0 0.0
      %599 = vmatmul.mubr.f32.gmra.mxu0 %v201
      %v600 = vpop.f32.mrf.mxu0
      %v601 = vadd.f32 %v376, %v600
      %v602 = vpop.f32.mrf.mxu0
      %603 = vmatprep.mubr.f32.mxu0 0.0
      %604 = vmatmul.mubr.f32.gmra.mxu0 %v202
      %v605 = vpop.f32.mrf.mxu0
      %v606 = vadd.f32 %v381, %v605
      %v607 = vpop.f32.mrf.mxu0
      %608 = vmatprep.mubr.f32.mxu0 0.0
      %609 = vmatmul.mubr.f32.gmra.mxu0 %v203
      %v610 = vpop.f32.mrf.mxu0
      %v611 = vadd.f32 %v386, %v610
      %v612 = vpop.f32.mrf.mxu0
      %613 = vmatprep.mubr.f32.mxu0 0.0
      %614 = vmatmul.mubr.f32.gmra.mxu0 %v204
      %v615 = vpop.f32.mrf.mxu0
      %v616 = vadd.f32 %v391, %v615
      %v617 = vpop.f32.mrf.mxu0
      %618 = vmatprep.mubr.f32.mxu0 0.0
      %619 = vmatmul.mubr.f32.gmra.mxu0 %v205
      %v620 = vpop.f32.mrf.mxu0
      %v621 = vadd.f32 %v396, %v620
      %v622 = vpop.f32.mrf.mxu0
      %623 = vmatprep.mubr.f32.mxu0 0.0
      %624 = vmatmul.mubr.f32.gmra.mxu0 %v206
      %v625 = vpop.f32.mrf.mxu0
      %v626 = vadd.f32 %v401, %v625
      %v627 = vpop.f32.mrf.mxu0
      %628 = vmatprep.mubr.f32.mxu0 0.0
      %629 = vmatmul.mubr.f32.gmra.mxu0 %v207
      %v630 = vpop.f32.mrf.mxu0
      %v631 = vadd.f32 %v406, %v630
      %v632 = vpop.f32.mrf.mxu0
      %633 = vmatprep.mubr.f32.mxu0 0.0
      %634 = vmatmul.mubr.f32.gmra.mxu0 %v208
      %v635 = vpop.f32.mrf.mxu0
      %v636 = vadd.f32 %v411, %v635
      %v637 = vpop.f32.mrf.mxu0
      %638 = vmatprep.mubr.f32.mxu0 0.0
      %639 = vmatmul.mubr.f32.gmra.mxu0 %v209
      %v640 = vpop.f32.mrf.mxu0
      %v641 = vadd.f32 %v416, %v640
      %v642 = vpop.f32.mrf.mxu0
      %643 = vmatprep.mubr.f32.mxu0 0.0
      %644 = vmatmul.mubr.f32.gmra.mxu0 %v210
      %v645 = vpop.f32.mrf.mxu0
      %v646 = vadd.f32 %v421, %v645
      %v647 = vpop.f32.mrf.mxu0
      %648 = vmatprep.mubr.f32.mxu0 0.0
      %649 = vmatmul.mubr.f32.gmra.mxu0 %v211
      %v650 = vpop.f32.mrf.mxu0
      %v651 = vadd.f32 %v426, %v650
      %v652 = vpop.f32.mrf.mxu0
      %653 = vmatprep.mubr.f32.mxu0 0.0
      %654 = vmatmul.mubr.f32.gmra.mxu0 %v212
      %v655 = vpop.f32.mrf.mxu0
      %v656 = vadd.f32 %v431, %v655
      %v657 = vpop.f32.mrf.mxu0
      %658 = vmatprep.mubr.f32.mxu0 0.0
      %659 = vmatmul.mubr.f32.gmra.mxu0 %v213
      %v660 = vpop.f32.mrf.mxu0
      %v661 = vadd.f32 %v436, %v660
      %v662 = vpop.f32.mrf.mxu0
      %663 = vmatprep.mubr.f32.mxu0 0.0
      %664 = vmatmul.mubr.f32.gmra.mxu0 %v214
      %v665 = vpop.f32.mrf.mxu0
      %v666 = vadd.f32 %v441, %v665
      %v667 = vpop.f32.mrf.mxu0
      %668 = vmatprep.mubr.f32.mxu0 0.0
      %669 = vmatmul.mubr.f32.gmra.mxu0 %v215
      %v670 = vpop.f32.mrf.mxu0
      %v671 = vadd.f32 %v446, %v670
      %v672 = vpop.f32.mrf.mxu0
      %673 = vmatprep.mubr.f32.mxu0 0.0
      %674 = vmatmul.mubr.f32.gmra.mxu0 %v216
      %v675 = vpop.f32.mrf.mxu0
      %v676 = vadd.f32 %v451, %v675
      %v677 = vpop.f32.mrf.mxu0
      %678 = vmatprep.mubr.f32.mxu0 0.0
      %679 = vmatmul.mubr.f32.gmra.mxu0 %v217
      %v680 = vpop.f32.mrf.mxu0
      %v681 = vadd.f32 %v456, %v680
      %v682 = vpop.f32.mrf.mxu0
      %683 = vmatprep.mubr.f32.mxu0 0.0
      %684 = vmatmul.mubr.f32.gmra.mxu0 %v218
      %v685 = vpop.f32.mrf.mxu0
      %v686 = vadd.f32 %v461, %v685
      %v687 = vpop.f32.mrf.mxu0
      %688 = vmatprep.mubr.f32.mxu0 0.0
      %689 = vmatmul.mubr.f32.gmra.mxu0 %v219
      %v690 = vpop.f32.mrf.mxu0
      %v691 = vadd.f32 %v466, %v690
      %v692 = vpop.f32.mrf.mxu0
      %693 = vmatprep.mubr.f32.mxu0 0.0
      %694 = vmatmul.mubr.f32.gmra.mxu0 %v220
      %v695 = vpop.f32.mrf.mxu0
      %v696 = vadd.f32 %v471, %v695
      %v697 = vpop.f32.mrf.mxu0
      %698 = vmatprep.mubr.f32.mxu0 0.0
      %699 = vmatmul.mubr.f32.gmra.mxu0 %v221
      %v700 = vpop.f32.mrf.mxu0
      %v701 = vadd.f32 %v476, %v700
      %v702 = vpop.f32.mrf.mxu0
      %703 = vmatprep.mubr.f32.mxu0 0.0
      %704 = vmatmul.mubr.f32.gmra.mxu0 %v222
      %v705 = vpop.f32.mrf.mxu0
      %v706 = vadd.f32 %v481, %v705
      %v707 = vpop.f32.mrf.mxu0
      %708 = vmatprep.mubr.f32.mxu0 0.0
      %709 = vmatmul.mubr.f32.gmra.mxu0 %v223
      %v710 = vpop.f32.mrf.mxu0
      %v711 = vadd.f32 %v486, %v710
      %v712 = vpop.f32.mrf.mxu0
      %713 = vmatprep.mubr.f32.mxu0 0.0
      %714 = vmatmul.mubr.f32.gmra.mxu0 %v224
      %v715 = vpop.f32.mrf.mxu0
      %v716 = vadd.f32 %v491, %v715
      %v717 = vpop.f32.mrf.mxu0
      %718 = vmatprep.mubr.f32.mxu0 0.0
      %719 = vmatmul.mubr.f32.gmra.mxu0 %v225
      %v720 = vpop.f32.mrf.mxu0
      %v721 = vadd.f32 %v496, %v720
      %v722 = vpop.f32.mrf.mxu0
      %723 = vmatprep.mubr.f32.mxu0 0.0
      %724 = vmatmul.mubr.f32.gmra.mxu0 %v226
      %v725 = vpop.f32.mrf.mxu0
      %v726 = vadd.f32 %v501, %v725
      %v727 = vpop.f32.mrf.mxu0
      %728 = vmatprep.mubr.f32.mxu0 0.0
      %729 = vmatmul.mubr.f32.gmra.mxu0 %v227
      %v730 = vpop.f32.mrf.mxu0
      %v731 = vadd.f32 %v506, %v730
      %v732 = vpop.f32.mrf.mxu0
      %733 = vmatprep.mubr.f32.mxu0 0.0
      %734 = vmatmul.mubr.f32.gmra.mxu0 %v228
      %v735 = vpop.f32.mrf.mxu0
      %v736 = vadd.f32 %v511, %v735
      %v737 = vpop.f32.mrf.mxu0
      %738 = vmatprep.mubr.f32.mxu0 0.0
      %739 = vmatmul.mubr.f32.gmra.mxu0 %v229
      %v740 = vpop.f32.mrf.mxu0
      %v741 = vadd.f32 %v516, %v740
      %v742 = vpop.f32.mrf.mxu0
      %743 = vdwg.mxu0
      %v744 = vld [vmem:[%s192 + $0x2] sm:$0xff]
      %v745 = vld [vmem:[%s192 + $0xa] sm:$0xff]
      %v746 = vld [vmem:[%s192 + $0x1a] sm:$0xff]
      %v747 = vld [vmem:[%s192 + $0x22] sm:$0xff]
      %v748 = vld [vmem:[%s192 + $0x32] sm:$0xff]
      %v749 = vld [vmem:[%s192 + $0x3a] sm:$0xff]
      %v750 = vld [vmem:[%s192 + $0x4a] sm:$0xff]
      %v751 = vld [vmem:[%s192 + $0x52] sm:$0xff]
      %v752 = vld [vmem:[%s192 + $0x62] sm:$0xff]
      %v753 = vld [vmem:[%s192 + $0x6a] sm:$0xff]
      %v754 = vld [vmem:[%s192 + $0x7a] sm:$0xff]
      %v755 = vld [vmem:[%s192 + $0x82] sm:$0xff]
      %v756 = vld [vmem:[%s192 + $0x92] sm:$0xff]
      %v757 = vld [vmem:[%s192 + $0x9a] sm:$0xff]
      %v758 = vld [vmem:[%s192 + $0xaa] sm:$0xff]
      %v759 = vld [vmem:[%s192 + $0xb2] sm:$0xff]
      %v760 = vld [vmem:[%s192 + $0xc2] sm:$0xff]
      %v761 = vld [vmem:[%s192 + $0xca] sm:$0xff]
      %v762 = vld [vmem:[%s192 + $0xda] sm:$0xff]
      %v763 = vld [vmem:[%s192 + $0xe2] sm:$0xff]
      %v764 = vld [vmem:[%s192 + $0xf2] sm:$0xff]
      %v765 = vld [vmem:[%s192 + $0xfa] sm:$0xff]
      %v766 = vld [vmem:[%s192 + $0x10a] sm:$0xff]
      %v767 = vld [vmem:[%s192 + $0x112] sm:$0xff]
      %v768 = vld [vmem:[%s192 + $0x122] sm:$0xff]
      %v769 = vld [vmem:[%s192 + $0x12a] sm:$0xff]
      %v770 = vld [vmem:[%s192 + $0x13a] sm:$0xff]
      %v771 = vld [vmem:[%s192 + $0x142] sm:$0xff]
      %v772 = vld [vmem:[%s192 + $0x152] sm:$0xff]
      %v773 = vld [vmem:[%s192 + $0x15a] sm:$0xff]
      %v774 = vld [vmem:[%s192 + $0x16a] sm:$0xff]
      %v775 = vld [vmem:[%s192 + $0x172] sm:$0xff]
      %v776 = vld [vmem:[%s1 + $0x100] sm:$0xff]
      %v777 = vld [vmem:[%s1 + $0x108] sm:$0xff]
      %v778 = vld [vmem:[%s1 + $0x110] sm:$0xff]
      %v779 = vld [vmem:[%s1 + $0x118] sm:$0xff]
      %v780 = vld [vmem:[%s1 + $0x120] sm:$0xff]
      %v781 = vld [vmem:[%s1 + $0x128] sm:$0xff]
      %v782 = vld [vmem:[%s1 + $0x130] sm:$0xff]
      %v783 = vld [vmem:[%s1 + $0x138] sm:$0xff]
      %v784 = vld [vmem:[%s1 + $0x140] sm:$0xff]
      %v785 = vld [vmem:[%s1 + $0x148] sm:$0xff]
      %v786 = vld [vmem:[%s1 + $0x150] sm:$0xff]
      %v787 = vld [vmem:[%s1 + $0x158] sm:$0xff]
      %v788 = vld [vmem:[%s1 + $0x160] sm:$0xff]
      %v789 = vld [vmem:[%s1 + $0x168] sm:$0xff]
      %v790 = vld [vmem:[%s1 + $0x170] sm:$0xff]
      %v791 = vld [vmem:[%s1 + $0x178] sm:$0xff]
      %792 = vmatprep.subr.mxu0 0.0
      %793 = vmatpush1.msra.mxu0 %v791
      %794 = vmatprep.subr.mxu0 0.0
      %795 = vmatpush1.msra.mxu0 %v790
      %796 = vmatprep.subr.mxu0 0.0
      %797 = vmatpush1.msra.mxu0 %v789
      %798 = vmatprep.subr.mxu0 0.0
      %799 = vmatpush1.msra.mxu0 %v788
      %800 = vmatprep.subr.mxu0 0.0
      %801 = vmatpush1.msra.mxu0 %v787
      %802 = vmatprep.subr.mxu0 0.0
      %803 = vmatpush1.msra.mxu0 %v786
      %804 = vmatprep.subr.mxu0 0.0
      %805 = vmatpush1.msra.mxu0 %v785
      %806 = vmatprep.subr.mxu0 0.0
      %807 = vmatpush1.msra.mxu0 %v784
      %808 = vmatprep.subr.mxu0 0.0
      %809 = vmatpush1.msra.mxu0 %v783
      %810 = vmatprep.subr.mxu0 0.0
      %811 = vmatpush1.msra.mxu0 %v782
      %812 = vmatprep.subr.mxu0 0.0
      %813 = vmatpush1.msra.mxu0 %v781
      %814 = vmatprep.subr.mxu0 0.0
      %815 = vmatpush1.msra.mxu0 %v780
      %816 = vmatprep.subr.mxu0 0.0
      %817 = vmatpush1.msra.mxu0 %v779
      %818 = vmatprep.subr.mxu0 0.0
      %819 = vmatpush1.msra.mxu0 %v778
      %820 = vmatprep.subr.mxu0 0.0
      %821 = vmatpush1.msra.mxu0 %v777
      %822 = vmatprep.subr.mxu0 0.0
      %823 = vmatpush1.msra.mxu0 %v776
      %824 = vmatprep.subr.mxu0 0.0
      %825 = vmatpush2.msra.mxu0 0.0
      %826 = vmatprep.subr.mxu0 0.0
      %827 = vmatpush2.msra.mxu0 0.0
      %828 = vmatprep.subr.mxu0 0.0
      %829 = vmatpush2.msra.mxu0 0.0
      %830 = vmatprep.subr.mxu0 0.0
      %831 = vmatpush2.msra.mxu0 0.0
      %832 = vmatprep.subr.mxu0 0.0
      %833 = vmatpush2.msra.mxu0 0.0
      %834 = vmatprep.subr.mxu0 0.0
      %835 = vmatpush2.msra.mxu0 0.0
      %836 = vmatprep.subr.mxu0 0.0
      %837 = vmatpush2.msra.mxu0 0.0
      %838 = vmatprep.subr.mxu0 0.0
      %839 = vmatpush2.msra.mxu0 0.0
      %840 = vmatprep.subr.mxu0 0.0
      %841 = vmatpush2.msra.mxu0 0.0
      %842 = vmatprep.subr.mxu0 0.0
      %843 = vmatpush2.msra.mxu0 0.0
      %844 = vmatprep.subr.mxu0 0.0
      %845 = vmatpush2.msra.mxu0 0.0
      %846 = vmatprep.subr.mxu0 0.0
      %847 = vmatpush2.msra.mxu0 0.0
      %848 = vmatprep.subr.mxu0 0.0
      %849 = vmatpush2.msra.mxu0 0.0
      %850 = vmatprep.subr.mxu0 0.0
      %851 = vmatpush2.msra.mxu0 0.0
      %852 = vmatprep.subr.mxu0 0.0
      %853 = vmatpush2.msra.mxu0 0.0
      %854 = vmatprep.subr.mxu0 0.0
      %855 = vmatpush2.msra.mxu0 0.0
      %856 = vmatprep.mubr.f32.mxu0 0.0
      %857 = vmatmul.mubr.f32.gmra.mxu0 %v744
      %v858 = vpop.f32.mrf.mxu0
      %v859 = vadd.f32 0.0, %v858
      %v860 = vpop.f32.mrf.mxu0
      %861 = vmatprep.mubr.f32.mxu0 0.0
      %862 = vmatmul.mubr.f32.gmra.mxu0 %v745
      %v863 = vpop.f32.mrf.mxu0
      %v864 = vadd.f32 0.0, %v863
      %v865 = vpop.f32.mrf.mxu0
      %866 = vmatprep.mubr.f32.mxu0 0.0
      %867 = vmatmul.mubr.f32.gmra.mxu0 %v746
      %v868 = vpop.f32.mrf.mxu0
      %v869 = vadd.f32 0.0, %v868
      %v870 = vpop.f32.mrf.mxu0
      %871 = vmatprep.mubr.f32.mxu0 0.0
      %872 = vmatmul.mubr.f32.gmra.mxu0 %v747
      %v873 = vpop.f32.mrf.mxu0
      %v874 = vadd.f32 0.0, %v873
      %v875 = vpop.f32.mrf.mxu0
      %876 = vmatprep.mubr.f32.mxu0 0.0
      %877 = vmatmul.mubr.f32.gmra.mxu0 %v748
      %v878 = vpop.f32.mrf.mxu0
      %v879 = vadd.f32 0.0, %v878
      %v880 = vpop.f32.mrf.mxu0
      %881 = vmatprep.mubr.f32.mxu0 0.0
      %882 = vmatmul.mubr.f32.gmra.mxu0 %v749
      %v883 = vpop.f32.mrf.mxu0
      %v884 = vadd.f32 0.0, %v883
      %v885 = vpop.f32.mrf.mxu0
      %886 = vmatprep.mubr.f32.mxu0 0.0
      %887 = vmatmul.mubr.f32.gmra.mxu0 %v750
      %v888 = vpop.f32.mrf.mxu0
      %v889 = vadd.f32 0.0, %v888
      %v890 = vpop.f32.mrf.mxu0
      %891 = vmatprep.mubr.f32.mxu0 0.0
      %892 = vmatmul.mubr.f32.gmra.mxu0 %v751
      %v893 = vpop.f32.mrf.mxu0
      %v894 = vadd.f32 0.0, %v893
      %v895 = vpop.f32.mrf.mxu0
      %896 = vmatprep.mubr.f32.mxu0 0.0
      %897 = vmatmul.mubr.f32.gmra.mxu0 %v752
      %v898 = vpop.f32.mrf.mxu0
      %v899 = vadd.f32 0.0, %v898
      %v900 = vpop.f32.mrf.mxu0
      %901 = vmatprep.mubr.f32.mxu0 0.0
      %902 = vmatmul.mubr.f32.gmra.mxu0 %v753
      %v903 = vpop.f32.mrf.mxu0
      %v904 = vadd.f32 0.0, %v903
      %v905 = vpop.f32.mrf.mxu0
      %906 = vmatprep.mubr.f32.mxu0 0.0
      %907 = vmatmul.mubr.f32.gmra.mxu0 %v754
      %v908 = vpop.f32.mrf.mxu0
      %v909 = vadd.f32 0.0, %v908
      %v910 = vpop.f32.mrf.mxu0
      %911 = vmatprep.mubr.f32.mxu0 0.0
      %912 = vmatmul.mubr.f32.gmra.mxu0 %v755
      %v913 = vpop.f32.mrf.mxu0
      %v914 = vadd.f32 0.0, %v913
      %v915 = vpop.f32.mrf.mxu0
      %916 = vmatprep.mubr.f32.mxu0 0.0
      %917 = vmatmul.mubr.f32.gmra.mxu0 %v756
      %v918 = vpop.f32.mrf.mxu0
      %v919 = vadd.f32 0.0, %v918
      %v920 = vpop.f32.mrf.mxu0
      %921 = vmatprep.mubr.f32.mxu0 0.0
      %922 = vmatmul.mubr.f32.gmra.mxu0 %v757
      %v923 = vpop.f32.mrf.mxu0
      %v924 = vadd.f32 0.0, %v923
      %v925 = vpop.f32.mrf.mxu0
      %926 = vmatprep.mubr.f32.mxu0 0.0
      %927 = vmatmul.mubr.f32.gmra.mxu0 %v758
      %v928 = vpop.f32.mrf.mxu0
      %v929 = vadd.f32 0.0, %v928
      %v930 = vpop.f32.mrf.mxu0
      %931 = vmatprep.mubr.f32.mxu0 0.0
      %932 = vmatmul.mubr.f32.gmra.mxu0 %v759
      %v933 = vpop.f32.mrf.mxu0
      %v934 = vadd.f32 0.0, %v933
      %v935 = vpop.f32.mrf.mxu0
      %936 = vmatprep.mubr.f32.mxu0 0.0
      %937 = vmatmul.mubr.f32.gmra.mxu0 %v760
      %v938 = vpop.f32.mrf.mxu0
      %v939 = vadd.f32 0.0, %v938
      %v940 = vpop.f32.mrf.mxu0
      %941 = vmatprep.mubr.f32.mxu0 0.0
      %942 = vmatmul.mubr.f32.gmra.mxu0 %v761
      %v943 = vpop.f32.mrf.mxu0
      %v944 = vadd.f32 0.0, %v943
      %v945 = vpop.f32.mrf.mxu0
      %946 = vmatprep.mubr.f32.mxu0 0.0
      %947 = vmatmul.mubr.f32.gmra.mxu0 %v762
      %v948 = vpop.f32.mrf.mxu0
      %v949 = vadd.f32 0.0, %v948
      %v950 = vpop.f32.mrf.mxu0
      %951 = vmatprep.mubr.f32.mxu0 0.0
      %952 = vmatmul.mubr.f32.gmra.mxu0 %v763
      %v953 = vpop.f32.mrf.mxu0
      %v954 = vadd.f32 0.0, %v953
      %v955 = vpop.f32.mrf.mxu0
      %956 = vmatprep.mubr.f32.mxu0 0.0
      %957 = vmatmul.mubr.f32.gmra.mxu0 %v764
      %v958 = vpop.f32.mrf.mxu0
      %v959 = vadd.f32 0.0, %v958
      %v960 = vpop.f32.mrf.mxu0
      %961 = vmatprep.mubr.f32.mxu0 0.0
      %962 = vmatmul.mubr.f32.gmra.mxu0 %v765
      %v963 = vpop.f32.mrf.mxu0
      %v964 = vadd.f32 0.0, %v963
      %v965 = vpop.f32.mrf.mxu0
      %966 = vmatprep.mubr.f32.mxu0 0.0
      %967 = vmatmul.mubr.f32.gmra.mxu0 %v766
      %v968 = vpop.f32.mrf.mxu0
      %v969 = vadd.f32 0.0, %v968
      %v970 = vpop.f32.mrf.mxu0
      %971 = vmatprep.mubr.f32.mxu0 0.0
      %972 = vmatmul.mubr.f32.gmra.mxu0 %v767
      %v973 = vpop.f32.mrf.mxu0
      %v974 = vadd.f32 0.0, %v973
      %v975 = vpop.f32.mrf.mxu0
      %976 = vmatprep.mubr.f32.mxu0 0.0
      %977 = vmatmul.mubr.f32.gmra.mxu0 %v768
      %v978 = vpop.f32.mrf.mxu0
      %v979 = vadd.f32 0.0, %v978
      %v980 = vpop.f32.mrf.mxu0
      %981 = vmatprep.mubr.f32.mxu0 0.0
      %982 = vmatmul.mubr.f32.gmra.mxu0 %v769
      %v983 = vpop.f32.mrf.mxu0
      %v984 = vadd.f32 0.0, %v983
      %v985 = vpop.f32.mrf.mxu0
      %986 = vmatprep.mubr.f32.mxu0 0.0
      %987 = vmatmul.mubr.f32.gmra.mxu0 %v770
      %v988 = vpop.f32.mrf.mxu0
      %v989 = vadd.f32 0.0, %v988
      %v990 = vpop.f32.mrf.mxu0
      %991 = vmatprep.mubr.f32.mxu0 0.0
      %992 = vmatmul.mubr.f32.gmra.mxu0 %v771
      %v993 = vpop.f32.mrf.mxu0
      %v994 = vadd.f32 0.0, %v993
      %v995 = vpop.f32.mrf.mxu0
      %996 = vmatprep.mubr.f32.mxu0 0.0
      %997 = vmatmul.mubr.f32.gmra.mxu0 %v772
      %v998 = vpop.f32.mrf.mxu0
      %v999 = vadd.f32 0.0, %v998
      %v1000 = vpop.f32.mrf.mxu0
      %1001 = vmatprep.mubr.f32.mxu0 0.0
      %1002 = vmatmul.mubr.f32.gmra.mxu0 %v773
      %v1003 = vpop.f32.mrf.mxu0
      %v1004 = vadd.f32 0.0, %v1003
      %v1005 = vpop.f32.mrf.mxu0
      %1006 = vmatprep.mubr.f32.mxu0 0.0
      %1007 = vmatmul.mubr.f32.gmra.mxu0 %v774
      %v1008 = vpop.f32.mrf.mxu0
      %v1009 = vadd.f32 0.0, %v1008
      %v1010 = vpop.f32.mrf.mxu0
      %1011 = vmatprep.mubr.f32.mxu0 0.0
      %1012 = vmatmul.mubr.f32.gmra.mxu0 %v775
      %v1013 = vpop.f32.mrf.mxu0
      %v1014 = vadd.f32 0.0, %v1013
      %v1015 = vpop.f32.mrf.mxu0
      %1016 = vdwg.mxu0
      %v1017 = vadd.f32 %v586, %v859
      %v1018 = vadd.f32 %v591, %v864
      %v1019 = vadd.f32 %v596, %v869
      %v1020 = vadd.f32 %v601, %v874
      %v1021 = vadd.f32 %v606, %v879
      %v1022 = vadd.f32 %v611, %v884
      %v1023 = vadd.f32 %v616, %v889
      %v1024 = vadd.f32 %v621, %v894
      %v1025 = vadd.f32 %v626, %v899
      %v1026 = vadd.f32 %v631, %v904
      %v1027 = vadd.f32 %v636, %v909
      %v1028 = vadd.f32 %v641, %v914
      %v1029 = vadd.f32 %v646, %v919
      %v1030 = vadd.f32 %v651, %v924
      %v1031 = vadd.f32 %v656, %v929
      %v1032 = vadd.f32 %v661, %v934
      %v1033 = vadd.f32 %v666, %v939
      %v1034 = vadd.f32 %v671, %v944
      %v1035 = vadd.f32 %v676, %v949
      %v1036 = vadd.f32 %v681, %v954
      %v1037 = vadd.f32 %v686, %v959
      %v1038 = vadd.f32 %v691, %v964
      %v1039 = vadd.f32 %v696, %v969
      %v1040 = vadd.f32 %v701, %v974
      %v1041 = vadd.f32 %v706, %v979
      %v1042 = vadd.f32 %v711, %v984
      %v1043 = vadd.f32 %v716, %v989
      %v1044 = vadd.f32 %v721, %v994
      %v1045 = vadd.f32 %v726, %v999
      %v1046 = vadd.f32 %v731, %v1004
      %v1047 = vadd.f32 %v736, %v1009
      %v1048 = vadd.f32 %v741, %v1014
      %s1049 = scalar_lea.vmem %s192, 24
      %v1050 = vld [vmem:[%s1049] sm:$0xff]
      %v1051 = vld [vmem:[%s1049 + $0x8] sm:$0xff]
      %v1052 = vld [vmem:[%s1049 + $0x18] sm:$0xff]
      %v1053 = vld [vmem:[%s1049 + $0x20] sm:$0xff]
      %v1054 = vld [vmem:[%s1049 + $0x30] sm:$0xff]
      %v1055 = vld [vmem:[%s1049 + $0x38] sm:$0xff]
      %v1056 = vld [vmem:[%s1049 + $0x48] sm:$0xff]
      %v1057 = vld [vmem:[%s1049 + $0x50] sm:$0xff]
      %v1058 = vld [vmem:[%s1049 + $0x60] sm:$0xff]
      %v1059 = vld [vmem:[%s1049 + $0x68] sm:$0xff]
      %v1060 = vld [vmem:[%s1049 + $0x78] sm:$0xff]
      %v1061 = vld [vmem:[%s1049 + $0x80] sm:$0xff]
      %v1062 = vld [vmem:[%s1049 + $0x90] sm:$0xff]
      %v1063 = vld [vmem:[%s1049 + $0x98] sm:$0xff]
      %v1064 = vld [vmem:[%s1049 + $0xa8] sm:$0xff]
      %v1065 = vld [vmem:[%s1049 + $0xb0] sm:$0xff]
      %v1066 = vld [vmem:[%s1049 + $0xc0] sm:$0xff]
      %v1067 = vld [vmem:[%s1049 + $0xc8] sm:$0xff]
      %v1068 = vld [vmem:[%s1049 + $0xd8] sm:$0xff]
      %v1069 = vld [vmem:[%s1049 + $0xe0] sm:$0xff]
      %v1070 = vld [vmem:[%s1049 + $0xf0] sm:$0xff]
      %v1071 = vld [vmem:[%s1049 + $0xf8] sm:$0xff]
      %v1072 = vld [vmem:[%s1049 + $0x108] sm:$0xff]
      %v1073 = vld [vmem:[%s1049 + $0x110] sm:$0xff]
      %v1074 = vld [vmem:[%s1049 + $0x120] sm:$0xff]
      %v1075 = vld [vmem:[%s1049 + $0x128] sm:$0xff]
      %v1076 = vld [vmem:[%s1049 + $0x138] sm:$0xff]
      %v1077 = vld [vmem:[%s1049 + $0x140] sm:$0xff]
      %v1078 = vld [vmem:[%s1049 + $0x150] sm:$0xff]
      %v1079 = vld [vmem:[%s1049 + $0x158] sm:$0xff]
      %v1080 = vld [vmem:[%s1049 + $0x168] sm:$0xff]
      %v1081 = vld [vmem:[%s1049 + $0x170] sm:$0xff]
      %v1082 = vld [vmem:[%s1 + $0x180] sm:$0xff]
      %v1083 = vld [vmem:[%s1 + $0x188] sm:$0xff]
      %v1084 = vld [vmem:[%s1 + $0x190] sm:$0xff]
      %v1085 = vld [vmem:[%s1 + $0x198] sm:$0xff]
      %v1086 = vld [vmem:[%s1 + $0x1a0] sm:$0xff]
      %v1087 = vld [vmem:[%s1 + $0x1a8] sm:$0xff]
      %v1088 = vld [vmem:[%s1 + $0x1b0] sm:$0xff]
      %v1089 = vld [vmem:[%s1 + $0x1b8] sm:$0xff]
      %v1090 = vld [vmem:[%s1 + $0x1c0] sm:$0xff]
      %v1091 = vld [vmem:[%s1 + $0x1c8] sm:$0xff]
      %v1092 = vld [vmem:[%s1 + $0x1d0] sm:$0xff]
      %v1093 = vld [vmem:[%s1 + $0x1d8] sm:$0xff]
      %v1094 = vld [vmem:[%s1 + $0x1e0] sm:$0xff]
      %v1095 = vld [vmem:[%s1 + $0x1e8] sm:$0xff]
      %v1096 = vld [vmem:[%s1 + $0x1f0] sm:$0xff]
      %v1097 = vld [vmem:[%s1 + $0x1f8] sm:$0xff]
      %1098 = vmatprep.subr.mxu0 0.0
      %1099 = vmatpush1.msra.mxu0 %v1097
      %1100 = vmatprep.subr.mxu0 0.0
      %1101 = vmatpush1.msra.mxu0 %v1096
      %1102 = vmatprep.subr.mxu0 0.0
      %1103 = vmatpush1.msra.mxu0 %v1095
      %1104 = vmatprep.subr.mxu0 0.0
      %1105 = vmatpush1.msra.mxu0 %v1094
      %1106 = vmatprep.subr.mxu0 0.0
      %1107 = vmatpush1.msra.mxu0 %v1093
      %1108 = vmatprep.subr.mxu0 0.0
      %1109 = vmatpush1.msra.mxu0 %v1092
      %1110 = vmatprep.subr.mxu0 0.0
      %1111 = vmatpush1.msra.mxu0 %v1091
      %1112 = vmatprep.subr.mxu0 0.0
      %1113 = vmatpush1.msra.mxu0 %v1090
      %1114 = vmatprep.subr.mxu0 0.0
      %1115 = vmatpush1.msra.mxu0 %v1089
      %1116 = vmatprep.subr.mxu0 0.0
      %1117 = vmatpush1.msra.mxu0 %v1088
      %1118 = vmatprep.subr.mxu0 0.0
      %1119 = vmatpush1.msra.mxu0 %v1087
      %1120 = vmatprep.subr.mxu0 0.0
      %1121 = vmatpush1.msra.mxu0 %v1086
      %1122 = vmatprep.subr.mxu0 0.0
      %1123 = vmatpush1.msra.mxu0 %v1085
      %1124 = vmatprep.subr.mxu0 0.0
      %1125 = vmatpush1.msra.mxu0 %v1084
      %1126 = vmatprep.subr.mxu0 0.0
      %1127 = vmatpush1.msra.mxu0 %v1083
      %1128 = vmatprep.subr.mxu0 0.0
      %1129 = vmatpush1.msra.mxu0 %v1082
      %1130 = vmatprep.subr.mxu0 0.0
      %1131 = vmatpush2.msra.mxu0 0.0
      %1132 = vmatprep.subr.mxu0 0.0
      %1133 = vmatpush2.msra.mxu0 0.0
      %1134 = vmatprep.subr.mxu0 0.0
      %1135 = vmatpush2.msra.mxu0 0.0
      %1136 = vmatprep.subr.mxu0 0.0
      %1137 = vmatpush2.msra.mxu0 0.0
      %1138 = vmatprep.subr.mxu0 0.0
      %1139 = vmatpush2.msra.mxu0 0.0
      %1140 = vmatprep.subr.mxu0 0.0
      %1141 = vmatpush2.msra.mxu0 0.0
      %1142 = vmatprep.subr.mxu0 0.0
      %1143 = vmatpush2.msra.mxu0 0.0
      %1144 = vmatprep.subr.mxu0 0.0
      %1145 = vmatpush2.msra.mxu0 0.0
      %1146 = vmatprep.subr.mxu0 0.0
      %1147 = vmatpush2.msra.mxu0 0.0
      %1148 = vmatprep.subr.mxu0 0.0
      %1149 = vmatpush2.msra.mxu0 0.0
      %1150 = vmatprep.subr.mxu0 0.0
      %1151 = vmatpush2.msra.mxu0 0.0
      %1152 = vmatprep.subr.mxu0 0.0
      %1153 = vmatpush2.msra.mxu0 0.0
      %1154 = vmatprep.subr.mxu0 0.0
      %1155 = vmatpush2.msra.mxu0 0.0
      %1156 = vmatprep.subr.mxu0 0.0
      %1157 = vmatpush2.msra.mxu0 0.0
      %1158 = vmatprep.subr.mxu0 0.0
      %1159 = vmatpush2.msra.mxu0 0.0
      %1160 = vmatprep.subr.mxu0 0.0
      %1161 = vmatpush2.msra.mxu0 0.0
      %1162 = vmatprep.mubr.f32.mxu0 0.0
      %1163 = vmatmul.mubr.f32.gmra.mxu0 %v1050
      %v1164 = vpop.f32.mrf.mxu0
      %v1165 = vadd.f32 0.0, %v1164
      %v1166 = vpop.f32.mrf.mxu0
      %1167 = vmatprep.mubr.f32.mxu0 0.0
      %1168 = vmatmul.mubr.f32.gmra.mxu0 %v1051
      %v1169 = vpop.f32.mrf.mxu0
      %v1170 = vadd.f32 0.0, %v1169
      %v1171 = vpop.f32.mrf.mxu0
      %1172 = vmatprep.mubr.f32.mxu0 0.0
      %1173 = vmatmul.mubr.f32.gmra.mxu0 %v1052
      %v1174 = vpop.f32.mrf.mxu0
      %v1175 = vadd.f32 0.0, %v1174
      %v1176 = vpop.f32.mrf.mxu0
      %1177 = vmatprep.mubr.f32.mxu0 0.0
      %1178 = vmatmul.mubr.f32.gmra.mxu0 %v1053
      %v1179 = vpop.f32.mrf.mxu0
      %v1180 = vadd.f32 0.0, %v1179
      %v1181 = vpop.f32.mrf.mxu0
      %1182 = vmatprep.mubr.f32.mxu0 0.0
      %1183 = vmatmul.mubr.f32.gmra.mxu0 %v1054
      %v1184 = vpop.f32.mrf.mxu0
      %v1185 = vadd.f32 0.0, %v1184
      %v1186 = vpop.f32.mrf.mxu0
      %1187 = vmatprep.mubr.f32.mxu0 0.0
      %1188 = vmatmul.mubr.f32.gmra.mxu0 %v1055
      %v1189 = vpop.f32.mrf.mxu0
      %v1190 = vadd.f32 0.0, %v1189
      %v1191 = vpop.f32.mrf.mxu0
      %1192 = vmatprep.mubr.f32.mxu0 0.0
      %1193 = vmatmul.mubr.f32.gmra.mxu0 %v1056
      %v1194 = vpop.f32.mrf.mxu0
      %v1195 = vadd.f32 0.0, %v1194
      %v1196 = vpop.f32.mrf.mxu0
      %1197 = vmatprep.mubr.f32.mxu0 0.0
      %1198 = vmatmul.mubr.f32.gmra.mxu0 %v1057
      %v1199 = vpop.f32.mrf.mxu0
      %v1200 = vadd.f32 0.0, %v1199
      %v1201 = vpop.f32.mrf.mxu0
      %1202 = vmatprep.mubr.f32.mxu0 0.0
      %1203 = vmatmul.mubr.f32.gmra.mxu0 %v1058
      %v1204 = vpop.f32.mrf.mxu0
      %v1205 = vadd.f32 0.0, %v1204
      %v1206 = vpop.f32.mrf.mxu0
      %1207 = vmatprep.mubr.f32.mxu0 0.0
      %1208 = vmatmul.mubr.f32.gmra.mxu0 %v1059
      %v1209 = vpop.f32.mrf.mxu0
      %v1210 = vadd.f32 0.0, %v1209
      %v1211 = vpop.f32.mrf.mxu0
      %1212 = vmatprep.mubr.f32.mxu0 0.0
      %1213 = vmatmul.mubr.f32.gmra.mxu0 %v1060
      %v1214 = vpop.f32.mrf.mxu0
      %v1215 = vadd.f32 0.0, %v1214
      %v1216 = vpop.f32.mrf.mxu0
      %1217 = vmatprep.mubr.f32.mxu0 0.0
      %1218 = vmatmul.mubr.f32.gmra.mxu0 %v1061
      %v1219 = vpop.f32.mrf.mxu0
      %v1220 = vadd.f32 0.0, %v1219
      %v1221 = vpop.f32.mrf.mxu0
      %1222 = vmatprep.mubr.f32.mxu0 0.0
      %1223 = vmatmul.mubr.f32.gmra.mxu0 %v1062
      %v1224 = vpop.f32.mrf.mxu0
      %v1225 = vadd.f32 0.0, %v1224
      %v1226 = vpop.f32.mrf.mxu0
      %1227 = vmatprep.mubr.f32.mxu0 0.0
      %1228 = vmatmul.mubr.f32.gmra.mxu0 %v1063
      %v1229 = vpop.f32.mrf.mxu0
      %v1230 = vadd.f32 0.0, %v1229
      %v1231 = vpop.f32.mrf.mxu0
      %1232 = vmatprep.mubr.f32.mxu0 0.0
      %1233 = vmatmul.mubr.f32.gmra.mxu0 %v1064
      %v1234 = vpop.f32.mrf.mxu0
      %v1235 = vadd.f32 0.0, %v1234
      %v1236 = vpop.f32.mrf.mxu0
      %1237 = vmatprep.mubr.f32.mxu0 0.0
      %1238 = vmatmul.mubr.f32.gmra.mxu0 %v1065
      %v1239 = vpop.f32.mrf.mxu0
      %v1240 = vadd.f32 0.0, %v1239
      %v1241 = vpop.f32.mrf.mxu0
      %1242 = vmatprep.mubr.f32.mxu0 0.0
      %1243 = vmatmul.mubr.f32.gmra.mxu0 %v1066
      %v1244 = vpop.f32.mrf.mxu0
      %v1245 = vadd.f32 0.0, %v1244
      %v1246 = vpop.f32.mrf.mxu0
      %1247 = vmatprep.mubr.f32.mxu0 0.0
      %1248 = vmatmul.mubr.f32.gmra.mxu0 %v1067
      %v1249 = vpop.f32.mrf.mxu0
      %v1250 = vadd.f32 0.0, %v1249
      %v1251 = vpop.f32.mrf.mxu0
      %1252 = vmatprep.mubr.f32.mxu0 0.0
      %1253 = vmatmul.mubr.f32.gmra.mxu0 %v1068
      %v1254 = vpop.f32.mrf.mxu0
      %v1255 = vadd.f32 0.0, %v1254
      %v1256 = vpop.f32.mrf.mxu0
      %1257 = vmatprep.mubr.f32.mxu0 0.0
      %1258 = vmatmul.mubr.f32.gmra.mxu0 %v1069
      %v1259 = vpop.f32.mrf.mxu0
      %v1260 = vadd.f32 0.0, %v1259
      %v1261 = vpop.f32.mrf.mxu0
      %1262 = vmatprep.mubr.f32.mxu0 0.0
      %1263 = vmatmul.mubr.f32.gmra.mxu0 %v1070
      %v1264 = vpop.f32.mrf.mxu0
      %v1265 = vadd.f32 0.0, %v1264
      %v1266 = vpop.f32.mrf.mxu0
      %1267 = vmatprep.mubr.f32.mxu0 0.0
      %1268 = vmatmul.mubr.f32.gmra.mxu0 %v1071
      %v1269 = vpop.f32.mrf.mxu0
      %v1270 = vadd.f32 0.0, %v1269
      %v1271 = vpop.f32.mrf.mxu0
      %1272 = vmatprep.mubr.f32.mxu0 0.0
      %1273 = vmatmul.mubr.f32.gmra.mxu0 %v1072
      %v1274 = vpop.f32.mrf.mxu0
      %v1275 = vadd.f32 0.0, %v1274
      %v1276 = vpop.f32.mrf.mxu0
      %1277 = vmatprep.mubr.f32.mxu0 0.0
      %1278 = vmatmul.mubr.f32.gmra.mxu0 %v1073
      %v1279 = vpop.f32.mrf.mxu0
      %v1280 = vadd.f32 0.0, %v1279
      %v1281 = vpop.f32.mrf.mxu0
      %1282 = vmatprep.mubr.f32.mxu0 0.0
      %1283 = vmatmul.mubr.f32.gmra.mxu0 %v1074
      %v1284 = vpop.f32.mrf.mxu0
      %v1285 = vadd.f32 0.0, %v1284
      %v1286 = vpop.f32.mrf.mxu0
      %1287 = vmatprep.mubr.f32.mxu0 0.0
      %1288 = vmatmul.mubr.f32.gmra.mxu0 %v1075
      %v1289 = vpop.f32.mrf.mxu0
      %v1290 = vadd.f32 0.0, %v1289
      %v1291 = vpop.f32.mrf.mxu0
      %1292 = vmatprep.mubr.f32.mxu0 0.0
      %1293 = vmatmul.mubr.f32.gmra.mxu0 %v1076
      %v1294 = vpop.f32.mrf.mxu0
      %v1295 = vadd.f32 0.0, %v1294
      %v1296 = vpop.f32.mrf.mxu0
      %1297 = vmatprep.mubr.f32.mxu0 0.0
      %1298 = vmatmul.mubr.f32.gmra.mxu0 %v1077
      %v1299 = vpop.f32.mrf.mxu0
      %v1300 = vadd.f32 0.0, %v1299
      %v1301 = vpop.f32.mrf.mxu0
      %1302 = vmatprep.mubr.f32.mxu0 0.0
      %1303 = vmatmul.mubr.f32.gmra.mxu0 %v1078
      %v1304 = vpop.f32.mrf.mxu0
      %v1305 = vadd.f32 0.0, %v1304
      %v1306 = vpop.f32.mrf.mxu0
      %1307 = vmatprep.mubr.f32.mxu0 0.0
      %1308 = vmatmul.mubr.f32.gmra.mxu0 %v1079
      %v1309 = vpop.f32.mrf.mxu0
      %v1310 = vadd.f32 0.0, %v1309
      %v1311 = vpop.f32.mrf.mxu0
      %1312 = vmatprep.mubr.f32.mxu0 0.0
      %1313 = vmatmul.mubr.f32.gmra.mxu0 %v1080
      %v1314 = vpop.f32.mrf.mxu0
      %v1315 = vadd.f32 0.0, %v1314
      %v1316 = vpop.f32.mrf.mxu0
      %1317 = vmatprep.mubr.f32.mxu0 0.0
      %1318 = vmatmul.mubr.f32.gmra.mxu0 %v1081
      %v1319 = vpop.f32.mrf.mxu0
      %v1320 = vadd.f32 0.0, %v1319
      %v1321 = vpop.f32.mrf.mxu0
      %1322 = vdwg.mxu0
      %v1323 = vadd.f32 %v1017, %v1165
      %v1324 = vadd.f32 %v1018, %v1170
      %v1325 = vadd.f32 %v1019, %v1175
      %v1326 = vadd.f32 %v1020, %v1180
      %v1327 = vadd.f32 %v1021, %v1185
      %v1328 = vadd.f32 %v1022, %v1190
      %v1329 = vadd.f32 %v1023, %v1195
      %v1330 = vadd.f32 %v1024, %v1200
      %v1331 = vadd.f32 %v1025, %v1205
      %v1332 = vadd.f32 %v1026, %v1210
      %v1333 = vadd.f32 %v1027, %v1215
      %v1334 = vadd.f32 %v1028, %v1220
      %v1335 = vadd.f32 %v1029, %v1225
      %v1336 = vadd.f32 %v1030, %v1230
      %v1337 = vadd.f32 %v1031, %v1235
      %v1338 = vadd.f32 %v1032, %v1240
      %v1339 = vadd.f32 %v1033, %v1245
      %v1340 = vadd.f32 %v1034, %v1250
      %v1341 = vadd.f32 %v1035, %v1255
      %v1342 = vadd.f32 %v1036, %v1260
      %v1343 = vadd.f32 %v1037, %v1265
      %v1344 = vadd.f32 %v1038, %v1270
      %v1345 = vadd.f32 %v1039, %v1275
      %v1346 = vadd.f32 %v1040, %v1280
      %v1347 = vadd.f32 %v1041, %v1285
      %v1348 = vadd.f32 %v1042, %v1290
      %v1349 = vadd.f32 %v1043, %v1295
      %v1350 = vadd.f32 %v1044, %v1300
      %v1351 = vadd.f32 %v1045, %v1305
      %v1352 = vadd.f32 %v1046, %v1310
      %v1353 = vadd.f32 %v1047, %v1315
      %v1354 = vadd.f32 %v1048, %v1320
      %v1355 = vld [vmem:[%s1049 + $0x1] sm:$0xff]
      %v1356 = vld [vmem:[%s1049 + $0x9] sm:$0xff]
      %v1357 = vld [vmem:[%s1049 + $0x19] sm:$0xff]
      %v1358 = vld [vmem:[%s1049 + $0x21] sm:$0xff]
      %v1359 = vld [vmem:[%s1049 + $0x31] sm:$0xff]
      %v1360 = vld [vmem:[%s1049 + $0x39] sm:$0xff]
      %v1361 = vld [vmem:[%s1049 + $0x49] sm:$0xff]
      %v1362 = vld [vmem:[%s1049 + $0x51] sm:$0xff]
      %v1363 = vld [vmem:[%s1049 + $0x61] sm:$0xff]
      %v1364 = vld [vmem:[%s1049 + $0x69] sm:$0xff]
      %v1365 = vld [vmem:[%s1049 + $0x79] sm:$0xff]
      %v1366 = vld [vmem:[%s1049 + $0x81] sm:$0xff]
      %v1367 = vld [vmem:[%s1049 + $0x91] sm:$0xff]
      %v1368 = vld [vmem:[%s1049 + $0x99] sm:$0xff]
      %v1369 = vld [vmem:[%s1049 + $0xa9] sm:$0xff]
      %v1370 = vld [vmem:[%s1049 + $0xb1] sm:$0xff]
      %v1371 = vld [vmem:[%s1049 + $0xc1] sm:$0xff]
      %v1372 = vld [vmem:[%s1049 + $0xc9] sm:$0xff]
      %v1373 = vld [vmem:[%s1049 + $0xd9] sm:$0xff]
      %v1374 = vld [vmem:[%s1049 + $0xe1] sm:$0xff]
      %v1375 = vld [vmem:[%s1049 + $0xf1] sm:$0xff]
      %v1376 = vld [vmem:[%s1049 + $0xf9] sm:$0xff]
      %v1377 = vld [vmem:[%s1049 + $0x109] sm:$0xff]
      %v1378 = vld [vmem:[%s1049 + $0x111] sm:$0xff]
      %v1379 = vld [vmem:[%s1049 + $0x121] sm:$0xff]
      %v1380 = vld [vmem:[%s1049 + $0x129] sm:$0xff]
      %v1381 = vld [vmem:[%s1049 + $0x139] sm:$0xff]
      %v1382 = vld [vmem:[%s1049 + $0x141] sm:$0xff]
      %v1383 = vld [vmem:[%s1049 + $0x151] sm:$0xff]
      %v1384 = vld [vmem:[%s1049 + $0x159] sm:$0xff]
      %v1385 = vld [vmem:[%s1049 + $0x169] sm:$0xff]
      %v1386 = vld [vmem:[%s1049 + $0x171] sm:$0xff]
      %v1387 = vld [vmem:[%s1 + $0x200] sm:$0xff]
      %v1388 = vld [vmem:[%s1 + $0x208] sm:$0xff]
      %v1389 = vld [vmem:[%s1 + $0x210] sm:$0xff]
      %v1390 = vld [vmem:[%s1 + $0x218] sm:$0xff]
      %v1391 = vld [vmem:[%s1 + $0x220] sm:$0xff]
      %v1392 = vld [vmem:[%s1 + $0x228] sm:$0xff]
      %v1393 = vld [vmem:[%s1 + $0x230] sm:$0xff]
      %v1394 = vld [vmem:[%s1 + $0x238] sm:$0xff]
      %v1395 = vld [vmem:[%s1 + $0x240] sm:$0xff]
      %v1396 = vld [vmem:[%s1 + $0x248] sm:$0xff]
      %v1397 = vld [vmem:[%s1 + $0x250] sm:$0xff]
      %v1398 = vld [vmem:[%s1 + $0x258] sm:$0xff]
      %v1399 = vld [vmem:[%s1 + $0x260] sm:$0xff]
      %v1400 = vld [vmem:[%s1 + $0x268] sm:$0xff]
      %v1401 = vld [vmem:[%s1 + $0x270] sm:$0xff]
      %v1402 = vld [vmem:[%s1 + $0x278] sm:$0xff]
      %1403 = vmatprep.subr.mxu0 0.0
      %1404 = vmatpush1.msra.mxu0 %v1402
      %1405 = vmatprep.subr.mxu0 0.0
      %1406 = vmatpush1.msra.mxu0 %v1401
      %1407 = vmatprep.subr.mxu0 0.0
      %1408 = vmatpush1.msra.mxu0 %v1400
      %1409 = vmatprep.subr.mxu0 0.0
      %1410 = vmatpush1.msra.mxu0 %v1399
      %1411 = vmatprep.subr.mxu0 0.0
      %1412 = vmatpush1.msra.mxu0 %v1398
      %1413 = vmatprep.subr.mxu0 0.0
      %1414 = vmatpush1.msra.mxu0 %v1397
      %1415 = vmatprep.subr.mxu0 0.0
      %1416 = vmatpush1.msra.mxu0 %v1396
      %1417 = vmatprep.subr.mxu0 0.0
      %1418 = vmatpush1.msra.mxu0 %v1395
      %1419 = vmatprep.subr.mxu0 0.0
      %1420 = vmatpush1.msra.mxu0 %v1394
      %1421 = vmatprep.subr.mxu0 0.0
      %1422 = vmatpush1.msra.mxu0 %v1393
      %1423 = vmatprep.subr.mxu0 0.0
      %1424 = vmatpush1.msra.mxu0 %v1392
      %1425 = vmatprep.subr.mxu0 0.0
      %1426 = vmatpush1.msra.mxu0 %v1391
      %1427 = vmatprep.subr.mxu0 0.0
      %1428 = vmatpush1.msra.mxu0 %v1390
      %1429 = vmatprep.subr.mxu0 0.0
      %1430 = vmatpush1.msra.mxu0 %v1389
      %1431 = vmatprep.subr.mxu0 0.0
      %1432 = vmatpush1.msra.mxu0 %v1388
      %1433 = vmatprep.subr.mxu0 0.0
      %1434 = vmatpush1.msra.mxu0 %v1387
      %1435 = vmatprep.subr.mxu0 0.0
      %1436 = vmatpush2.msra.mxu0 0.0
      %1437 = vmatprep.subr.mxu0 0.0
      %1438 = vmatpush2.msra.mxu0 0.0
      %1439 = vmatprep.subr.mxu0 0.0
      %1440 = vmatpush2.msra.mxu0 0.0
      %1441 = vmatprep.subr.mxu0 0.0
      %1442 = vmatpush2.msra.mxu0 0.0
      %1443 = vmatprep.subr.mxu0 0.0
      %1444 = vmatpush2.msra.mxu0 0.0
      %1445 = vmatprep.subr.mxu0 0.0
      %1446 = vmatpush2.msra.mxu0 0.0
      %1447 = vmatprep.subr.mxu0 0.0
      %1448 = vmatpush2.msra.mxu0 0.0
      %1449 = vmatprep.subr.mxu0 0.0
      %1450 = vmatpush2.msra.mxu0 0.0
      %1451 = vmatprep.subr.mxu0 0.0
      %1452 = vmatpush2.msra.mxu0 0.0
      %1453 = vmatprep.subr.mxu0 0.0
      %1454 = vmatpush2.msra.mxu0 0.0
      %1455 = vmatprep.subr.mxu0 0.0
      %1456 = vmatpush2.msra.mxu0 0.0
      %1457 = vmatprep.subr.mxu0 0.0
      %1458 = vmatpush2.msra.mxu0 0.0
      %1459 = vmatprep.subr.mxu0 0.0
      %1460 = vmatpush2.msra.mxu0 0.0
      %1461 = vmatprep.subr.mxu0 0.0
      %1462 = vmatpush2.msra.mxu0 0.0
      %1463 = vmatprep.subr.mxu0 0.0
      %1464 = vmatpush2.msra.mxu0 0.0
      %1465 = vmatprep.subr.mxu0 0.0
      %1466 = vmatpush2.msra.mxu0 0.0
      %1467 = vmatprep.mubr.f32.mxu0 0.0
      %1468 = vmatmul.mubr.f32.gmra.mxu0 %v1355
      %v1469 = vpop.f32.mrf.mxu0
      %v1470 = vadd.f32 0.0, %v1469
      %v1471 = vpop.f32.mrf.mxu0
      %1472 = vmatprep.mubr.f32.mxu0 0.0
      %1473 = vmatmul.mubr.f32.gmra.mxu0 %v1356
      %v1474 = vpop.f32.mrf.mxu0
      %v1475 = vadd.f32 0.0, %v1474
      %v1476 = vpop.f32.mrf.mxu0
      %1477 = vmatprep.mubr.f32.mxu0 0.0
      %1478 = vmatmul.mubr.f32.gmra.mxu0 %v1357
      %v1479 = vpop.f32.mrf.mxu0
      %v1480 = vadd.f32 0.0, %v1479
      %v1481 = vpop.f32.mrf.mxu0
      %1482 = vmatprep.mubr.f32.mxu0 0.0
      %1483 = vmatmul.mubr.f32.gmra.mxu0 %v1358
      %v1484 = vpop.f32.mrf.mxu0
      %v1485 = vadd.f32 0.0, %v1484
      %v1486 = vpop.f32.mrf.mxu0
      %1487 = vmatprep.mubr.f32.mxu0 0.0
      %1488 = vmatmul.mubr.f32.gmra.mxu0 %v1359
      %v1489 = vpop.f32.mrf.mxu0
      %v1490 = vadd.f32 0.0, %v1489
      %v1491 = vpop.f32.mrf.mxu0
      %1492 = vmatprep.mubr.f32.mxu0 0.0
      %1493 = vmatmul.mubr.f32.gmra.mxu0 %v1360
      %v1494 = vpop.f32.mrf.mxu0
      %v1495 = vadd.f32 0.0, %v1494
      %v1496 = vpop.f32.mrf.mxu0
      %1497 = vmatprep.mubr.f32.mxu0 0.0
      %1498 = vmatmul.mubr.f32.gmra.mxu0 %v1361
      %v1499 = vpop.f32.mrf.mxu0
      %v1500 = vadd.f32 0.0, %v1499
      %v1501 = vpop.f32.mrf.mxu0
      %1502 = vmatprep.mubr.f32.mxu0 0.0
      %1503 = vmatmul.mubr.f32.gmra.mxu0 %v1362
      %v1504 = vpop.f32.mrf.mxu0
      %v1505 = vadd.f32 0.0, %v1504
      %v1506 = vpop.f32.mrf.mxu0
      %1507 = vmatprep.mubr.f32.mxu0 0.0
      %1508 = vmatmul.mubr.f32.gmra.mxu0 %v1363
      %v1509 = vpop.f32.mrf.mxu0
      %v1510 = vadd.f32 0.0, %v1509
      %v1511 = vpop.f32.mrf.mxu0
      %1512 = vmatprep.mubr.f32.mxu0 0.0
      %1513 = vmatmul.mubr.f32.gmra.mxu0 %v1364
      %v1514 = vpop.f32.mrf.mxu0
      %v1515 = vadd.f32 0.0, %v1514
      %v1516 = vpop.f32.mrf.mxu0
      %1517 = vmatprep.mubr.f32.mxu0 0.0
      %1518 = vmatmul.mubr.f32.gmra.mxu0 %v1365
      %v1519 = vpop.f32.mrf.mxu0
      %v1520 = vadd.f32 0.0, %v1519
      %v1521 = vpop.f32.mrf.mxu0
      %1522 = vmatprep.mubr.f32.mxu0 0.0
      %1523 = vmatmul.mubr.f32.gmra.mxu0 %v1366
      %v1524 = vpop.f32.mrf.mxu0
      %v1525 = vadd.f32 0.0, %v1524
      %v1526 = vpop.f32.mrf.mxu0
      %1527 = vmatprep.mubr.f32.mxu0 0.0
      %1528 = vmatmul.mubr.f32.gmra.mxu0 %v1367
      %v1529 = vpop.f32.mrf.mxu0
      %v1530 = vadd.f32 0.0, %v1529
      %v1531 = vpop.f32.mrf.mxu0
      %1532 = vmatprep.mubr.f32.mxu0 0.0
      %1533 = vmatmul.mubr.f32.gmra.mxu0 %v1368
      %v1534 = vpop.f32.mrf.mxu0
      %v1535 = vadd.f32 0.0, %v1534
      %v1536 = vpop.f32.mrf.mxu0
      %1537 = vmatprep.mubr.f32.mxu0 0.0
      %1538 = vmatmul.mubr.f32.gmra.mxu0 %v1369
      %v1539 = vpop.f32.mrf.mxu0
      %v1540 = vadd.f32 0.0, %v1539
      %v1541 = vpop.f32.mrf.mxu0
      %1542 = vmatprep.mubr.f32.mxu0 0.0
      %1543 = vmatmul.mubr.f32.gmra.mxu0 %v1370
      %v1544 = vpop.f32.mrf.mxu0
      %v1545 = vadd.f32 0.0, %v1544
      %v1546 = vpop.f32.mrf.mxu0
      %1547 = vmatprep.mubr.f32.mxu0 0.0
      %1548 = vmatmul.mubr.f32.gmra.mxu0 %v1371
      %v1549 = vpop.f32.mrf.mxu0
      %v1550 = vadd.f32 0.0, %v1549
      %v1551 = vpop.f32.mrf.mxu0
      %1552 = vmatprep.mubr.f32.mxu0 0.0
      %1553 = vmatmul.mubr.f32.gmra.mxu0 %v1372
      %v1554 = vpop.f32.mrf.mxu0
      %v1555 = vadd.f32 0.0, %v1554
      %v1556 = vpop.f32.mrf.mxu0
      %1557 = vmatprep.mubr.f32.mxu0 0.0
      %1558 = vmatmul.mubr.f32.gmra.mxu0 %v1373
      %v1559 = vpop.f32.mrf.mxu0
      %v1560 = vadd.f32 0.0, %v1559
      %v1561 = vpop.f32.mrf.mxu0
      %1562 = vmatprep.mubr.f32.mxu0 0.0
      %1563 = vmatmul.mubr.f32.gmra.mxu0 %v1374
      %v1564 = vpop.f32.mrf.mxu0
      %v1565 = vadd.f32 0.0, %v1564
      %v1566 = vpop.f32.mrf.mxu0
      %1567 = vmatprep.mubr.f32.mxu0 0.0
      %1568 = vmatmul.mubr.f32.gmra.mxu0 %v1375
      %v1569 = vpop.f32.mrf.mxu0
      %v1570 = vadd.f32 0.0, %v1569
      %v1571 = vpop.f32.mrf.mxu0
      %1572 = vmatprep.mubr.f32.mxu0 0.0
      %1573 = vmatmul.mubr.f32.gmra.mxu0 %v1376
      %v1574 = vpop.f32.mrf.mxu0
      %v1575 = vadd.f32 0.0, %v1574
      %v1576 = vpop.f32.mrf.mxu0
      %1577 = vmatprep.mubr.f32.mxu0 0.0
      %1578 = vmatmul.mubr.f32.gmra.mxu0 %v1377
      %v1579 = vpop.f32.mrf.mxu0
      %v1580 = vadd.f32 0.0, %v1579
      %v1581 = vpop.f32.mrf.mxu0
      %1582 = vmatprep.mubr.f32.mxu0 0.0
      %1583 = vmatmul.mubr.f32.gmra.mxu0 %v1378
      %v1584 = vpop.f32.mrf.mxu0
      %v1585 = vadd.f32 0.0, %v1584
      %v1586 = vpop.f32.mrf.mxu0
      %1587 = vmatprep.mubr.f32.mxu0 0.0
      %1588 = vmatmul.mubr.f32.gmra.mxu0 %v1379
      %v1589 = vpop.f32.mrf.mxu0
      %v1590 = vadd.f32 0.0, %v1589
      %v1591 = vpop.f32.mrf.mxu0
      %1592 = vmatprep.mubr.f32.mxu0 0.0
      %1593 = vmatmul.mubr.f32.gmra.mxu0 %v1380
      %v1594 = vpop.f32.mrf.mxu0
      %v1595 = vadd.f32 0.0, %v1594
      %v1596 = vpop.f32.mrf.mxu0
      %1597 = vmatprep.mubr.f32.mxu0 0.0
      %1598 = vmatmul.mubr.f32.gmra.mxu0 %v1381
      %v1599 = vpop.f32.mrf.mxu0
      %v1600 = vadd.f32 0.0, %v1599
      %v1601 = vpop.f32.mrf.mxu0
      %1602 = vmatprep.mubr.f32.mxu0 0.0
      %1603 = vmatmul.mubr.f32.gmra.mxu0 %v1382
      %v1604 = vpop.f32.mrf.mxu0
      %v1605 = vadd.f32 0.0, %v1604
      %v1606 = vpop.f32.mrf.mxu0
      %1607 = vmatprep.mubr.f32.mxu0 0.0
      %1608 = vmatmul.mubr.f32.gmra.mxu0 %v1383
      %v1609 = vpop.f32.mrf.mxu0
      %v1610 = vadd.f32 0.0, %v1609
      %v1611 = vpop.f32.mrf.mxu0
      %1612 = vmatprep.mubr.f32.mxu0 0.0
      %1613 = vmatmul.mubr.f32.gmra.mxu0 %v1384
      %v1614 = vpop.f32.mrf.mxu0
      %v1615 = vadd.f32 0.0, %v1614
      %v1616 = vpop.f32.mrf.mxu0
      %1617 = vmatprep.mubr.f32.mxu0 0.0
      %1618 = vmatmul.mubr.f32.gmra.mxu0 %v1385
      %v1619 = vpop.f32.mrf.mxu0
      %v1620 = vadd.f32 0.0, %v1619
      %v1621 = vpop.f32.mrf.mxu0
      %1622 = vmatprep.mubr.f32.mxu0 0.0
      %1623 = vmatmul.mubr.f32.gmra.mxu0 %v1386
      %v1624 = vpop.f32.mrf.mxu0
      %v1625 = vadd.f32 0.0, %v1624
      %v1626 = vpop.f32.mrf.mxu0
      %1627 = vdwg.mxu0
      %v1628 = vadd.f32 %v1323, %v1470
      %v1629 = vadd.f32 %v1324, %v1475
      %v1630 = vadd.f32 %v1325, %v1480
      %v1631 = vadd.f32 %v1326, %v1485
      %v1632 = vadd.f32 %v1327, %v1490
      %v1633 = vadd.f32 %v1328, %v1495
      %v1634 = vadd.f32 %v1329, %v1500
      %v1635 = vadd.f32 %v1330, %v1505
      %v1636 = vadd.f32 %v1331, %v1510
      %v1637 = vadd.f32 %v1332, %v1515
      %v1638 = vadd.f32 %v1333, %v1520
      %v1639 = vadd.f32 %v1334, %v1525
      %v1640 = vadd.f32 %v1335, %v1530
      %v1641 = vadd.f32 %v1336, %v1535
      %v1642 = vadd.f32 %v1337, %v1540
      %v1643 = vadd.f32 %v1338, %v1545
      %v1644 = vadd.f32 %v1339, %v1550
      %v1645 = vadd.f32 %v1340, %v1555
      %v1646 = vadd.f32 %v1341, %v1560
      %v1647 = vadd.f32 %v1342, %v1565
      %v1648 = vadd.f32 %v1343, %v1570
      %v1649 = vadd.f32 %v1344, %v1575
      %v1650 = vadd.f32 %v1345, %v1580
      %v1651 = vadd.f32 %v1346, %v1585
      %v1652 = vadd.f32 %v1347, %v1590
      %v1653 = vadd.f32 %v1348, %v1595
      %v1654 = vadd.f32 %v1349, %v1600
      %v1655 = vadd.f32 %v1350, %v1605
      %v1656 = vadd.f32 %v1351, %v1610
      %v1657 = vadd.f32 %v1352, %v1615
      %v1658 = vadd.f32 %v1353, %v1620
      %v1659 = vadd.f32 %v1354, %v1625
      %v1660 = vld [vmem:[%s1049 + $0x2] sm:$0xff]
      %v1661 = vld [vmem:[%s1049 + $0xa] sm:$0xff]
      %v1662 = vld [vmem:[%s1049 + $0x1a] sm:$0xff]
      %v1663 = vld [vmem:[%s1049 + $0x22] sm:$0xff]
      %v1664 = vld [vmem:[%s1049 + $0x32] sm:$0xff]
      %v1665 = vld [vmem:[%s1049 + $0x3a] sm:$0xff]
      %v1666 = vld [vmem:[%s1049 + $0x4a] sm:$0xff]
      %v1667 = vld [vmem:[%s1049 + $0x52] sm:$0xff]
      %v1668 = vld [vmem:[%s1049 + $0x62] sm:$0xff]
      %v1669 = vld [vmem:[%s1049 + $0x6a] sm:$0xff]
      %v1670 = vld [vmem:[%s1049 + $0x7a] sm:$0xff]
      %v1671 = vld [vmem:[%s1049 + $0x82] sm:$0xff]
      %v1672 = vld [vmem:[%s1049 + $0x92] sm:$0xff]
      %v1673 = vld [vmem:[%s1049 + $0x9a] sm:$0xff]
      %v1674 = vld [vmem:[%s1049 + $0xaa] sm:$0xff]
      %v1675 = vld [vmem:[%s1049 + $0xb2] sm:$0xff]
      %v1676 = vld [vmem:[%s1049 + $0xc2] sm:$0xff]
      %v1677 = vld [vmem:[%s1049 + $0xca] sm:$0xff]
      %v1678 = vld [vmem:[%s1049 + $0xda] sm:$0xff]
      %v1679 = vld [vmem:[%s1049 + $0xe2] sm:$0xff]
      %v1680 = vld [vmem:[%s1049 + $0xf2] sm:$0xff]
      %v1681 = vld [vmem:[%s1049 + $0xfa] sm:$0xff]
      %v1682 = vld [vmem:[%s1049 + $0x10a] sm:$0xff]
      %v1683 = vld [vmem:[%s1049 + $0x112] sm:$0xff]
      %v1684 = vld [vmem:[%s1049 + $0x122] sm:$0xff]
      %v1685 = vld [vmem:[%s1049 + $0x12a] sm:$0xff]
      %v1686 = vld [vmem:[%s1049 + $0x13a] sm:$0xff]
      %v1687 = vld [vmem:[%s1049 + $0x142] sm:$0xff]
      %v1688 = vld [vmem:[%s1049 + $0x152] sm:$0xff]
      %v1689 = vld [vmem:[%s1049 + $0x15a] sm:$0xff]
      %v1690 = vld [vmem:[%s1049 + $0x16a] sm:$0xff]
      %v1691 = vld [vmem:[%s1049 + $0x172] sm:$0xff]
      %v1692 = vld [vmem:[%s1 + $0x280] sm:$0xff]
      %v1693 = vld [vmem:[%s1 + $0x288] sm:$0xff]
      %v1694 = vld [vmem:[%s1 + $0x290] sm:$0xff]
      %v1695 = vld [vmem:[%s1 + $0x298] sm:$0xff]
      %v1696 = vld [vmem:[%s1 + $0x2a0] sm:$0xff]
      %v1697 = vld [vmem:[%s1 + $0x2a8] sm:$0xff]
      %v1698 = vld [vmem:[%s1 + $0x2b0] sm:$0xff]
      %v1699 = vld [vmem:[%s1 + $0x2b8] sm:$0xff]
      %v1700 = vld [vmem:[%s1 + $0x2c0] sm:$0xff]
      %v1701 = vld [vmem:[%s1 + $0x2c8] sm:$0xff]
      %v1702 = vld [vmem:[%s1 + $0x2d0] sm:$0xff]
      %v1703 = vld [vmem:[%s1 + $0x2d8] sm:$0xff]
      %v1704 = vld [vmem:[%s1 + $0x2e0] sm:$0xff]
      %v1705 = vld [vmem:[%s1 + $0x2e8] sm:$0xff]
      %v1706 = vld [vmem:[%s1 + $0x2f0] sm:$0xff]
      %v1707 = vld [vmem:[%s1 + $0x2f8] sm:$0xff]
      %1708 = vmatprep.subr.mxu0 0.0
      %1709 = vmatpush1.msra.mxu0 %v1707
      %1710 = vmatprep.subr.mxu0 0.0
      %1711 = vmatpush1.msra.mxu0 %v1706
      %1712 = vmatprep.subr.mxu0 0.0
      %1713 = vmatpush1.msra.mxu0 %v1705
      %1714 = vmatprep.subr.mxu0 0.0
      %1715 = vmatpush1.msra.mxu0 %v1704
      %1716 = vmatprep.subr.mxu0 0.0
      %1717 = vmatpush1.msra.mxu0 %v1703
      %1718 = vmatprep.subr.mxu0 0.0
      %1719 = vmatpush1.msra.mxu0 %v1702
      %1720 = vmatprep.subr.mxu0 0.0
      %1721 = vmatpush1.msra.mxu0 %v1701
      %1722 = vmatprep.subr.mxu0 0.0
      %1723 = vmatpush1.msra.mxu0 %v1700
      %1724 = vmatprep.subr.mxu0 0.0
      %1725 = vmatpush1.msra.mxu0 %v1699
      %1726 = vmatprep.subr.mxu0 0.0
      %1727 = vmatpush1.msra.mxu0 %v1698
      %1728 = vmatprep.subr.mxu0 0.0
      %1729 = vmatpush1.msra.mxu0 %v1697
      %1730 = vmatprep.subr.mxu0 0.0
      %1731 = vmatpush1.msra.mxu0 %v1696
      %1732 = vmatprep.subr.mxu0 0.0
      %1733 = vmatpush1.msra.mxu0 %v1695
      %1734 = vmatprep.subr.mxu0 0.0
      %1735 = vmatpush1.msra.mxu0 %v1694
      %1736 = vmatprep.subr.mxu0 0.0
      %1737 = vmatpush1.msra.mxu0 %v1693
      %1738 = vmatprep.subr.mxu0 0.0
      %1739 = vmatpush1.msra.mxu0 %v1692
      %1740 = vmatprep.subr.mxu0 0.0
      %1741 = vmatpush2.msra.mxu0 0.0
      %1742 = vmatprep.subr.mxu0 0.0
      %1743 = vmatpush2.msra.mxu0 0.0
      %1744 = vmatprep.subr.mxu0 0.0
      %1745 = vmatpush2.msra.mxu0 0.0
      %1746 = vmatprep.subr.mxu0 0.0
      %1747 = vmatpush2.msra.mxu0 0.0
      %1748 = vmatprep.subr.mxu0 0.0
      %1749 = vmatpush2.msra.mxu0 0.0
      %1750 = vmatprep.subr.mxu0 0.0
      %1751 = vmatpush2.msra.mxu0 0.0
      %1752 = vmatprep.subr.mxu0 0.0
      %1753 = vmatpush2.msra.mxu0 0.0
      %1754 = vmatprep.subr.mxu0 0.0
      %1755 = vmatpush2.msra.mxu0 0.0
      %1756 = vmatprep.subr.mxu0 0.0
      %1757 = vmatpush2.msra.mxu0 0.0
      %1758 = vmatprep.subr.mxu0 0.0
      %1759 = vmatpush2.msra.mxu0 0.0
      %1760 = vmatprep.subr.mxu0 0.0
      %1761 = vmatpush2.msra.mxu0 0.0
      %1762 = vmatprep.subr.mxu0 0.0
      %1763 = vmatpush2.msra.mxu0 0.0
      %1764 = vmatprep.subr.mxu0 0.0
      %1765 = vmatpush2.msra.mxu0 0.0
      %1766 = vmatprep.subr.mxu0 0.0
      %1767 = vmatpush2.msra.mxu0 0.0
      %1768 = vmatprep.subr.mxu0 0.0
      %1769 = vmatpush2.msra.mxu0 0.0
      %1770 = vmatprep.subr.mxu0 0.0
      %1771 = vmatpush2.msra.mxu0 0.0
      %1772 = vmatprep.mubr.f32.mxu0 0.0
      %1773 = vmatmul.mubr.f32.gmra.mxu0 %v1660
      %v1774 = vpop.f32.mrf.mxu0
      %v1775 = vadd.f32 0.0, %v1774
      %v1776 = vpop.f32.mrf.mxu0
      %1777 = vmatprep.mubr.f32.mxu0 0.0
      %1778 = vmatmul.mubr.f32.gmra.mxu0 %v1661
      %v1779 = vpop.f32.mrf.mxu0
      %v1780 = vadd.f32 0.0, %v1779
      %v1781 = vpop.f32.mrf.mxu0
      %1782 = vmatprep.mubr.f32.mxu0 0.0
      %1783 = vmatmul.mubr.f32.gmra.mxu0 %v1662
      %v1784 = vpop.f32.mrf.mxu0
      %v1785 = vadd.f32 0.0, %v1784
      %v1786 = vpop.f32.mrf.mxu0
      %1787 = vmatprep.mubr.f32.mxu0 0.0
      %1788 = vmatmul.mubr.f32.gmra.mxu0 %v1663
      %v1789 = vpop.f32.mrf.mxu0
      %v1790 = vadd.f32 0.0, %v1789
      %v1791 = vpop.f32.mrf.mxu0
      %1792 = vmatprep.mubr.f32.mxu0 0.0
      %1793 = vmatmul.mubr.f32.gmra.mxu0 %v1664
      %v1794 = vpop.f32.mrf.mxu0
      %v1795 = vadd.f32 0.0, %v1794
      %v1796 = vpop.f32.mrf.mxu0
      %1797 = vmatprep.mubr.f32.mxu0 0.0
      %1798 = vmatmul.mubr.f32.gmra.mxu0 %v1665
      %v1799 = vpop.f32.mrf.mxu0
      %v1800 = vadd.f32 0.0, %v1799
      %v1801 = vpop.f32.mrf.mxu0
      %1802 = vmatprep.mubr.f32.mxu0 0.0
      %1803 = vmatmul.mubr.f32.gmra.mxu0 %v1666
      %v1804 = vpop.f32.mrf.mxu0
      %v1805 = vadd.f32 0.0, %v1804
      %v1806 = vpop.f32.mrf.mxu0
      %1807 = vmatprep.mubr.f32.mxu0 0.0
      %1808 = vmatmul.mubr.f32.gmra.mxu0 %v1667
      %v1809 = vpop.f32.mrf.mxu0
      %v1810 = vadd.f32 0.0, %v1809
      %v1811 = vpop.f32.mrf.mxu0
      %1812 = vmatprep.mubr.f32.mxu0 0.0
      %1813 = vmatmul.mubr.f32.gmra.mxu0 %v1668
      %v1814 = vpop.f32.mrf.mxu0
      %v1815 = vadd.f32 0.0, %v1814
      %v1816 = vpop.f32.mrf.mxu0
      %1817 = vmatprep.mubr.f32.mxu0 0.0
      %1818 = vmatmul.mubr.f32.gmra.mxu0 %v1669
      %v1819 = vpop.f32.mrf.mxu0
      %v1820 = vadd.f32 0.0, %v1819
      %v1821 = vpop.f32.mrf.mxu0
      %1822 = vmatprep.mubr.f32.mxu0 0.0
      %1823 = vmatmul.mubr.f32.gmra.mxu0 %v1670
      %v1824 = vpop.f32.mrf.mxu0
      %v1825 = vadd.f32 0.0, %v1824
      %v1826 = vpop.f32.mrf.mxu0
      %1827 = vmatprep.mubr.f32.mxu0 0.0
      %1828 = vmatmul.mubr.f32.gmra.mxu0 %v1671
      %v1829 = vpop.f32.mrf.mxu0
      %v1830 = vadd.f32 0.0, %v1829
      %v1831 = vpop.f32.mrf.mxu0
      %1832 = vmatprep.mubr.f32.mxu0 0.0
      %1833 = vmatmul.mubr.f32.gmra.mxu0 %v1672
      %v1834 = vpop.f32.mrf.mxu0
      %v1835 = vadd.f32 0.0, %v1834
      %v1836 = vpop.f32.mrf.mxu0
      %1837 = vmatprep.mubr.f32.mxu0 0.0
      %1838 = vmatmul.mubr.f32.gmra.mxu0 %v1673
      %v1839 = vpop.f32.mrf.mxu0
      %v1840 = vadd.f32 0.0, %v1839
      %v1841 = vpop.f32.mrf.mxu0
      %1842 = vmatprep.mubr.f32.mxu0 0.0
      %1843 = vmatmul.mubr.f32.gmra.mxu0 %v1674
      %v1844 = vpop.f32.mrf.mxu0
      %v1845 = vadd.f32 0.0, %v1844
      %v1846 = vpop.f32.mrf.mxu0
      %1847 = vmatprep.mubr.f32.mxu0 0.0
      %1848 = vmatmul.mubr.f32.gmra.mxu0 %v1675
      %v1849 = vpop.f32.mrf.mxu0
      %v1850 = vadd.f32 0.0, %v1849
      %v1851 = vpop.f32.mrf.mxu0
      %1852 = vmatprep.mubr.f32.mxu0 0.0
      %1853 = vmatmul.mubr.f32.gmra.mxu0 %v1676
      %v1854 = vpop.f32.mrf.mxu0
      %v1855 = vadd.f32 0.0, %v1854
      %v1856 = vpop.f32.mrf.mxu0
      %1857 = vmatprep.mubr.f32.mxu0 0.0
      %1858 = vmatmul.mubr.f32.gmra.mxu0 %v1677
      %v1859 = vpop.f32.mrf.mxu0
      %v1860 = vadd.f32 0.0, %v1859
      %v1861 = vpop.f32.mrf.mxu0
      %1862 = vmatprep.mubr.f32.mxu0 0.0
      %1863 = vmatmul.mubr.f32.gmra.mxu0 %v1678
      %v1864 = vpop.f32.mrf.mxu0
      %v1865 = vadd.f32 0.0, %v1864
      %v1866 = vpop.f32.mrf.mxu0
      %1867 = vmatprep.mubr.f32.mxu0 0.0
      %1868 = vmatmul.mubr.f32.gmra.mxu0 %v1679
      %v1869 = vpop.f32.mrf.mxu0
      %v1870 = vadd.f32 0.0, %v1869
      %v1871 = vpop.f32.mrf.mxu0
      %1872 = vmatprep.mubr.f32.mxu0 0.0
      %1873 = vmatmul.mubr.f32.gmra.mxu0 %v1680
      %v1874 = vpop.f32.mrf.mxu0
      %v1875 = vadd.f32 0.0, %v1874
      %v1876 = vpop.f32.mrf.mxu0
      %1877 = vmatprep.mubr.f32.mxu0 0.0
      %1878 = vmatmul.mubr.f32.gmra.mxu0 %v1681
      %v1879 = vpop.f32.mrf.mxu0
      %v1880 = vadd.f32 0.0, %v1879
      %v1881 = vpop.f32.mrf.mxu0
      %1882 = vmatprep.mubr.f32.mxu0 0.0
      %1883 = vmatmul.mubr.f32.gmra.mxu0 %v1682
      %v1884 = vpop.f32.mrf.mxu0
      %v1885 = vadd.f32 0.0, %v1884
      %v1886 = vpop.f32.mrf.mxu0
      %1887 = vmatprep.mubr.f32.mxu0 0.0
      %1888 = vmatmul.mubr.f32.gmra.mxu0 %v1683
      %v1889 = vpop.f32.mrf.mxu0
      %v1890 = vadd.f32 0.0, %v1889
      %v1891 = vpop.f32.mrf.mxu0
      %1892 = vmatprep.mubr.f32.mxu0 0.0
      %1893 = vmatmul.mubr.f32.gmra.mxu0 %v1684
      %v1894 = vpop.f32.mrf.mxu0
      %v1895 = vadd.f32 0.0, %v1894
      %v1896 = vpop.f32.mrf.mxu0
      %1897 = vmatprep.mubr.f32.mxu0 0.0
      %1898 = vmatmul.mubr.f32.gmra.mxu0 %v1685
      %v1899 = vpop.f32.mrf.mxu0
      %v1900 = vadd.f32 0.0, %v1899
      %v1901 = vpop.f32.mrf.mxu0
      %1902 = vmatprep.mubr.f32.mxu0 0.0
      %1903 = vmatmul.mubr.f32.gmra.mxu0 %v1686
      %v1904 = vpop.f32.mrf.mxu0
      %v1905 = vadd.f32 0.0, %v1904
      %v1906 = vpop.f32.mrf.mxu0
      %1907 = vmatprep.mubr.f32.mxu0 0.0
      %1908 = vmatmul.mubr.f32.gmra.mxu0 %v1687
      %v1909 = vpop.f32.mrf.mxu0
      %v1910 = vadd.f32 0.0, %v1909
      %v1911 = vpop.f32.mrf.mxu0
      %1912 = vmatprep.mubr.f32.mxu0 0.0
      %1913 = vmatmul.mubr.f32.gmra.mxu0 %v1688
      %v1914 = vpop.f32.mrf.mxu0
      %v1915 = vadd.f32 0.0, %v1914
      %v1916 = vpop.f32.mrf.mxu0
      %1917 = vmatprep.mubr.f32.mxu0 0.0
      %1918 = vmatmul.mubr.f32.gmra.mxu0 %v1689
      %v1919 = vpop.f32.mrf.mxu0
      %v1920 = vadd.f32 0.0, %v1919
      %v1921 = vpop.f32.mrf.mxu0
      %1922 = vmatprep.mubr.f32.mxu0 0.0
      %1923 = vmatmul.mubr.f32.gmra.mxu0 %v1690
      %v1924 = vpop.f32.mrf.mxu0
      %v1925 = vadd.f32 0.0, %v1924
      %v1926 = vpop.f32.mrf.mxu0
      %1927 = vmatprep.mubr.f32.mxu0 0.0
      %1928 = vmatmul.mubr.f32.gmra.mxu0 %v1691
      %v1929 = vpop.f32.mrf.mxu0
      %v1930 = vadd.f32 0.0, %v1929
      %v1931 = vpop.f32.mrf.mxu0
      %1932 = vdwg.mxu0
      %v1933 = vadd.f32 %v1628, %v1775
      %v1934 = vadd.f32 %v1629, %v1780
      %v1935 = vadd.f32 %v1630, %v1785
      %v1936 = vadd.f32 %v1631, %v1790
      %v1937 = vadd.f32 %v1632, %v1795
      %v1938 = vadd.f32 %v1633, %v1800
      %v1939 = vadd.f32 %v1634, %v1805
      %v1940 = vadd.f32 %v1635, %v1810
      %v1941 = vadd.f32 %v1636, %v1815
      %v1942 = vadd.f32 %v1637, %v1820
      %v1943 = vadd.f32 %v1638, %v1825
      %v1944 = vadd.f32 %v1639, %v1830
      %v1945 = vadd.f32 %v1640, %v1835
      %v1946 = vadd.f32 %v1641, %v1840
      %v1947 = vadd.f32 %v1642, %v1845
      %v1948 = vadd.f32 %v1643, %v1850
      %v1949 = vadd.f32 %v1644, %v1855
      %v1950 = vadd.f32 %v1645, %v1860
      %v1951 = vadd.f32 %v1646, %v1865
      %v1952 = vadd.f32 %v1647, %v1870
      %v1953 = vadd.f32 %v1648, %v1875
      %v1954 = vadd.f32 %v1649, %v1880
      %v1955 = vadd.f32 %v1650, %v1885
      %v1956 = vadd.f32 %v1651, %v1890
      %v1957 = vadd.f32 %v1652, %v1895
      %v1958 = vadd.f32 %v1653, %v1900
      %v1959 = vadd.f32 %v1654, %v1905
      %v1960 = vadd.f32 %v1655, %v1910
      %v1961 = vadd.f32 %v1656, %v1915
      %v1962 = vadd.f32 %v1657, %v1920
      %v1963 = vadd.f32 %v1658, %v1925
      %v1964 = vadd.f32 %v1659, %v1930
      %s1965 = scalar_lea.vmem %s192, 48
      %v1966 = vld [vmem:[%s1965] sm:$0xff]
      %v1967 = vld [vmem:[%s1965 + $0x8] sm:$0xff]
      %v1968 = vld [vmem:[%s1965 + $0x18] sm:$0xff]
      %v1969 = vld [vmem:[%s1965 + $0x20] sm:$0xff]
      %v1970 = vld [vmem:[%s1965 + $0x30] sm:$0xff]
      %v1971 = vld [vmem:[%s1965 + $0x38] sm:$0xff]
      %v1972 = vld [vmem:[%s1965 + $0x48] sm:$0xff]
      %v1973 = vld [vmem:[%s1965 + $0x50] sm:$0xff]
      %v1974 = vld [vmem:[%s1965 + $0x60] sm:$0xff]
      %v1975 = vld [vmem:[%s1965 + $0x68] sm:$0xff]
      %v1976 = vld [vmem:[%s1965 + $0x78] sm:$0xff]
      %v1977 = vld [vmem:[%s1965 + $0x80] sm:$0xff]
      %v1978 = vld [vmem:[%s1965 + $0x90] sm:$0xff]
      %v1979 = vld [vmem:[%s1965 + $0x98] sm:$0xff]
      %v1980 = vld [vmem:[%s1965 + $0xa8] sm:$0xff]
      %v1981 = vld [vmem:[%s1965 + $0xb0] sm:$0xff]
      %v1982 = vld [vmem:[%s1965 + $0xc0] sm:$0xff]
      %v1983 = vld [vmem:[%s1965 + $0xc8] sm:$0xff]
      %v1984 = vld [vmem:[%s1965 + $0xd8] sm:$0xff]
      %v1985 = vld [vmem:[%s1965 + $0xe0] sm:$0xff]
      %v1986 = vld [vmem:[%s1965 + $0xf0] sm:$0xff]
      %v1987 = vld [vmem:[%s1965 + $0xf8] sm:$0xff]
      %v1988 = vld [vmem:[%s1965 + $0x108] sm:$0xff]
      %v1989 = vld [vmem:[%s1965 + $0x110] sm:$0xff]
      %v1990 = vld [vmem:[%s1965 + $0x120] sm:$0xff]
      %v1991 = vld [vmem:[%s1965 + $0x128] sm:$0xff]
      %v1992 = vld [vmem:[%s1965 + $0x138] sm:$0xff]
      %v1993 = vld [vmem:[%s1965 + $0x140] sm:$0xff]
      %v1994 = vld [vmem:[%s1965 + $0x150] sm:$0xff]
      %v1995 = vld [vmem:[%s1965 + $0x158] sm:$0xff]
      %v1996 = vld [vmem:[%s1965 + $0x168] sm:$0xff]
      %v1997 = vld [vmem:[%s1965 + $0x170] sm:$0xff]
      %v1998 = vld [vmem:[%s1 + $0x300] sm:$0xff]
      %v1999 = vld [vmem:[%s1 + $0x308] sm:$0xff]
      %v2000 = vld [vmem:[%s1 + $0x310] sm:$0xff]
      %v2001 = vld [vmem:[%s1 + $0x318] sm:$0xff]
      %v2002 = vld [vmem:[%s1 + $0x320] sm:$0xff]
      %v2003 = vld [vmem:[%s1 + $0x328] sm:$0xff]
      %v2004 = vld [vmem:[%s1 + $0x330] sm:$0xff]
      %v2005 = vld [vmem:[%s1 + $0x338] sm:$0xff]
      %v2006 = vld [vmem:[%s1 + $0x340] sm:$0xff]
      %v2007 = vld [vmem:[%s1 + $0x348] sm:$0xff]
      %v2008 = vld [vmem:[%s1 + $0x350] sm:$0xff]
      %v2009 = vld [vmem:[%s1 + $0x358] sm:$0xff]
      %v2010 = vld [vmem:[%s1 + $0x360] sm:$0xff]
      %v2011 = vld [vmem:[%s1 + $0x368] sm:$0xff]
      %v2012 = vld [vmem:[%s1 + $0x370] sm:$0xff]
      %v2013 = vld [vmem:[%s1 + $0x378] sm:$0xff]
      %2014 = vmatprep.subr.mxu0 0.0
      %2015 = vmatpush1.msra.mxu0 %v2013
      %2016 = vmatprep.subr.mxu0 0.0
      %2017 = vmatpush1.msra.mxu0 %v2012
      %2018 = vmatprep.subr.mxu0 0.0
      %2019 = vmatpush1.msra.mxu0 %v2011
      %2020 = vmatprep.subr.mxu0 0.0
      %2021 = vmatpush1.msra.mxu0 %v2010
      %2022 = vmatprep.subr.mxu0 0.0
      %2023 = vmatpush1.msra.mxu0 %v2009
      %2024 = vmatprep.subr.mxu0 0.0
      %2025 = vmatpush1.msra.mxu0 %v2008
      %2026 = vmatprep.subr.mxu0 0.0
      %2027 = vmatpush1.msra.mxu0 %v2007
      %2028 = vmatprep.subr.mxu0 0.0
      %2029 = vmatpush1.msra.mxu0 %v2006
      %2030 = vmatprep.subr.mxu0 0.0
      %2031 = vmatpush1.msra.mxu0 %v2005
      %2032 = vmatprep.subr.mxu0 0.0
      %2033 = vmatpush1.msra.mxu0 %v2004
      %2034 = vmatprep.subr.mxu0 0.0
      %2035 = vmatpush1.msra.mxu0 %v2003
      %2036 = vmatprep.subr.mxu0 0.0
      %2037 = vmatpush1.msra.mxu0 %v2002
      %2038 = vmatprep.subr.mxu0 0.0
      %2039 = vmatpush1.msra.mxu0 %v2001
      %2040 = vmatprep.subr.mxu0 0.0
      %2041 = vmatpush1.msra.mxu0 %v2000
      %2042 = vmatprep.subr.mxu0 0.0
      %2043 = vmatpush1.msra.mxu0 %v1999
      %2044 = vmatprep.subr.mxu0 0.0
      %2045 = vmatpush1.msra.mxu0 %v1998
      %2046 = vmatprep.subr.mxu0 0.0
      %2047 = vmatpush2.msra.mxu0 0.0
      %2048 = vmatprep.subr.mxu0 0.0
      %2049 = vmatpush2.msra.mxu0 0.0
      %2050 = vmatprep.subr.mxu0 0.0
      %2051 = vmatpush2.msra.mxu0 0.0
      %2052 = vmatprep.subr.mxu0 0.0
      %2053 = vmatpush2.msra.mxu0 0.0
      %2054 = vmatprep.subr.mxu0 0.0
      %2055 = vmatpush2.msra.mxu0 0.0
      %2056 = vmatprep.subr.mxu0 0.0
      %2057 = vmatpush2.msra.mxu0 0.0
      %2058 = vmatprep.subr.mxu0 0.0
      %2059 = vmatpush2.msra.mxu0 0.0
      %2060 = vmatprep.subr.mxu0 0.0
      %2061 = vmatpush2.msra.mxu0 0.0
      %2062 = vmatprep.subr.mxu0 0.0
      %2063 = vmatpush2.msra.mxu0 0.0
      %2064 = vmatprep.subr.mxu0 0.0
      %2065 = vmatpush2.msra.mxu0 0.0
      %2066 = vmatprep.subr.mxu0 0.0
      %2067 = vmatpush2.msra.mxu0 0.0
      %2068 = vmatprep.subr.mxu0 0.0
      %2069 = vmatpush2.msra.mxu0 0.0
      %2070 = vmatprep.subr.mxu0 0.0
      %2071 = vmatpush2.msra.mxu0 0.0
      %2072 = vmatprep.subr.mxu0 0.0
      %2073 = vmatpush2.msra.mxu0 0.0
      %2074 = vmatprep.subr.mxu0 0.0
      %2075 = vmatpush2.msra.mxu0 0.0
      %2076 = vmatprep.subr.mxu0 0.0
      %2077 = vmatpush2.msra.mxu0 0.0
      %2078 = vmatprep.mubr.f32.mxu0 0.0
      %2079 = vmatmul.mubr.f32.gmra.mxu0 %v1966
      %v2080 = vpop.f32.mrf.mxu0
      %v2081 = vadd.f32 0.0, %v2080
      %v2082 = vpop.f32.mrf.mxu0
      %2083 = vmatprep.mubr.f32.mxu0 0.0
      %2084 = vmatmul.mubr.f32.gmra.mxu0 %v1967
      %v2085 = vpop.f32.mrf.mxu0
      %v2086 = vadd.f32 0.0, %v2085
      %v2087 = vpop.f32.mrf.mxu0
      %2088 = vmatprep.mubr.f32.mxu0 0.0
      %2089 = vmatmul.mubr.f32.gmra.mxu0 %v1968
      %v2090 = vpop.f32.mrf.mxu0
      %v2091 = vadd.f32 0.0, %v2090
      %v2092 = vpop.f32.mrf.mxu0
      %2093 = vmatprep.mubr.f32.mxu0 0.0
      %2094 = vmatmul.mubr.f32.gmra.mxu0 %v1969
      %v2095 = vpop.f32.mrf.mxu0
      %v2096 = vadd.f32 0.0, %v2095
      %v2097 = vpop.f32.mrf.mxu0
      %2098 = vmatprep.mubr.f32.mxu0 0.0
      %2099 = vmatmul.mubr.f32.gmra.mxu0 %v1970
      %v2100 = vpop.f32.mrf.mxu0
      %v2101 = vadd.f32 0.0, %v2100
      %v2102 = vpop.f32.mrf.mxu0
      %2103 = vmatprep.mubr.f32.mxu0 0.0
      %2104 = vmatmul.mubr.f32.gmra.mxu0 %v1971
      %v2105 = vpop.f32.mrf.mxu0
      %v2106 = vadd.f32 0.0, %v2105
      %v2107 = vpop.f32.mrf.mxu0
      %2108 = vmatprep.mubr.f32.mxu0 0.0
      %2109 = vmatmul.mubr.f32.gmra.mxu0 %v1972
      %v2110 = vpop.f32.mrf.mxu0
      %v2111 = vadd.f32 0.0, %v2110
      %v2112 = vpop.f32.mrf.mxu0
      %2113 = vmatprep.mubr.f32.mxu0 0.0
      %2114 = vmatmul.mubr.f32.gmra.mxu0 %v1973
      %v2115 = vpop.f32.mrf.mxu0
      %v2116 = vadd.f32 0.0, %v2115
      %v2117 = vpop.f32.mrf.mxu0
      %2118 = vmatprep.mubr.f32.mxu0 0.0
      %2119 = vmatmul.mubr.f32.gmra.mxu0 %v1974
      %v2120 = vpop.f32.mrf.mxu0
      %v2121 = vadd.f32 0.0, %v2120
      %v2122 = vpop.f32.mrf.mxu0
      %2123 = vmatprep.mubr.f32.mxu0 0.0
      %2124 = vmatmul.mubr.f32.gmra.mxu0 %v1975
      %v2125 = vpop.f32.mrf.mxu0
      %v2126 = vadd.f32 0.0, %v2125
      %v2127 = vpop.f32.mrf.mxu0
      %2128 = vmatprep.mubr.f32.mxu0 0.0
      %2129 = vmatmul.mubr.f32.gmra.mxu0 %v1976
      %v2130 = vpop.f32.mrf.mxu0
      %v2131 = vadd.f32 0.0, %v2130
      %v2132 = vpop.f32.mrf.mxu0
      %2133 = vmatprep.mubr.f32.mxu0 0.0
      %2134 = vmatmul.mubr.f32.gmra.mxu0 %v1977
      %v2135 = vpop.f32.mrf.mxu0
      %v2136 = vadd.f32 0.0, %v2135
      %v2137 = vpop.f32.mrf.mxu0
      %2138 = vmatprep.mubr.f32.mxu0 0.0
      %2139 = vmatmul.mubr.f32.gmra.mxu0 %v1978
      %v2140 = vpop.f32.mrf.mxu0
      %v2141 = vadd.f32 0.0, %v2140
      %v2142 = vpop.f32.mrf.mxu0
      %2143 = vmatprep.mubr.f32.mxu0 0.0
      %2144 = vmatmul.mubr.f32.gmra.mxu0 %v1979
      %v2145 = vpop.f32.mrf.mxu0
      %v2146 = vadd.f32 0.0, %v2145
      %v2147 = vpop.f32.mrf.mxu0
      %2148 = vmatprep.mubr.f32.mxu0 0.0
      %2149 = vmatmul.mubr.f32.gmra.mxu0 %v1980
      %v2150 = vpop.f32.mrf.mxu0
      %v2151 = vadd.f32 0.0, %v2150
      %v2152 = vpop.f32.mrf.mxu0
      %2153 = vmatprep.mubr.f32.mxu0 0.0
      %2154 = vmatmul.mubr.f32.gmra.mxu0 %v1981
      %v2155 = vpop.f32.mrf.mxu0
      %v2156 = vadd.f32 0.0, %v2155
      %v2157 = vpop.f32.mrf.mxu0
      %2158 = vmatprep.mubr.f32.mxu0 0.0
      %2159 = vmatmul.mubr.f32.gmra.mxu0 %v1982
      %v2160 = vpop.f32.mrf.mxu0
      %v2161 = vadd.f32 0.0, %v2160
      %v2162 = vpop.f32.mrf.mxu0
      %2163 = vmatprep.mubr.f32.mxu0 0.0
      %2164 = vmatmul.mubr.f32.gmra.mxu0 %v1983
      %v2165 = vpop.f32.mrf.mxu0
      %v2166 = vadd.f32 0.0, %v2165
      %v2167 = vpop.f32.mrf.mxu0
      %2168 = vmatprep.mubr.f32.mxu0 0.0
      %2169 = vmatmul.mubr.f32.gmra.mxu0 %v1984
      %v2170 = vpop.f32.mrf.mxu0
      %v2171 = vadd.f32 0.0, %v2170
      %v2172 = vpop.f32.mrf.mxu0
      %2173 = vmatprep.mubr.f32.mxu0 0.0
      %2174 = vmatmul.mubr.f32.gmra.mxu0 %v1985
      %v2175 = vpop.f32.mrf.mxu0
      %v2176 = vadd.f32 0.0, %v2175
      %v2177 = vpop.f32.mrf.mxu0
      %2178 = vmatprep.mubr.f32.mxu0 0.0
      %2179 = vmatmul.mubr.f32.gmra.mxu0 %v1986
      %v2180 = vpop.f32.mrf.mxu0
      %v2181 = vadd.f32 0.0, %v2180
      %v2182 = vpop.f32.mrf.mxu0
      %2183 = vmatprep.mubr.f32.mxu0 0.0
      %2184 = vmatmul.mubr.f32.gmra.mxu0 %v1987
      %v2185 = vpop.f32.mrf.mxu0
      %v2186 = vadd.f32 0.0, %v2185
      %v2187 = vpop.f32.mrf.mxu0
      %2188 = vmatprep.mubr.f32.mxu0 0.0
      %2189 = vmatmul.mubr.f32.gmra.mxu0 %v1988
      %v2190 = vpop.f32.mrf.mxu0
      %v2191 = vadd.f32 0.0, %v2190
      %v2192 = vpop.f32.mrf.mxu0
      %2193 = vmatprep.mubr.f32.mxu0 0.0
      %2194 = vmatmul.mubr.f32.gmra.mxu0 %v1989
      %v2195 = vpop.f32.mrf.mxu0
      %v2196 = vadd.f32 0.0, %v2195
      %v2197 = vpop.f32.mrf.mxu0
      %2198 = vmatprep.mubr.f32.mxu0 0.0
      %2199 = vmatmul.mubr.f32.gmra.mxu0 %v1990
      %v2200 = vpop.f32.mrf.mxu0
      %v2201 = vadd.f32 0.0, %v2200
      %v2202 = vpop.f32.mrf.mxu0
      %2203 = vmatprep.mubr.f32.mxu0 0.0
      %2204 = vmatmul.mubr.f32.gmra.mxu0 %v1991
      %v2205 = vpop.f32.mrf.mxu0
      %v2206 = vadd.f32 0.0, %v2205
      %v2207 = vpop.f32.mrf.mxu0
      %2208 = vmatprep.mubr.f32.mxu0 0.0
      %2209 = vmatmul.mubr.f32.gmra.mxu0 %v1992
      %v2210 = vpop.f32.mrf.mxu0
      %v2211 = vadd.f32 0.0, %v2210
      %v2212 = vpop.f32.mrf.mxu0
      %2213 = vmatprep.mubr.f32.mxu0 0.0
      %2214 = vmatmul.mubr.f32.gmra.mxu0 %v1993
      %v2215 = vpop.f32.mrf.mxu0
      %v2216 = vadd.f32 0.0, %v2215
      %v2217 = vpop.f32.mrf.mxu0
      %2218 = vmatprep.mubr.f32.mxu0 0.0
      %2219 = vmatmul.mubr.f32.gmra.mxu0 %v1994
      %v2220 = vpop.f32.mrf.mxu0
      %v2221 = vadd.f32 0.0, %v2220
      %v2222 = vpop.f32.mrf.mxu0
      %2223 = vmatprep.mubr.f32.mxu0 0.0
      %2224 = vmatmul.mubr.f32.gmra.mxu0 %v1995
      %v2225 = vpop.f32.mrf.mxu0
      %v2226 = vadd.f32 0.0, %v2225
      %v2227 = vpop.f32.mrf.mxu0
      %2228 = vmatprep.mubr.f32.mxu0 0.0
      %2229 = vmatmul.mubr.f32.gmra.mxu0 %v1996
      %v2230 = vpop.f32.mrf.mxu0
      %v2231 = vadd.f32 0.0, %v2230
      %v2232 = vpop.f32.mrf.mxu0
      %2233 = vmatprep.mubr.f32.mxu0 0.0
      %2234 = vmatmul.mubr.f32.gmra.mxu0 %v1997
      %v2235 = vpop.f32.mrf.mxu0
      %v2236 = vadd.f32 0.0, %v2235
      %v2237 = vpop.f32.mrf.mxu0
      %2238 = vdwg.mxu0
      %v2239 = vadd.f32 %v1933, %v2081
      %v2240 = vadd.f32 %v1934, %v2086
      %v2241 = vadd.f32 %v1935, %v2091
      %v2242 = vadd.f32 %v1936, %v2096
      %v2243 = vadd.f32 %v1937, %v2101
      %v2244 = vadd.f32 %v1938, %v2106
      %v2245 = vadd.f32 %v1939, %v2111
      %v2246 = vadd.f32 %v1940, %v2116
      %v2247 = vadd.f32 %v1941, %v2121
      %v2248 = vadd.f32 %v1942, %v2126
      %v2249 = vadd.f32 %v1943, %v2131
      %v2250 = vadd.f32 %v1944, %v2136
      %v2251 = vadd.f32 %v1945, %v2141
      %v2252 = vadd.f32 %v1946, %v2146
      %v2253 = vadd.f32 %v1947, %v2151
      %v2254 = vadd.f32 %v1948, %v2156
      %v2255 = vadd.f32 %v1949, %v2161
      %v2256 = vadd.f32 %v1950, %v2166
      %v2257 = vadd.f32 %v1951, %v2171
      %v2258 = vadd.f32 %v1952, %v2176
      %v2259 = vadd.f32 %v1953, %v2181
      %v2260 = vadd.f32 %v1954, %v2186
      %v2261 = vadd.f32 %v1955, %v2191
      %v2262 = vadd.f32 %v1956, %v2196
      %v2263 = vadd.f32 %v1957, %v2201
      %v2264 = vadd.f32 %v1958, %v2206
      %v2265 = vadd.f32 %v1959, %v2211
      %v2266 = vadd.f32 %v1960, %v2216
      %v2267 = vadd.f32 %v1961, %v2221
      %v2268 = vadd.f32 %v1962, %v2226
      %v2269 = vadd.f32 %v1963, %v2231
      %v2270 = vadd.f32 %v1964, %v2236
      %v2271 = vld [vmem:[%s1965 + $0x1] sm:$0xff]
      %v2272 = vld [vmem:[%s1965 + $0x9] sm:$0xff]
      %v2273 = vld [vmem:[%s1965 + $0x19] sm:$0xff]
      %v2274 = vld [vmem:[%s1965 + $0x21] sm:$0xff]
      %v2275 = vld [vmem:[%s1965 + $0x31] sm:$0xff]
      %v2276 = vld [vmem:[%s1965 + $0x39] sm:$0xff]
      %v2277 = vld [vmem:[%s1965 + $0x49] sm:$0xff]
      %v2278 = vld [vmem:[%s1965 + $0x51] sm:$0xff]
      %v2279 = vld [vmem:[%s1965 + $0x61] sm:$0xff]
      %v2280 = vld [vmem:[%s1965 + $0x69] sm:$0xff]
      %v2281 = vld [vmem:[%s1965 + $0x79] sm:$0xff]
      %v2282 = vld [vmem:[%s1965 + $0x81] sm:$0xff]
      %v2283 = vld [vmem:[%s1965 + $0x91] sm:$0xff]
      %v2284 = vld [vmem:[%s1965 + $0x99] sm:$0xff]
      %v2285 = vld [vmem:[%s1965 + $0xa9] sm:$0xff]
      %v2286 = vld [vmem:[%s1965 + $0xb1] sm:$0xff]
      %v2287 = vld [vmem:[%s1965 + $0xc1] sm:$0xff]
      %v2288 = vld [vmem:[%s1965 + $0xc9] sm:$0xff]
      %v2289 = vld [vmem:[%s1965 + $0xd9] sm:$0xff]
      %v2290 = vld [vmem:[%s1965 + $0xe1] sm:$0xff]
      %v2291 = vld [vmem:[%s1965 + $0xf1] sm:$0xff]
      %v2292 = vld [vmem:[%s1965 + $0xf9] sm:$0xff]
      %v2293 = vld [vmem:[%s1965 + $0x109] sm:$0xff]
      %v2294 = vld [vmem:[%s1965 + $0x111] sm:$0xff]
      %v2295 = vld [vmem:[%s1965 + $0x121] sm:$0xff]
      %v2296 = vld [vmem:[%s1965 + $0x129] sm:$0xff]
      %v2297 = vld [vmem:[%s1965 + $0x139] sm:$0xff]
      %v2298 = vld [vmem:[%s1965 + $0x141] sm:$0xff]
      %v2299 = vld [vmem:[%s1965 + $0x151] sm:$0xff]
      %v2300 = vld [vmem:[%s1965 + $0x159] sm:$0xff]
      %v2301 = vld [vmem:[%s1965 + $0x169] sm:$0xff]
      %v2302 = vld [vmem:[%s1965 + $0x171] sm:$0xff]
      %v2303 = vld [vmem:[%s1 + $0x380] sm:$0xff]
      %v2304 = vld [vmem:[%s1 + $0x388] sm:$0xff]
      %v2305 = vld [vmem:[%s1 + $0x390] sm:$0xff]
      %v2306 = vld [vmem:[%s1 + $0x398] sm:$0xff]
      %v2307 = vld [vmem:[%s1 + $0x3a0] sm:$0xff]
      %v2308 = vld [vmem:[%s1 + $0x3a8] sm:$0xff]
      %v2309 = vld [vmem:[%s1 + $0x3b0] sm:$0xff]
      %v2310 = vld [vmem:[%s1 + $0x3b8] sm:$0xff]
      %v2311 = vld [vmem:[%s1 + $0x3c0] sm:$0xff]
      %v2312 = vld [vmem:[%s1 + $0x3c8] sm:$0xff]
      %v2313 = vld [vmem:[%s1 + $0x3d0] sm:$0xff]
      %v2314 = vld [vmem:[%s1 + $0x3d8] sm:$0xff]
      %v2315 = vld [vmem:[%s1 + $0x3e0] sm:$0xff]
      %v2316 = vld [vmem:[%s1 + $0x3e8] sm:$0xff]
      %v2317 = vld [vmem:[%s1 + $0x3f0] sm:$0xff]
      %v2318 = vld [vmem:[%s1 + $0x3f8] sm:$0xff]
      %2319 = vmatprep.subr.mxu0 0.0
      %2320 = vmatpush1.msra.mxu0 %v2318
      %2321 = vmatprep.subr.mxu0 0.0
      %2322 = vmatpush1.msra.mxu0 %v2317
      %2323 = vmatprep.subr.mxu0 0.0
      %2324 = vmatpush1.msra.mxu0 %v2316
      %2325 = vmatprep.subr.mxu0 0.0
      %2326 = vmatpush1.msra.mxu0 %v2315
      %2327 = vmatprep.subr.mxu0 0.0
      %2328 = vmatpush1.msra.mxu0 %v2314
      %2329 = vmatprep.subr.mxu0 0.0
      %2330 = vmatpush1.msra.mxu0 %v2313
      %2331 = vmatprep.subr.mxu0 0.0
      %2332 = vmatpush1.msra.mxu0 %v2312
      %2333 = vmatprep.subr.mxu0 0.0
      %2334 = vmatpush1.msra.mxu0 %v2311
      %2335 = vmatprep.subr.mxu0 0.0
      %2336 = vmatpush1.msra.mxu0 %v2310
      %2337 = vmatprep.subr.mxu0 0.0
      %2338 = vmatpush1.msra.mxu0 %v2309
      %2339 = vmatprep.subr.mxu0 0.0
      %2340 = vmatpush1.msra.mxu0 %v2308
      %2341 = vmatprep.subr.mxu0 0.0
      %2342 = vmatpush1.msra.mxu0 %v2307
      %2343 = vmatprep.subr.mxu0 0.0
      %2344 = vmatpush1.msra.mxu0 %v2306
      %2345 = vmatprep.subr.mxu0 0.0
      %2346 = vmatpush1.msra.mxu0 %v2305
      %2347 = vmatprep.subr.mxu0 0.0
      %2348 = vmatpush1.msra.mxu0 %v2304
      %2349 = vmatprep.subr.mxu0 0.0
      %2350 = vmatpush1.msra.mxu0 %v2303
      %2351 = vmatprep.subr.mxu0 0.0
      %2352 = vmatpush2.msra.mxu0 0.0
      %2353 = vmatprep.subr.mxu0 0.0
      %2354 = vmatpush2.msra.mxu0 0.0
      %2355 = vmatprep.subr.mxu0 0.0
      %2356 = vmatpush2.msra.mxu0 0.0
      %2357 = vmatprep.subr.mxu0 0.0
      %2358 = vmatpush2.msra.mxu0 0.0
      %2359 = vmatprep.subr.mxu0 0.0
      %2360 = vmatpush2.msra.mxu0 0.0
      %2361 = vmatprep.subr.mxu0 0.0
      %2362 = vmatpush2.msra.mxu0 0.0
      %2363 = vmatprep.subr.mxu0 0.0
      %2364 = vmatpush2.msra.mxu0 0.0
      %2365 = vmatprep.subr.mxu0 0.0
      %2366 = vmatpush2.msra.mxu0 0.0
      %2367 = vmatprep.subr.mxu0 0.0
      %2368 = vmatpush2.msra.mxu0 0.0
      %2369 = vmatprep.subr.mxu0 0.0
      %2370 = vmatpush2.msra.mxu0 0.0
      %2371 = vmatprep.subr.mxu0 0.0
      %2372 = vmatpush2.msra.mxu0 0.0
      %2373 = vmatprep.subr.mxu0 0.0
      %2374 = vmatpush2.msra.mxu0 0.0
      %2375 = vmatprep.subr.mxu0 0.0
      %2376 = vmatpush2.msra.mxu0 0.0
      %2377 = vmatprep.subr.mxu0 0.0
      %2378 = vmatpush2.msra.mxu0 0.0
      %2379 = vmatprep.subr.mxu0 0.0
      %2380 = vmatpush2.msra.mxu0 0.0
      %2381 = vmatprep.subr.mxu0 0.0
      %2382 = vmatpush2.msra.mxu0 0.0
      %2383 = vmatprep.mubr.f32.mxu0 0.0
      %2384 = vmatmul.mubr.f32.gmra.mxu0 %v2271
      %v2385 = vpop.f32.mrf.mxu0
      %v2386 = vadd.f32 0.0, %v2385
      %v2387 = vpop.f32.mrf.mxu0
      %2388 = vmatprep.mubr.f32.mxu0 0.0
      %2389 = vmatmul.mubr.f32.gmra.mxu0 %v2272
      %v2390 = vpop.f32.mrf.mxu0
      %v2391 = vadd.f32 0.0, %v2390
      %v2392 = vpop.f32.mrf.mxu0
      %2393 = vmatprep.mubr.f32.mxu0 0.0
      %2394 = vmatmul.mubr.f32.gmra.mxu0 %v2273
      %v2395 = vpop.f32.mrf.mxu0
      %v2396 = vadd.f32 0.0, %v2395
      %v2397 = vpop.f32.mrf.mxu0
      %2398 = vmatprep.mubr.f32.mxu0 0.0
      %2399 = vmatmul.mubr.f32.gmra.mxu0 %v2274
      %v2400 = vpop.f32.mrf.mxu0
      %v2401 = vadd.f32 0.0, %v2400
      %v2402 = vpop.f32.mrf.mxu0
      %2403 = vmatprep.mubr.f32.mxu0 0.0
      %2404 = vmatmul.mubr.f32.gmra.mxu0 %v2275
      %v2405 = vpop.f32.mrf.mxu0
      %v2406 = vadd.f32 0.0, %v2405
      %v2407 = vpop.f32.mrf.mxu0
      %2408 = vmatprep.mubr.f32.mxu0 0.0
      %2409 = vmatmul.mubr.f32.gmra.mxu0 %v2276
      %v2410 = vpop.f32.mrf.mxu0
      %v2411 = vadd.f32 0.0, %v2410
      %v2412 = vpop.f32.mrf.mxu0
      %2413 = vmatprep.mubr.f32.mxu0 0.0
      %2414 = vmatmul.mubr.f32.gmra.mxu0 %v2277
      %v2415 = vpop.f32.mrf.mxu0
      %v2416 = vadd.f32 0.0, %v2415
      %v2417 = vpop.f32.mrf.mxu0
      %2418 = vmatprep.mubr.f32.mxu0 0.0
      %2419 = vmatmul.mubr.f32.gmra.mxu0 %v2278
      %v2420 = vpop.f32.mrf.mxu0
      %v2421 = vadd.f32 0.0, %v2420
      %v2422 = vpop.f32.mrf.mxu0
      %2423 = vmatprep.mubr.f32.mxu0 0.0
      %2424 = vmatmul.mubr.f32.gmra.mxu0 %v2279
      %v2425 = vpop.f32.mrf.mxu0
      %v2426 = vadd.f32 0.0, %v2425
      %v2427 = vpop.f32.mrf.mxu0
      %2428 = vmatprep.mubr.f32.mxu0 0.0
      %2429 = vmatmul.mubr.f32.gmra.mxu0 %v2280
      %v2430 = vpop.f32.mrf.mxu0
      %v2431 = vadd.f32 0.0, %v2430
      %v2432 = vpop.f32.mrf.mxu0
      %2433 = vmatprep.mubr.f32.mxu0 0.0
      %2434 = vmatmul.mubr.f32.gmra.mxu0 %v2281
      %v2435 = vpop.f32.mrf.mxu0
      %v2436 = vadd.f32 0.0, %v2435
      %v2437 = vpop.f32.mrf.mxu0
      %2438 = vmatprep.mubr.f32.mxu0 0.0
      %2439 = vmatmul.mubr.f32.gmra.mxu0 %v2282
      %v2440 = vpop.f32.mrf.mxu0
      %v2441 = vadd.f32 0.0, %v2440
      %v2442 = vpop.f32.mrf.mxu0
      %2443 = vmatprep.mubr.f32.mxu0 0.0
      %2444 = vmatmul.mubr.f32.gmra.mxu0 %v2283
      %v2445 = vpop.f32.mrf.mxu0
      %v2446 = vadd.f32 0.0, %v2445
      %v2447 = vpop.f32.mrf.mxu0
      %2448 = vmatprep.mubr.f32.mxu0 0.0
      %2449 = vmatmul.mubr.f32.gmra.mxu0 %v2284
      %v2450 = vpop.f32.mrf.mxu0
      %v2451 = vadd.f32 0.0, %v2450
      %v2452 = vpop.f32.mrf.mxu0
      %2453 = vmatprep.mubr.f32.mxu0 0.0
      %2454 = vmatmul.mubr.f32.gmra.mxu0 %v2285
      %v2455 = vpop.f32.mrf.mxu0
      %v2456 = vadd.f32 0.0, %v2455
      %v2457 = vpop.f32.mrf.mxu0
      %2458 = vmatprep.mubr.f32.mxu0 0.0
      %2459 = vmatmul.mubr.f32.gmra.mxu0 %v2286
      %v2460 = vpop.f32.mrf.mxu0
      %v2461 = vadd.f32 0.0, %v2460
      %v2462 = vpop.f32.mrf.mxu0
      %2463 = vmatprep.mubr.f32.mxu0 0.0
      %2464 = vmatmul.mubr.f32.gmra.mxu0 %v2287
      %v2465 = vpop.f32.mrf.mxu0
      %v2466 = vadd.f32 0.0, %v2465
      %v2467 = vpop.f32.mrf.mxu0
      %2468 = vmatprep.mubr.f32.mxu0 0.0
      %2469 = vmatmul.mubr.f32.gmra.mxu0 %v2288
      %v2470 = vpop.f32.mrf.mxu0
      %v2471 = vadd.f32 0.0, %v2470
      %v2472 = vpop.f32.mrf.mxu0
      %2473 = vmatprep.mubr.f32.mxu0 0.0
      %2474 = vmatmul.mubr.f32.gmra.mxu0 %v2289
      %v2475 = vpop.f32.mrf.mxu0
      %v2476 = vadd.f32 0.0, %v2475
      %v2477 = vpop.f32.mrf.mxu0
      %2478 = vmatprep.mubr.f32.mxu0 0.0
      %2479 = vmatmul.mubr.f32.gmra.mxu0 %v2290
      %v2480 = vpop.f32.mrf.mxu0
      %v2481 = vadd.f32 0.0, %v2480
      %v2482 = vpop.f32.mrf.mxu0
      %2483 = vmatprep.mubr.f32.mxu0 0.0
      %2484 = vmatmul.mubr.f32.gmra.mxu0 %v2291
      %v2485 = vpop.f32.mrf.mxu0
      %v2486 = vadd.f32 0.0, %v2485
      %v2487 = vpop.f32.mrf.mxu0
      %2488 = vmatprep.mubr.f32.mxu0 0.0
      %2489 = vmatmul.mubr.f32.gmra.mxu0 %v2292
      %v2490 = vpop.f32.mrf.mxu0
      %v2491 = vadd.f32 0.0, %v2490
      %v2492 = vpop.f32.mrf.mxu0
      %2493 = vmatprep.mubr.f32.mxu0 0.0
      %2494 = vmatmul.mubr.f32.gmra.mxu0 %v2293
      %v2495 = vpop.f32.mrf.mxu0
      %v2496 = vadd.f32 0.0, %v2495
      %v2497 = vpop.f32.mrf.mxu0
      %2498 = vmatprep.mubr.f32.mxu0 0.0
      %2499 = vmatmul.mubr.f32.gmra.mxu0 %v2294
      %v2500 = vpop.f32.mrf.mxu0
      %v2501 = vadd.f32 0.0, %v2500
      %v2502 = vpop.f32.mrf.mxu0
      %2503 = vmatprep.mubr.f32.mxu0 0.0
      %2504 = vmatmul.mubr.f32.gmra.mxu0 %v2295
      %v2505 = vpop.f32.mrf.mxu0
      %v2506 = vadd.f32 0.0, %v2505
      %v2507 = vpop.f32.mrf.mxu0
      %2508 = vmatprep.mubr.f32.mxu0 0.0
      %2509 = vmatmul.mubr.f32.gmra.mxu0 %v2296
      %v2510 = vpop.f32.mrf.mxu0
      %v2511 = vadd.f32 0.0, %v2510
      %v2512 = vpop.f32.mrf.mxu0
      %2513 = vmatprep.mubr.f32.mxu0 0.0
      %2514 = vmatmul.mubr.f32.gmra.mxu0 %v2297
      %v2515 = vpop.f32.mrf.mxu0
      %v2516 = vadd.f32 0.0, %v2515
      %v2517 = vpop.f32.mrf.mxu0
      %2518 = vmatprep.mubr.f32.mxu0 0.0
      %2519 = vmatmul.mubr.f32.gmra.mxu0 %v2298
      %v2520 = vpop.f32.mrf.mxu0
      %v2521 = vadd.f32 0.0, %v2520
      %v2522 = vpop.f32.mrf.mxu0
      %2523 = vmatprep.mubr.f32.mxu0 0.0
      %2524 = vmatmul.mubr.f32.gmra.mxu0 %v2299
      %v2525 = vpop.f32.mrf.mxu0
      %v2526 = vadd.f32 0.0, %v2525
      %v2527 = vpop.f32.mrf.mxu0
      %2528 = vmatprep.mubr.f32.mxu0 0.0
      %2529 = vmatmul.mubr.f32.gmra.mxu0 %v2300
      %v2530 = vpop.f32.mrf.mxu0
      %v2531 = vadd.f32 0.0, %v2530
      %v2532 = vpop.f32.mrf.mxu0
      %2533 = vmatprep.mubr.f32.mxu0 0.0
      %2534 = vmatmul.mubr.f32.gmra.mxu0 %v2301
      %v2535 = vpop.f32.mrf.mxu0
      %v2536 = vadd.f32 0.0, %v2535
      %v2537 = vpop.f32.mrf.mxu0
      %2538 = vmatprep.mubr.f32.mxu0 0.0
      %2539 = vmatmul.mubr.f32.gmra.mxu0 %v2302
      %v2540 = vpop.f32.mrf.mxu0
      %v2541 = vadd.f32 0.0, %v2540
      %v2542 = vpop.f32.mrf.mxu0
      %2543 = vdwg.mxu0
      %v2544 = vadd.f32 %v2239, %v2386
      %v2545 = vadd.f32 %v2240, %v2391
      %v2546 = vadd.f32 %v2241, %v2396
      %v2547 = vadd.f32 %v2242, %v2401
      %v2548 = vadd.f32 %v2243, %v2406
      %v2549 = vadd.f32 %v2244, %v2411
      %v2550 = vadd.f32 %v2245, %v2416
      %v2551 = vadd.f32 %v2246, %v2421
      %v2552 = vadd.f32 %v2247, %v2426
      %v2553 = vadd.f32 %v2248, %v2431
      %v2554 = vadd.f32 %v2249, %v2436
      %v2555 = vadd.f32 %v2250, %v2441
      %v2556 = vadd.f32 %v2251, %v2446
      %v2557 = vadd.f32 %v2252, %v2451
      %v2558 = vadd.f32 %v2253, %v2456
      %v2559 = vadd.f32 %v2254, %v2461
      %v2560 = vadd.f32 %v2255, %v2466
      %v2561 = vadd.f32 %v2256, %v2471
      %v2562 = vadd.f32 %v2257, %v2476
      %v2563 = vadd.f32 %v2258, %v2481
      %v2564 = vadd.f32 %v2259, %v2486
      %v2565 = vadd.f32 %v2260, %v2491
      %v2566 = vadd.f32 %v2261, %v2496
      %v2567 = vadd.f32 %v2262, %v2501
      %v2568 = vadd.f32 %v2263, %v2506
      %v2569 = vadd.f32 %v2264, %v2511
      %v2570 = vadd.f32 %v2265, %v2516
      %v2571 = vadd.f32 %v2266, %v2521
      %v2572 = vadd.f32 %v2267, %v2526
      %v2573 = vadd.f32 %v2268, %v2531
      %v2574 = vadd.f32 %v2269, %v2536
      %v2575 = vadd.f32 %v2270, %v2541
      %v2576 = vld [vmem:[%s1965 + $0x2] sm:$0xff]
      %v2577 = vld [vmem:[%s1965 + $0xa] sm:$0xff]
      %v2578 = vld [vmem:[%s1965 + $0x1a] sm:$0xff]
      %v2579 = vld [vmem:[%s1965 + $0x22] sm:$0xff]
      %v2580 = vld [vmem:[%s1965 + $0x32] sm:$0xff]
      %v2581 = vld [vmem:[%s1965 + $0x3a] sm:$0xff]
      %v2582 = vld [vmem:[%s1965 + $0x4a] sm:$0xff]
      %v2583 = vld [vmem:[%s1965 + $0x52] sm:$0xff]
      %v2584 = vld [vmem:[%s1965 + $0x62] sm:$0xff]
      %v2585 = vld [vmem:[%s1965 + $0x6a] sm:$0xff]
      %v2586 = vld [vmem:[%s1965 + $0x7a] sm:$0xff]
      %v2587 = vld [vmem:[%s1965 + $0x82] sm:$0xff]
      %v2588 = vld [vmem:[%s1965 + $0x92] sm:$0xff]
      %v2589 = vld [vmem:[%s1965 + $0x9a] sm:$0xff]
      %v2590 = vld [vmem:[%s1965 + $0xaa] sm:$0xff]
      %v2591 = vld [vmem:[%s1965 + $0xb2] sm:$0xff]
      %v2592 = vld [vmem:[%s1965 + $0xc2] sm:$0xff]
      %v2593 = vld [vmem:[%s1965 + $0xca] sm:$0xff]
      %v2594 = vld [vmem:[%s1965 + $0xda] sm:$0xff]
      %v2595 = vld [vmem:[%s1965 + $0xe2] sm:$0xff]
      %v2596 = vld [vmem:[%s1965 + $0xf2] sm:$0xff]
      %v2597 = vld [vmem:[%s1965 + $0xfa] sm:$0xff]
      %v2598 = vld [vmem:[%s1965 + $0x10a] sm:$0xff]
      %v2599 = vld [vmem:[%s1965 + $0x112] sm:$0xff]
      %v2600 = vld [vmem:[%s1965 + $0x122] sm:$0xff]
      %v2601 = vld [vmem:[%s1965 + $0x12a] sm:$0xff]
      %v2602 = vld [vmem:[%s1965 + $0x13a] sm:$0xff]
      %v2603 = vld [vmem:[%s1965 + $0x142] sm:$0xff]
      %v2604 = vld [vmem:[%s1965 + $0x152] sm:$0xff]
      %v2605 = vld [vmem:[%s1965 + $0x15a] sm:$0xff]
      %v2606 = vld [vmem:[%s1965 + $0x16a] sm:$0xff]
      %v2607 = vld [vmem:[%s1965 + $0x172] sm:$0xff]
      %v2608 = vld [vmem:[%s1 + $0x400] sm:$0xff]
      %v2609 = vld [vmem:[%s1 + $0x408] sm:$0xff]
      %v2610 = vld [vmem:[%s1 + $0x410] sm:$0xff]
      %v2611 = vld [vmem:[%s1 + $0x418] sm:$0xff]
      %v2612 = vld [vmem:[%s1 + $0x420] sm:$0xff]
      %v2613 = vld [vmem:[%s1 + $0x428] sm:$0xff]
      %v2614 = vld [vmem:[%s1 + $0x430] sm:$0xff]
      %v2615 = vld [vmem:[%s1 + $0x438] sm:$0xff]
      %v2616 = vld [vmem:[%s1 + $0x440] sm:$0xff]
      %v2617 = vld [vmem:[%s1 + $0x448] sm:$0xff]
      %v2618 = vld [vmem:[%s1 + $0x450] sm:$0xff]
      %v2619 = vld [vmem:[%s1 + $0x458] sm:$0xff]
      %v2620 = vld [vmem:[%s1 + $0x460] sm:$0xff]
      %v2621 = vld [vmem:[%s1 + $0x468] sm:$0xff]
      %v2622 = vld [vmem:[%s1 + $0x470] sm:$0xff]
      %v2623 = vld [vmem:[%s1 + $0x478] sm:$0xff]
      %2624 = vmatprep.subr.mxu0 0.0
      %2625 = vmatpush1.msra.mxu0 %v2623
      %2626 = vmatprep.subr.mxu0 0.0
      %2627 = vmatpush1.msra.mxu0 %v2622
      %2628 = vmatprep.subr.mxu0 0.0
      %2629 = vmatpush1.msra.mxu0 %v2621
      %2630 = vmatprep.subr.mxu0 0.0
      %2631 = vmatpush1.msra.mxu0 %v2620
      %2632 = vmatprep.subr.mxu0 0.0
      %2633 = vmatpush1.msra.mxu0 %v2619
      %2634 = vmatprep.subr.mxu0 0.0
      %2635 = vmatpush1.msra.mxu0 %v2618
      %2636 = vmatprep.subr.mxu0 0.0
      %2637 = vmatpush1.msra.mxu0 %v2617
      %2638 = vmatprep.subr.mxu0 0.0
      %2639 = vmatpush1.msra.mxu0 %v2616
      %2640 = vmatprep.subr.mxu0 0.0
      %2641 = vmatpush1.msra.mxu0 %v2615
      %2642 = vmatprep.subr.mxu0 0.0
      %2643 = vmatpush1.msra.mxu0 %v2614
      %2644 = vmatprep.subr.mxu0 0.0
      %2645 = vmatpush1.msra.mxu0 %v2613
      %2646 = vmatprep.subr.mxu0 0.0
      %2647 = vmatpush1.msra.mxu0 %v2612
      %2648 = vmatprep.subr.mxu0 0.0
      %2649 = vmatpush1.msra.mxu0 %v2611
      %2650 = vmatprep.subr.mxu0 0.0
      %2651 = vmatpush1.msra.mxu0 %v2610
      %2652 = vmatprep.subr.mxu0 0.0
      %2653 = vmatpush1.msra.mxu0 %v2609
      %2654 = vmatprep.subr.mxu0 0.0
      %2655 = vmatpush1.msra.mxu0 %v2608
      %2656 = vmatprep.subr.mxu0 0.0
      %2657 = vmatpush2.msra.mxu0 0.0
      %2658 = vmatprep.subr.mxu0 0.0
      %2659 = vmatpush2.msra.mxu0 0.0
      %2660 = vmatprep.subr.mxu0 0.0
      %2661 = vmatpush2.msra.mxu0 0.0
      %2662 = vmatprep.subr.mxu0 0.0
      %2663 = vmatpush2.msra.mxu0 0.0
      %2664 = vmatprep.subr.mxu0 0.0
      %2665 = vmatpush2.msra.mxu0 0.0
      %2666 = vmatprep.subr.mxu0 0.0
      %2667 = vmatpush2.msra.mxu0 0.0
      %2668 = vmatprep.subr.mxu0 0.0
      %2669 = vmatpush2.msra.mxu0 0.0
      %2670 = vmatprep.subr.mxu0 0.0
      %2671 = vmatpush2.msra.mxu0 0.0
      %2672 = vmatprep.subr.mxu0 0.0
      %2673 = vmatpush2.msra.mxu0 0.0
      %2674 = vmatprep.subr.mxu0 0.0
      %2675 = vmatpush2.msra.mxu0 0.0
      %2676 = vmatprep.subr.mxu0 0.0
      %2677 = vmatpush2.msra.mxu0 0.0
      %2678 = vmatprep.subr.mxu0 0.0
      %2679 = vmatpush2.msra.mxu0 0.0
      %2680 = vmatprep.subr.mxu0 0.0
      %2681 = vmatpush2.msra.mxu0 0.0
      %2682 = vmatprep.subr.mxu0 0.0
      %2683 = vmatpush2.msra.mxu0 0.0
      %2684 = vmatprep.subr.mxu0 0.0
      %2685 = vmatpush2.msra.mxu0 0.0
      %2686 = vmatprep.subr.mxu0 0.0
      %2687 = vmatpush2.msra.mxu0 0.0
      %2688 = vmatprep.mubr.f32.mxu0 0.0
      %2689 = vmatmul.mubr.f32.gmra.mxu0 %v2576
      %v2690 = vpop.f32.mrf.mxu0
      %v2691 = vadd.f32 0.0, %v2690
      %v2692 = vpop.f32.mrf.mxu0
      %2693 = vmatprep.mubr.f32.mxu0 0.0
      %2694 = vmatmul.mubr.f32.gmra.mxu0 %v2577
      %v2695 = vpop.f32.mrf.mxu0
      %v2696 = vadd.f32 0.0, %v2695
      %v2697 = vpop.f32.mrf.mxu0
      %2698 = vmatprep.mubr.f32.mxu0 0.0
      %2699 = vmatmul.mubr.f32.gmra.mxu0 %v2578
      %v2700 = vpop.f32.mrf.mxu0
      %v2701 = vadd.f32 0.0, %v2700
      %v2702 = vpop.f32.mrf.mxu0
      %2703 = vmatprep.mubr.f32.mxu0 0.0
      %2704 = vmatmul.mubr.f32.gmra.mxu0 %v2579
      %v2705 = vpop.f32.mrf.mxu0
      %v2706 = vadd.f32 0.0, %v2705
      %v2707 = vpop.f32.mrf.mxu0
      %2708 = vmatprep.mubr.f32.mxu0 0.0
      %2709 = vmatmul.mubr.f32.gmra.mxu0 %v2580
      %v2710 = vpop.f32.mrf.mxu0
      %v2711 = vadd.f32 0.0, %v2710
      %v2712 = vpop.f32.mrf.mxu0
      %2713 = vmatprep.mubr.f32.mxu0 0.0
      %2714 = vmatmul.mubr.f32.gmra.mxu0 %v2581
      %v2715 = vpop.f32.mrf.mxu0
      %v2716 = vadd.f32 0.0, %v2715
      %v2717 = vpop.f32.mrf.mxu0
      %2718 = vmatprep.mubr.f32.mxu0 0.0
      %2719 = vmatmul.mubr.f32.gmra.mxu0 %v2582
      %v2720 = vpop.f32.mrf.mxu0
      %v2721 = vadd.f32 0.0, %v2720
      %v2722 = vpop.f32.mrf.mxu0
      %2723 = vmatprep.mubr.f32.mxu0 0.0
      %2724 = vmatmul.mubr.f32.gmra.mxu0 %v2583
      %v2725 = vpop.f32.mrf.mxu0
      %v2726 = vadd.f32 0.0, %v2725
      %v2727 = vpop.f32.mrf.mxu0
      %2728 = vmatprep.mubr.f32.mxu0 0.0
      %2729 = vmatmul.mubr.f32.gmra.mxu0 %v2584
      %v2730 = vpop.f32.mrf.mxu0
      %v2731 = vadd.f32 0.0, %v2730
      %v2732 = vpop.f32.mrf.mxu0
      %2733 = vmatprep.mubr.f32.mxu0 0.0
      %2734 = vmatmul.mubr.f32.gmra.mxu0 %v2585
      %v2735 = vpop.f32.mrf.mxu0
      %v2736 = vadd.f32 0.0, %v2735
      %v2737 = vpop.f32.mrf.mxu0
      %2738 = vmatprep.mubr.f32.mxu0 0.0
      %2739 = vmatmul.mubr.f32.gmra.mxu0 %v2586
      %v2740 = vpop.f32.mrf.mxu0
      %v2741 = vadd.f32 0.0, %v2740
      %v2742 = vpop.f32.mrf.mxu0
      %2743 = vmatprep.mubr.f32.mxu0 0.0
      %2744 = vmatmul.mubr.f32.gmra.mxu0 %v2587
      %v2745 = vpop.f32.mrf.mxu0
      %v2746 = vadd.f32 0.0, %v2745
      %v2747 = vpop.f32.mrf.mxu0
      %2748 = vmatprep.mubr.f32.mxu0 0.0
      %2749 = vmatmul.mubr.f32.gmra.mxu0 %v2588
      %v2750 = vpop.f32.mrf.mxu0
      %v2751 = vadd.f32 0.0, %v2750
      %v2752 = vpop.f32.mrf.mxu0
      %2753 = vmatprep.mubr.f32.mxu0 0.0
      %2754 = vmatmul.mubr.f32.gmra.mxu0 %v2589
      %v2755 = vpop.f32.mrf.mxu0
      %v2756 = vadd.f32 0.0, %v2755
      %v2757 = vpop.f32.mrf.mxu0
      %2758 = vmatprep.mubr.f32.mxu0 0.0
      %2759 = vmatmul.mubr.f32.gmra.mxu0 %v2590
      %v2760 = vpop.f32.mrf.mxu0
      %v2761 = vadd.f32 0.0, %v2760
      %v2762 = vpop.f32.mrf.mxu0
      %2763 = vmatprep.mubr.f32.mxu0 0.0
      %2764 = vmatmul.mubr.f32.gmra.mxu0 %v2591
      %v2765 = vpop.f32.mrf.mxu0
      %v2766 = vadd.f32 0.0, %v2765
      %v2767 = vpop.f32.mrf.mxu0
      %2768 = vmatprep.mubr.f32.mxu0 0.0
      %2769 = vmatmul.mubr.f32.gmra.mxu0 %v2592
      %v2770 = vpop.f32.mrf.mxu0
      %v2771 = vadd.f32 0.0, %v2770
      %v2772 = vpop.f32.mrf.mxu0
      %2773 = vmatprep.mubr.f32.mxu0 0.0
      %2774 = vmatmul.mubr.f32.gmra.mxu0 %v2593
      %v2775 = vpop.f32.mrf.mxu0
      %v2776 = vadd.f32 0.0, %v2775
      %v2777 = vpop.f32.mrf.mxu0
      %2778 = vmatprep.mubr.f32.mxu0 0.0
      %2779 = vmatmul.mubr.f32.gmra.mxu0 %v2594
      %v2780 = vpop.f32.mrf.mxu0
      %v2781 = vadd.f32 0.0, %v2780
      %v2782 = vpop.f32.mrf.mxu0
      %2783 = vmatprep.mubr.f32.mxu0 0.0
      %2784 = vmatmul.mubr.f32.gmra.mxu0 %v2595
      %v2785 = vpop.f32.mrf.mxu0
      %v2786 = vadd.f32 0.0, %v2785
      %v2787 = vpop.f32.mrf.mxu0
      %2788 = vmatprep.mubr.f32.mxu0 0.0
      %2789 = vmatmul.mubr.f32.gmra.mxu0 %v2596
      %v2790 = vpop.f32.mrf.mxu0
      %v2791 = vadd.f32 0.0, %v2790
      %v2792 = vpop.f32.mrf.mxu0
      %2793 = vmatprep.mubr.f32.mxu0 0.0
      %2794 = vmatmul.mubr.f32.gmra.mxu0 %v2597
      %v2795 = vpop.f32.mrf.mxu0
      %v2796 = vadd.f32 0.0, %v2795
      %v2797 = vpop.f32.mrf.mxu0
      %2798 = vmatprep.mubr.f32.mxu0 0.0
      %2799 = vmatmul.mubr.f32.gmra.mxu0 %v2598
      %v2800 = vpop.f32.mrf.mxu0
      %v2801 = vadd.f32 0.0, %v2800
      %v2802 = vpop.f32.mrf.mxu0
      %2803 = vmatprep.mubr.f32.mxu0 0.0
      %2804 = vmatmul.mubr.f32.gmra.mxu0 %v2599
      %v2805 = vpop.f32.mrf.mxu0
      %v2806 = vadd.f32 0.0, %v2805
      %v2807 = vpop.f32.mrf.mxu0
      %2808 = vmatprep.mubr.f32.mxu0 0.0
      %2809 = vmatmul.mubr.f32.gmra.mxu0 %v2600
      %v2810 = vpop.f32.mrf.mxu0
      %v2811 = vadd.f32 0.0, %v2810
      %v2812 = vpop.f32.mrf.mxu0
      %2813 = vmatprep.mubr.f32.mxu0 0.0
      %2814 = vmatmul.mubr.f32.gmra.mxu0 %v2601
      %v2815 = vpop.f32.mrf.mxu0
      %v2816 = vadd.f32 0.0, %v2815
      %v2817 = vpop.f32.mrf.mxu0
      %2818 = vmatprep.mubr.f32.mxu0 0.0
      %2819 = vmatmul.mubr.f32.gmra.mxu0 %v2602
      %v2820 = vpop.f32.mrf.mxu0
      %v2821 = vadd.f32 0.0, %v2820
      %v2822 = vpop.f32.mrf.mxu0
      %2823 = vmatprep.mubr.f32.mxu0 0.0
      %2824 = vmatmul.mubr.f32.gmra.mxu0 %v2603
      %v2825 = vpop.f32.mrf.mxu0
      %v2826 = vadd.f32 0.0, %v2825
      %v2827 = vpop.f32.mrf.mxu0
      %2828 = vmatprep.mubr.f32.mxu0 0.0
      %2829 = vmatmul.mubr.f32.gmra.mxu0 %v2604
      %v2830 = vpop.f32.mrf.mxu0
      %v2831 = vadd.f32 0.0, %v2830
      %v2832 = vpop.f32.mrf.mxu0
      %2833 = vmatprep.mubr.f32.mxu0 0.0
      %2834 = vmatmul.mubr.f32.gmra.mxu0 %v2605
      %v2835 = vpop.f32.mrf.mxu0
      %v2836 = vadd.f32 0.0, %v2835
      %v2837 = vpop.f32.mrf.mxu0
      %2838 = vmatprep.mubr.f32.mxu0 0.0
      %2839 = vmatmul.mubr.f32.gmra.mxu0 %v2606
      %v2840 = vpop.f32.mrf.mxu0
      %v2841 = vadd.f32 0.0, %v2840
      %v2842 = vpop.f32.mrf.mxu0
      %2843 = vmatprep.mubr.f32.mxu0 0.0
      %2844 = vmatmul.mubr.f32.gmra.mxu0 %v2607
      %v2845 = vpop.f32.mrf.mxu0
      %v2846 = vadd.f32 0.0, %v2845
      %v2847 = vpop.f32.mrf.mxu0
      %2848 = vdwg.mxu0
      %v2849 = vadd.f32 %v2544, %v2691
      %v2850 = vadd.f32 %v2545, %v2696
      %v2851 = vadd.f32 %v2546, %v2701
      %v2852 = vadd.f32 %v2547, %v2706
      %v2853 = vadd.f32 %v2548, %v2711
      %v2854 = vadd.f32 %v2549, %v2716
      %v2855 = vadd.f32 %v2550, %v2721
      %v2856 = vadd.f32 %v2551, %v2726
      %v2857 = vadd.f32 %v2552, %v2731
      %v2858 = vadd.f32 %v2553, %v2736
      %v2859 = vadd.f32 %v2554, %v2741
      %v2860 = vadd.f32 %v2555, %v2746
      %v2861 = vadd.f32 %v2556, %v2751
      %v2862 = vadd.f32 %v2557, %v2756
      %v2863 = vadd.f32 %v2558, %v2761
      %v2864 = vadd.f32 %v2559, %v2766
      %v2865 = vadd.f32 %v2560, %v2771
      %v2866 = vadd.f32 %v2561, %v2776
      %v2867 = vadd.f32 %v2562, %v2781
      %v2868 = vadd.f32 %v2563, %v2786
      %v2869 = vadd.f32 %v2564, %v2791
      %v2870 = vadd.f32 %v2565, %v2796
      %v2871 = vadd.f32 %v2566, %v2801
      %v2872 = vadd.f32 %v2567, %v2806
      %v2873 = vadd.f32 %v2568, %v2811
      %v2874 = vadd.f32 %v2569, %v2816
      %v2875 = vadd.f32 %v2570, %v2821
      %v2876 = vadd.f32 %v2571, %v2826
      %v2877 = vadd.f32 %v2572, %v2831
      %v2878 = vadd.f32 %v2573, %v2836
      %v2879 = vadd.f32 %v2574, %v2841
      %v2880 = vadd.f32 %v2575, %v2846
      %v2881 = vld [vmem:[%s2] sm:$0x1]
      %v2883 = vlaneseq
      %v2884 = vshrl.u32 %v2883, 7
      %v2885 = vsub.s32 0, %v2884
      %v2886 = vrot.slane %v2881, %v2885
      %v2888 = vadd.f32 %v2849, %v2886
      %v2889 = vadd.f32 %v2850, %v2886
      %v2890 = vadd.f32 %v2851, %v2886
      %v2891 = vadd.f32 %v2852, %v2886
      %v2892 = vadd.f32 %v2853, %v2886
      %v2893 = vadd.f32 %v2854, %v2886
      %v2894 = vadd.f32 %v2855, %v2886
      %v2895 = vadd.f32 %v2856, %v2886
      %v2896 = vadd.f32 %v2857, %v2886
      %v2897 = vadd.f32 %v2858, %v2886
      %v2898 = vadd.f32 %v2859, %v2886
      %v2899 = vadd.f32 %v2860, %v2886
      %v2900 = vadd.f32 %v2861, %v2886
      %v2901 = vadd.f32 %v2862, %v2886
      %v2902 = vadd.f32 %v2863, %v2886
      %v2903 = vadd.f32 %v2864, %v2886
      %v2904 = vadd.f32 %v2865, %v2886
      %v2905 = vadd.f32 %v2866, %v2886
      %v2906 = vadd.f32 %v2867, %v2886
      %v2907 = vadd.f32 %v2868, %v2886
      %v2908 = vadd.f32 %v2869, %v2886
      %v2909 = vadd.f32 %v2870, %v2886
      %v2910 = vadd.f32 %v2871, %v2886
      %v2911 = vadd.f32 %v2872, %v2886
      %v2912 = vadd.f32 %v2873, %v2886
      %v2913 = vadd.f32 %v2874, %v2886
      %v2914 = vadd.f32 %v2875, %v2886
      %v2915 = vadd.f32 %v2876, %v2886
      %v2916 = vadd.f32 %v2877, %v2886
      %v2917 = vadd.f32 %v2878, %v2886
      %v2918 = vadd.f32 %v2879, %v2886
      %v2919 = vadd.f32 %v2880, %v2886
      %vm2920 = vcmp.gt.f32.partialorder %v2888, 0.0
      %vm2921 = vcmp.gt.f32.partialorder %v2889, 0.0
      %vm2922 = vcmp.gt.f32.partialorder %v2890, 0.0
      %vm2923 = vcmp.gt.f32.partialorder %v2891, 0.0
      %vm2924 = vcmp.gt.f32.partialorder %v2892, 0.0
      %vm2925 = vcmp.gt.f32.partialorder %v2893, 0.0
      %vm2926 = vcmp.gt.f32.partialorder %v2894, 0.0
      %vm2927 = vcmp.gt.f32.partialorder %v2895, 0.0
      %vm2928 = vcmp.gt.f32.partialorder %v2896, 0.0
      %vm2929 = vcmp.gt.f32.partialorder %v2897, 0.0
      %vm2930 = vcmp.gt.f32.partialorder %v2898, 0.0
      %vm2931 = vcmp.gt.f32.partialorder %v2899, 0.0
      %vm2932 = vcmp.gt.f32.partialorder %v2900, 0.0
      %vm2933 = vcmp.gt.f32.partialorder %v2901, 0.0
      %vm2934 = vcmp.gt.f32.partialorder %v2902, 0.0
      %vm2935 = vcmp.gt.f32.partialorder %v2903, 0.0
      %vm2936 = vcmp.gt.f32.partialorder %v2904, 0.0
      %vm2937 = vcmp.gt.f32.partialorder %v2905, 0.0
      %vm2938 = vcmp.gt.f32.partialorder %v2906, 0.0
      %vm2939 = vcmp.gt.f32.partialorder %v2907, 0.0
      %vm2940 = vcmp.gt.f32.partialorder %v2908, 0.0
      %vm2941 = vcmp.gt.f32.partialorder %v2909, 0.0
      %vm2942 = vcmp.gt.f32.partialorder %v2910, 0.0
      %vm2943 = vcmp.gt.f32.partialorder %v2911, 0.0
      %vm2944 = vcmp.gt.f32.partialorder %v2912, 0.0
      %vm2945 = vcmp.gt.f32.partialorder %v2913, 0.0
      %vm2946 = vcmp.gt.f32.partialorder %v2914, 0.0
      %vm2947 = vcmp.gt.f32.partialorder %v2915, 0.0
      %vm2948 = vcmp.gt.f32.partialorder %v2916, 0.0
      %vm2949 = vcmp.gt.f32.partialorder %v2917, 0.0
      %vm2950 = vcmp.gt.f32.partialorder %v2918, 0.0
      %vm2951 = vcmp.gt.f32.partialorder %v2919, 0.0
      %v2952 = vld [vmem:[%s3] sm:$0x1]
      %v2954 = vlaneseq
      %v2955 = vshrl.u32 %v2954, 7
      %v2956 = vsub.s32 0, %v2955
      %v2957 = vrot.slane %v2952, %v2956
      %v2959 = vmul.f32 %v2957, %v2888
      %v2960 = vmul.f32 %v2957, %v2889
      %v2961 = vmul.f32 %v2957, %v2890
      %v2962 = vmul.f32 %v2957, %v2891
      %v2963 = vmul.f32 %v2957, %v2892
      %v2964 = vmul.f32 %v2957, %v2893
      %v2965 = vmul.f32 %v2957, %v2894
      %v2966 = vmul.f32 %v2957, %v2895
      %v2967 = vmul.f32 %v2957, %v2896
      %v2968 = vmul.f32 %v2957, %v2897
      %v2969 = vmul.f32 %v2957, %v2898
      %v2970 = vmul.f32 %v2957, %v2899
      %v2971 = vmul.f32 %v2957, %v2900
      %v2972 = vmul.f32 %v2957, %v2901
      %v2973 = vmul.f32 %v2957, %v2902
      %v2974 = vmul.f32 %v2957, %v2903
      %v2975 = vmul.f32 %v2957, %v2904
      %v2976 = vmul.f32 %v2957, %v2905
      %v2977 = vmul.f32 %v2957, %v2906
      %v2978 = vmul.f32 %v2957, %v2907
      %v2979 = vmul.f32 %v2957, %v2908
      %v2980 = vmul.f32 %v2957, %v2909
      %v2981 = vmul.f32 %v2957, %v2910
      %v2982 = vmul.f32 %v2957, %v2911
      %v2983 = vmul.f32 %v2957, %v2912
      %v2984 = vmul.f32 %v2957, %v2913
      %v2985 = vmul.f32 %v2957, %v2914
      %v2986 = vmul.f32 %v2957, %v2915
      %v2987 = vmul.f32 %v2957, %v2916
      %v2988 = vmul.f32 %v2957, %v2917
      %v2989 = vmul.f32 %v2957, %v2918
      %v2990 = vmul.f32 %v2957, %v2919
      %v2991 = vsel %vm2920, %v2888, %v2959
      %v2992 = vsel %vm2921, %v2889, %v2960
      %v2993 = vsel %vm2922, %v2890, %v2961
      %v2994 = vsel %vm2923, %v2891, %v2962
      %v2995 = vsel %vm2924, %v2892, %v2963
      %v2996 = vsel %vm2925, %v2893, %v2964
      %v2997 = vsel %vm2926, %v2894, %v2965
      %v2998 = vsel %vm2927, %v2895, %v2966
      %v2999 = vsel %vm2928, %v2896, %v2967
      %v3000 = vsel %vm2929, %v2897, %v2968
      %v3001 = vsel %vm2930, %v2898, %v2969
      %v3002 = vsel %vm2931, %v2899, %v2970
      %v3003 = vsel %vm2932, %v2900, %v2971
      %v3004 = vsel %vm2933, %v2901, %v2972
      %v3005 = vsel %vm2934, %v2902, %v2973
      %v3006 = vsel %vm2935, %v2903, %v2974
      %v3007 = vsel %vm2936, %v2904, %v2975
      %v3008 = vsel %vm2937, %v2905, %v2976
      %v3009 = vsel %vm2938, %v2906, %v2977
      %v3010 = vsel %vm2939, %v2907, %v2978
      %v3011 = vsel %vm2940, %v2908, %v2979
      %v3012 = vsel %vm2941, %v2909, %v2980
      %v3013 = vsel %vm2942, %v2910, %v2981
      %v3014 = vsel %vm2943, %v2911, %v2982
      %v3015 = vsel %vm2944, %v2912, %v2983
      %v3016 = vsel %vm2945, %v2913, %v2984
      %v3017 = vsel %vm2946, %v2914, %v2985
      %v3018 = vsel %vm2947, %v2915, %v2986
      %v3019 = vsel %vm2948, %v2916, %v2987
      %v3020 = vsel %vm2949, %v2917, %v2988
      %v3021 = vsel %vm2950, %v2918, %v2989
      %v3022 = vsel %vm2951, %v2919, %v2990
      %3023 = vst [vmem:[%s197] sm:$0xff] %v2991
      %3024 = vst [vmem:[%s197 + $0x8] sm:$0xff] %v2992
      %3025 = vst [vmem:[%s197 + $0x10] sm:$0xff] %v2993
      %3026 = vst [vmem:[%s197 + $0x18] sm:$0xff] %v2994
      %3027 = vst [vmem:[%s197 + $0x20] sm:$0xff] %v2995
      %3028 = vst [vmem:[%s197 + $0x28] sm:$0xff] %v2996
      %3029 = vst [vmem:[%s197 + $0x30] sm:$0xff] %v2997
      %3030 = vst [vmem:[%s197 + $0x38] sm:$0xff] %v2998
      %3031 = vst [vmem:[%s197 + $0x40] sm:$0xff] %v2999
      %3032 = vst [vmem:[%s197 + $0x48] sm:$0xff] %v3000
      %3033 = vst [vmem:[%s197 + $0x50] sm:$0xff] %v3001
      %3034 = vst [vmem:[%s197 + $0x58] sm:$0xff] %v3002
      %3035 = vst [vmem:[%s197 + $0x60] sm:$0xff] %v3003
      %3036 = vst [vmem:[%s197 + $0x68] sm:$0xff] %v3004
      %3037 = vst [vmem:[%s197 + $0x70] sm:$0xff] %v3005
      %3038 = vst [vmem:[%s197 + $0x78] sm:$0xff] %v3006
      %3039 = vst [vmem:[%s197 + $0x80] sm:$0xff] %v3007
      %3040 = vst [vmem:[%s197 + $0x88] sm:$0xff] %v3008
      %3041 = vst [vmem:[%s197 + $0x90] sm:$0xff] %v3009
      %3042 = vst [vmem:[%s197 + $0x98] sm:$0xff] %v3010
      %3043 = vst [vmem:[%s197 + $0xa0] sm:$0xff] %v3011
      %3044 = vst [vmem:[%s197 + $0xa8] sm:$0xff] %v3012
      %3045 = vst [vmem:[%s197 + $0xb0] sm:$0xff] %v3013
      %3046 = vst [vmem:[%s197 + $0xb8] sm:$0xff] %v3014
      %3047 = vst [vmem:[%s197 + $0xc0] sm:$0xff] %v3015
      %3048 = vst [vmem:[%s197 + $0xc8] sm:$0xff] %v3016
      %3049 = vst [vmem:[%s197 + $0xd0] sm:$0xff] %v3017
      %3050 = vst [vmem:[%s197 + $0xd8] sm:$0xff] %v3018
      %3051 = vst [vmem:[%s197 + $0xe0] sm:$0xff] %v3019
      %3052 = vst [vmem:[%s197 + $0xe8] sm:$0xff] %v3020
      %3053 = vst [vmem:[%s197 + $0xf0] sm:$0xff] %v3021
      %3054 = vst [vmem:[%s197 + $0xf8] sm:$0xff] %v3022
      %p3055 = scmp.lt.s32.totalorder %s15, 1
      %s3056 = scalar_select %p3055, %s15, 1
      %s3057 = smul.addr %s3056, 32
      %s3058 = smul.addr %s3057, 8
      %s3059 = scalar_lea.vmem %s4, %s3058
      // Predicated region
      $region37: #{bottleneck_ir_udp_forward.2} parent=35 // pred_check
        %p3060 = pneg %p122
      $region38: #{bottleneck_ir_udp_forward.2} parent=35 // pred_check_branch
        %3062 = sbr.rel (%p3060) target = $region40
      $region39: #{bottleneck_ir_udp_forward.2} parent=35 // pred_region
        _
      $region40: #{bottleneck_ir_udp_forward.2} parent=35 // pred_fallthru
        _
    $region36: #{bottleneck_ir_udp_forward.2} parent=5 // pred_fallthru
      _
    %p3063 = scmp.le.s32.totalorder 2, %s10
    // Predicated region
    $region41: #{bottleneck_ir_udp_forward.2} parent=5 // pred_check
      %p3064 = pneg %p3063
    $region42: #{bottleneck_ir_udp_forward.2} parent=5 // pred_check_branch
      %3066 = sbr.rel (%p3064) target = $region44
    $region43: #{bottleneck_ir_udp_forward.2} parent=5 // pred_region
      %s3067 = ssub.s32 %s10, 2
      // Predicated region
      $region45: #{bottleneck_ir_udp_forward.2} parent=43 // pred_check
        %p3068 = pneg %p128
      $region46: #{bottleneck_ir_udp_forward.2} parent=43 // pred_check_branch
        %3070 = sbr.rel (%p3068) target = $region48
      $region47: #{bottleneck_ir_udp_forward.2} parent=43 // pred_region
        %p3071 = scmp.lt.s32.totalorder %s16, 1
        %s3072 = scalar_select %p3071, %s16, 1
        %s3073 = smul.addr %s3072, 32
        %s3074 = smul.addr %s3073, 8
        %s3075 = scalar_lea.vmem %s4, %s3074
      $region48: #{bottleneck_ir_udp_forward.2} parent=43 // pred_fallthru
        _
    $region44: #{bottleneck_ir_udp_forward.2} parent=5 // pred_fallthru
      _
  $region6: #{bottleneck_ir_udp_forward.2} parent=0 // loop_footer
    %s14 = sadd.s32 1, %s10
  $region7: #{bottleneck_ir_udp_forward.2} parent=0 // loop_footer_branch
    %9 = sbr.rel target = $region3
  $region8: #{bottleneck_ir_udp_forward.2} parent=0 // loop_exit
    _

// kernel: bottleneck_ir_udp_forward.3
$region0: #{bottleneck_ir_udp_forward.3}
  #allocation0 [shape = 'u32[]', space=smem, size = 0x4, offset = 0x4, fixed_abs, tag = 'smem constant byte address 0x4 - core index']
  #allocation1 [shape = 'u32[144,128]{1,0:T(1,128)}', space=vmem, size = 0x12000, scoped, tag = 'internal scratch']
  %s0 = inlined_call_operand.vmem [shape: f32[2,36,9,128], index: 0, kind: input, shape index: {}]
  %s1 = inlined_call_operand.vmem [shape: f32[1152,128], index: 1, kind: input, shape index: {}]
  %s2 = inlined_call_operand.vmem [shape: f32[1,128], index: 2, kind: input, shape index: {}]
  %s3 = inlined_call_operand.vmem [shape: f32[2,64,128], index: 3, kind: input, shape index: {}]
  %s4 = inlined_call_operand.vmem [shape: f32[128,128], index: 4, kind: input, shape index: {}]
  %s5 = inlined_call_operand.vmem [shape: f32[2,64,128], index: 5, kind: output, shape index: {}]
  %s6 = sld [smem:[#allocation0]]
  $region53: #{bottleneck_ir_udp_forward.3} parent=0
    _
  %s8 = ssub.s32 1, %s6
  %s9 = scalar_select 0, %s8, %s6
  loop: start=0, step=1, limit=4
  $region2: #{bottleneck_ir_udp_forward.3} parent=0 // loop_pre_header
    _
  $region3: #{bottleneck_ir_udp_forward.3} parent=0 // loop_header
    %s11 = sphi 0, %s15
    %p12 = scmp.ge.s32.totalorder %s11, 4
    %s21 = sphi 0, %s23
    %s24 = sphi 0, %s21
    %s25 = sphi 0, %s24
    %s41 = sphi 0, %s25
    %s45 = sphi 0, %s45
    %s47 = sphi 0, %s45
    %s48 = sphi 0, %s47
    %s62 = sphi 0, %s48
    %s66 = sphi 0, %s66
    %s68 = sphi 0, %s66
    %s69 = sphi 0, %s68
    %s83 = sphi 0, %s69
    %s89 = sphi 0, %s91
    %s92 = sphi 0, %s89
    %s93 = sphi 0, %s92
    %s109 = sphi 0, %s93
    %s113 = sphi 0, %s113
    %s115 = sphi 0, %s113
    %s116 = sphi 0, %s115
    %s130 = sphi 0, %s116
    %s136 = sphi 0, %s138
    %s139 = sphi 0, %s136
    %s140 = sphi 0, %s139
    %s156 = sphi 0, %s140
  $region4: #{bottleneck_ir_udp_forward.3} parent=0 // loop_header_branch
    %14 = sbr.rel (%p12) target = $region8
  $region5: #{bottleneck_ir_udp_forward.3} parent=0 // loop_body
    %s16 = ssub.s32 %s11, 1
    %s17 = ssub.s32 %s11, 2
    %s18 = sadd.s32 %s11, 1
    %s19 = ssub.s32 %s11, %s18
    %p20 = scmp.eq.s32.totalorder %s19, 0
    %s22 = sadd.s32 %s21, 1
    %s23 = scalar_select %p20, %s21, %s22
    %p26 = pneg %p20
    %p27 = scmp.eq.s32.totalorder %s11, 1
    %p28 = por %p26, %p27
    %p29 = scmp.ne.s32.totalorder %s21, %s24
    %p30 = scmp.eq.s32.totalorder %s11, 0
    %p31 = por %p29, %p30
    %p32 = scmp.ne.s32.totalorder %s21, %s24
    %p33 = scmp.eq.s32.totalorder %s16, 1
    %p34 = por %p32, %p33
    %p35 = scmp.ne.s32.totalorder %s24, %s25
    %p36 = scmp.eq.s32.totalorder %s16, 0
    %p37 = por %p35, %p36
    %p38 = scmp.ne.s32.totalorder %s24, %s25
    %p39 = scmp.eq.s32.totalorder %s17, 1
    %p40 = por %p38, %p39
    %p42 = scmp.ne.s32.totalorder %s25, %s41
    %p43 = scmp.eq.s32.totalorder %s17, 0
    %p44 = por %p42, %p43
    %s46 = sadd.s32 %s45, 1
    %p49 = scmp.eq.s32.totalorder %s11, 1
    %p50 = scmp.ne.s32.totalorder %s45, %s47
    %p51 = scmp.eq.s32.totalorder %s11, 0
    %p52 = por %p50, %p51
    %p53 = scmp.ne.s32.totalorder %s45, %s47
    %p54 = scmp.eq.s32.totalorder %s16, 1
    %p55 = por %p53, %p54
    %p56 = scmp.ne.s32.totalorder %s47, %s48
    %p57 = scmp.eq.s32.totalorder %s16, 0
    %p58 = por %p56, %p57
    %p59 = scmp.ne.s32.totalorder %s47, %s48
    %p60 = scmp.eq.s32.totalorder %s17, 1
    %p61 = por %p59, %p60
    %p63 = scmp.ne.s32.totalorder %s48, %s62
    %p64 = scmp.eq.s32.totalorder %s17, 0
    %p65 = por %p63, %p64
    %s67 = sadd.s32 %s66, 1
    %p70 = scmp.eq.s32.totalorder %s11, 1
    %p71 = scmp.ne.s32.totalorder %s66, %s68
    %p72 = scmp.eq.s32.totalorder %s11, 0
    %p73 = por %p71, %p72
    %p74 = scmp.ne.s32.totalorder %s66, %s68
    %p75 = scmp.eq.s32.totalorder %s16, 1
    %p76 = por %p74, %p75
    %p77 = scmp.ne.s32.totalorder %s68, %s69
    %p78 = scmp.eq.s32.totalorder %s16, 0
    %p79 = por %p77, %p78
    %p80 = scmp.ne.s32.totalorder %s68, %s69
    %p81 = scmp.eq.s32.totalorder %s17, 1
    %p82 = por %p80, %p81
    %p84 = scmp.ne.s32.totalorder %s69, %s83
    %p85 = scmp.eq.s32.totalorder %s17, 0
    %p86 = por %p84, %p85
    %s87 = ssub.s32 %s11, %s18
    %p88 = scmp.eq.s32.totalorder %s87, 0
    %s90 = sadd.s32 %s89, 1
    %s91 = scalar_select %p88, %s89, %s90
    %p94 = pneg %p88
    %p95 = scmp.eq.s32.totalorder %s11, 1
    %p96 = por %p94, %p95
    %p97 = scmp.ne.s32.totalorder %s89, %s92
    %p98 = scmp.eq.s32.totalorder %s11, 0
    %p99 = por %p97, %p98
    %p100 = scmp.ne.s32.totalorder %s89, %s92
    %p101 = scmp.eq.s32.totalorder %s16, 1
    %p102 = por %p100, %p101
    %p103 = scmp.ne.s32.totalorder %s92, %s93
    %p104 = scmp.eq.s32.totalorder %s16, 0
    %p105 = por %p103, %p104
    %p106 = scmp.ne.s32.totalorder %s92, %s93
    %p107 = scmp.eq.s32.totalorder %s17, 1
    %p108 = por %p106, %p107
    %p110 = scmp.ne.s32.totalorder %s93, %s109
    %p111 = scmp.eq.s32.totalorder %s17, 0
    %p112 = por %p110, %p111
    %s114 = sadd.s32 %s113, 1
    %p117 = scmp.eq.s32.totalorder %s11, 1
    %p118 = scmp.ne.s32.totalorder %s113, %s115
    %p119 = scmp.eq.s32.totalorder %s11, 0
    %p120 = por %p118, %p119
    %p121 = scmp.ne.s32.totalorder %s113, %s115
    %p122 = scmp.eq.s32.totalorder %s16, 1
    %p123 = por %p121, %p122
    %p124 = scmp.ne.s32.totalorder %s115, %s116
    %p125 = scmp.eq.s32.totalorder %s16, 0
    %p126 = por %p124, %p125
    %p127 = scmp.ne.s32.totalorder %s115, %s116
    %p128 = scmp.eq.s32.totalorder %s17, 1
    %p129 = por %p127, %p128
    %p131 = scmp.ne.s32.totalorder %s116, %s130
    %p132 = scmp.eq.s32.totalorder %s17, 0
    %p133 = por %p131, %p132
    %s134 = ssub.s32 %s11, %s18
    %p135 = scmp.eq.s32.totalorder %s134, 0
    %s137 = sadd.s32 %s136, 1
    %s138 = scalar_select %p135, %s136, %s137
    %p141 = pneg %p135
    %p142 = scmp.eq.s32.totalorder %s11, 1
    %p143 = por %p141, %p142
    %p144 = scmp.ne.s32.totalorder %s136, %s139
    %p145 = scmp.eq.s32.totalorder %s11, 0
    %p146 = por %p144, %p145
    %p147 = scmp.ne.s32.totalorder %s136, %s139
    %p148 = scmp.eq.s32.totalorder %s16, 1
    %p149 = por %p147, %p148
    %p150 = scmp.ne.s32.totalorder %s139, %s140
    %p151 = scmp.eq.s32.totalorder %s16, 0
    %p152 = por %p150, %p151
    %p153 = scmp.ne.s32.totalorder %s139, %s140
    %p154 = scmp.eq.s32.totalorder %s17, 1
    %p155 = por %p153, %p154
    %p157 = scmp.ne.s32.totalorder %s140, %s156
    %p158 = scmp.eq.s32.totalorder %s17, 0
    %p159 = por %p157, %p158
    %p160 = scmp.le.s32.totalorder 1, %s11
    %p161 = scmp.lt.s32.totalorder %s11, 3
    %p162 = pnand %p160, %p161
    %p163 = pneg %p162
    // Predicated region
    $region9: #{bottleneck_ir_udp_forward.3} parent=5 // pred_check
      _
    $region10: #{bottleneck_ir_udp_forward.3} parent=5 // pred_check_branch
      %165 = sbr.rel (%p162) target = $region12
    $region11: #{bottleneck_ir_udp_forward.3} parent=5 // pred_region
      %s166 = ssub.s32 %s11, 1
      // Predicated region
      $region13: #{bottleneck_ir_udp_forward.3} parent=11 // pred_check
        %p167 = pneg %p58
      $region14: #{bottleneck_ir_udp_forward.3} parent=11 // pred_check_branch
        %169 = sbr.rel (%p167) target = $region16
      $region15: #{bottleneck_ir_udp_forward.3} parent=11 // pred_region
        _
      $region16: #{bottleneck_ir_udp_forward.3} parent=11 // pred_fallthru
        _
      // Predicated region
      $region17: #{bottleneck_ir_udp_forward.3} parent=11 // pred_check
        %p170 = pneg %p79
      $region18: #{bottleneck_ir_udp_forward.3} parent=11 // pred_check_branch
        %172 = sbr.rel (%p170) target = $region20
      $region19: #{bottleneck_ir_udp_forward.3} parent=11 // pred_region
        _
      $region20: #{bottleneck_ir_udp_forward.3} parent=11 // pred_fallthru
        _
      // Predicated region
      $region21: #{bottleneck_ir_udp_forward.3} parent=11 // pred_check
        %p173 = pneg %p126
      $region22: #{bottleneck_ir_udp_forward.3} parent=11 // pred_check_branch
        %175 = sbr.rel (%p173) target = $region24
      $region23: #{bottleneck_ir_udp_forward.3} parent=11 // pred_region
        _
      $region24: #{bottleneck_ir_udp_forward.3} parent=11 // pred_fallthru
        _
    $region12: #{bottleneck_ir_udp_forward.3} parent=5 // pred_fallthru
      _
    %p176 = scmp.lt.s32.totalorder %s11, 2
    // Predicated region
    $region25: #{bottleneck_ir_udp_forward.3} parent=5 // pred_check
      %p177 = pneg %p176
    $region26: #{bottleneck_ir_udp_forward.3} parent=5 // pred_check_branch
      %179 = sbr.rel (%p177) target = $region28
    $region27: #{bottleneck_ir_udp_forward.3} parent=5 // pred_region
      // Predicated region
      $region29: #{bottleneck_ir_udp_forward.3} parent=27 // pred_check
        %p180 = pneg %p31
      $region30: #{bottleneck_ir_udp_forward.3} parent=27 // pred_check_branch
        %182 = sbr.rel (%p180) target = $region32
      $region31: #{bottleneck_ir_udp_forward.3} parent=27 // pred_region
        %p183 = scmp.lt.s32.totalorder %s11, 1
        %s184 = scalar_select %p183, %s11, 1
        %s185 = smul.addr %s184, 72
        %s186 = smul.addr %s185, 8
        %s187 = scalar_lea.vmem %s0, %s186
      $region32: #{bottleneck_ir_udp_forward.3} parent=27 // pred_fallthru
        _
      // Predicated region
      $region33: #{bottleneck_ir_udp_forward.3} parent=27 // pred_check
        %p188 = pneg %p99
      $region34: #{bottleneck_ir_udp_forward.3} parent=27 // pred_check_branch
        %190 = sbr.rel (%p188) target = $region36
      $region35: #{bottleneck_ir_udp_forward.3} parent=27 // pred_region
        %p191 = scmp.lt.s32.totalorder %s11, 1
        %s192 = scalar_select %p191, %s11, 1
        %s193 = smul.addr %s192, 8
        %s194 = smul.addr %s193, 8
        %s195 = scalar_lea.vmem %s3, %s194
      $region36: #{bottleneck_ir_udp_forward.3} parent=27 // pred_fallthru
        _
    $region28: #{bottleneck_ir_udp_forward.3} parent=5 // pred_fallthru
      _
    %p196 = scmp.le.s32.totalorder 1, %s11
    %p197 = scmp.lt.s32.totalorder %s11, 3
    %p198 = pnand %p196, %p197
    %p199 = pneg %p198
    // Predicated region
    $region37: #{bottleneck_ir_udp_forward.3} parent=5 // pred_check
      _
    $region38: #{bottleneck_ir_udp_forward.3} parent=5 // pred_check_branch
      %201 = sbr.rel (%p198) target = $region40
    $region39: #{bottleneck_ir_udp_forward.3} parent=5 // pred_region
      %s202 = ssub.s32 %s11, 1
      %p203 = scmp.lt.s32.totalorder %s16, 1
      %s204 = scalar_select %p203, %s16, 1
      %s205 = smul.addr %s204, 72
      %s206 = smul.addr %s205, 8
      %s207 = scalar_lea.vmem %s0, %s206
      %p208 = pneg %p37
      %p209 = pneg %p34
      %p210 = pneg %p58
      %p211 = pneg %p55
      %p212 = pneg %p79
      %p213 = pneg %p76
      %p214 = scmp.lt.s32.totalorder %s16, 1
      %s215 = scalar_select %p214, %s16, 1
      %s216 = smul.addr %s215, 8
      %s217 = smul.addr %s216, 8
      %s218 = scalar_lea.vmem %s3, %s217
      %p219 = pneg %p105
      %p220 = pneg %p102
      %p221 = pneg %p126
      %p222 = pneg %p123
      %p223 = pneg %p152
      %p224 = pneg %p149
      %p225 = scmp.lt.s32.totalorder %s16, 1
      %s226 = scalar_select %p225, %s16, 1
      %s227 = smul.addr %s226, 8
      %s228 = smul.addr %s227, 8
      %s229 = scalar_lea.vmem %s5, %s228
      %p230 = scmp.lt.s32.totalorder %s16, 1
      %s231 = scalar_select %p230, %s16, 1
      %s232 = smul.addr %s231, 72
      %s233 = smul.addr %s232, 8
      %s234 = scalar_lea.vmem %s0, %s233
      %p235 = scmp.lt.s32.totalorder %s16, 1
      %s236 = scalar_select %p235, %s16, 1
      %s237 = smul.addr %s236, 8
      %s238 = smul.addr %s237, 8
      %s239 = scalar_lea.vmem %s3, %s238
      %p240 = scmp.lt.s32.totalorder %s16, 1
      %s241 = scalar_select %p240, %s16, 1
      %s242 = smul.addr %s241, 8
      %s243 = smul.addr %s242, 8
      %s244 = scalar_lea.vmem %s5, %s243
      %v245 = vld [vmem:[%s239] sm:$0xff]
      %v246 = vld [vmem:[%s239 + $0x8] sm:$0xff]
      %v247 = vld [vmem:[%s239 + $0x10] sm:$0xff]
      %v248 = vld [vmem:[%s239 + $0x18] sm:$0xff]
      %v249 = vld [vmem:[%s239 + $0x20] sm:$0xff]
      %v250 = vld [vmem:[%s239 + $0x28] sm:$0xff]
      %v251 = vld [vmem:[%s239 + $0x30] sm:$0xff]
      %v252 = vld [vmem:[%s239 + $0x38] sm:$0xff]
      %v253 = vld [vmem:[%s4] sm:$0xff]
      %v254 = vld [vmem:[%s4 + $0x8] sm:$0xff]
      %v255 = vld [vmem:[%s4 + $0x10] sm:$0xff]
      %v256 = vld [vmem:[%s4 + $0x18] sm:$0xff]
      %v257 = vld [vmem:[%s4 + $0x20] sm:$0xff]
      %v258 = vld [vmem:[%s4 + $0x28] sm:$0xff]
      %v259 = vld [vmem:[%s4 + $0x30] sm:$0xff]
      %v260 = vld [vmem:[%s4 + $0x38] sm:$0xff]
      %v261 = vld [vmem:[%s4 + $0x40] sm:$0xff]
      %v262 = vld [vmem:[%s4 + $0x48] sm:$0xff]
      %v263 = vld [vmem:[%s4 + $0x50] sm:$0xff]
      %v264 = vld [vmem:[%s4 + $0x58] sm:$0xff]
      %v265 = vld [vmem:[%s4 + $0x60] sm:$0xff]
      %v266 = vld [vmem:[%s4 + $0x68] sm:$0xff]
      %v267 = vld [vmem:[%s4 + $0x70] sm:$0xff]
      %v268 = vld [vmem:[%s4 + $0x78] sm:$0xff]
      %v269 = vld [vmem:[%s234] sm:$0xff]
      %v270 = vld [vmem:[%s234 + $0x10] sm:$0xff]
      %v271 = vld [vmem:[%s234 + $0x20] sm:$0xff]
      %v272 = vld [vmem:[%s234 + $0x30] sm:$0xff]
      %v273 = vld [vmem:[%s234 + $0x40] sm:$0xff]
      %v274 = vld [vmem:[%s234 + $0x50] sm:$0xff]
      %v275 = vld [vmem:[%s234 + $0x60] sm:$0xff]
      %v276 = vld [vmem:[%s234 + $0x70] sm:$0xff]
      %v277 = vld [vmem:[%s1] sm:$0xff]
      %v278 = vld [vmem:[%s1 + $0x8] sm:$0xff]
      %v279 = vld [vmem:[%s1 + $0x10] sm:$0xff]
      %v280 = vld [vmem:[%s1 + $0x18] sm:$0xff]
      %v281 = vld [vmem:[%s1 + $0x20] sm:$0xff]
      %v282 = vld [vmem:[%s1 + $0x28] sm:$0xff]
      %v283 = vld [vmem:[%s1 + $0x30] sm:$0xff]
      %v284 = vld [vmem:[%s1 + $0x38] sm:$0xff]
      %v285 = vld [vmem:[%s1 + $0x40] sm:$0xff]
      %v286 = vld [vmem:[%s1 + $0x48] sm:$0xff]
      %v287 = vld [vmem:[%s1 + $0x50] sm:$0xff]
      %v288 = vld [vmem:[%s1 + $0x58] sm:$0xff]
      %v289 = vld [vmem:[%s1 + $0x60] sm:$0xff]
      %v290 = vld [vmem:[%s1 + $0x68] sm:$0xff]
      %v291 = vld [vmem:[%s1 + $0x70] sm:$0xff]
      %v292 = vld [vmem:[%s1 + $0x78] sm:$0xff]
      %293 = vmatprep.subr.mxu0 0.0
      %294 = vmatpush1.msra.mxu0 %v292
      %295 = vmatprep.subr.mxu0 0.0
      %296 = vmatpush1.msra.mxu0 %v291
      %297 = vmatprep.subr.mxu0 0.0
      %298 = vmatpush1.msra.mxu0 %v290
      %299 = vmatprep.subr.mxu0 0.0
      %300 = vmatpush1.msra.mxu0 %v289
      %301 = vmatprep.subr.mxu0 0.0
      %302 = vmatpush1.msra.mxu0 %v288
      %303 = vmatprep.subr.mxu0 0.0
      %304 = vmatpush1.msra.mxu0 %v287
      %305 = vmatprep.subr.mxu0 0.0
      %306 = vmatpush1.msra.mxu0 %v286
      %307 = vmatprep.subr.mxu0 0.0
      %308 = vmatpush1.msra.mxu0 %v285
      %309 = vmatprep.subr.mxu0 0.0
      %310 = vmatpush1.msra.mxu0 %v284
      %311 = vmatprep.subr.mxu0 0.0
      %312 = vmatpush1.msra.mxu0 %v283
      %313 = vmatprep.subr.mxu0 0.0
      %314 = vmatpush1.msra.mxu0 %v282
      %315 = vmatprep.subr.mxu0 0.0
      %316 = vmatpush1.msra.mxu0 %v281
      %317 = vmatprep.subr.mxu0 0.0
      %318 = vmatpush1.msra.mxu0 %v280
      %319 = vmatprep.subr.mxu0 0.0
      %320 = vmatpush1.msra.mxu0 %v279
      %321 = vmatprep.subr.mxu0 0.0
      %322 = vmatpush1.msra.mxu0 %v278
      %323 = vmatprep.subr.mxu0 0.0
      %324 = vmatpush1.msra.mxu0 %v277
      %325 = vmatprep.subr.mxu0 0.0
      %326 = vmatpush2.msra.mxu0 0.0
      %327 = vmatprep.subr.mxu0 0.0
      %328 = vmatpush2.msra.mxu0 0.0
      %329 = vmatprep.subr.mxu0 0.0
      %330 = vmatpush2.msra.mxu0 0.0
      %331 = vmatprep.subr.mxu0 0.0
      %332 = vmatpush2.msra.mxu0 0.0
      %333 = vmatprep.subr.mxu0 0.0
      %334 = vmatpush2.msra.mxu0 0.0
      %335 = vmatprep.subr.mxu0 0.0
      %336 = vmatpush2.msra.mxu0 0.0
      %337 = vmatprep.subr.mxu0 0.0
      %338 = vmatpush2.msra.mxu0 0.0
      %339 = vmatprep.subr.mxu0 0.0
      %340 = vmatpush2.msra.mxu0 0.0
      %341 = vmatprep.subr.mxu0 0.0
      %342 = vmatpush2.msra.mxu0 0.0
      %343 = vmatprep.subr.mxu0 0.0
      %344 = vmatpush2.msra.mxu0 0.0
      %345 = vmatprep.subr.mxu0 0.0
      %346 = vmatpush2.msra.mxu0 0.0
      %347 = vmatprep.subr.mxu0 0.0
      %348 = vmatpush2.msra.mxu0 0.0
      %349 = vmatprep.subr.mxu0 0.0
      %350 = vmatpush2.msra.mxu0 0.0
      %351 = vmatprep.subr.mxu0 0.0
      %352 = vmatpush2.msra.mxu0 0.0
      %353 = vmatprep.subr.mxu0 0.0
      %354 = vmatpush2.msra.mxu0 0.0
      %355 = vmatprep.subr.mxu0 0.0
      %356 = vmatpush2.msra.mxu0 0.0
      %357 = vmatprep.mubr.f32.mxu0 0.0
      %358 = vmatmul.mubr.f32.gmra.mxu0 %v269
      %v359 = vpop.f32.mrf.mxu0
      %v360 = vadd.f32 0.0, %v359
      %v361 = vpop.f32.mrf.mxu0
      %362 = vmatprep.mubr.f32.mxu0 0.0
      %363 = vmatmul.mubr.f32.gmra.mxu0 %v270
      %v364 = vpop.f32.mrf.mxu0
      %v365 = vadd.f32 0.0, %v364
      %v366 = vpop.f32.mrf.mxu0
      %367 = vmatprep.mubr.f32.mxu0 0.0
      %368 = vmatmul.mubr.f32.gmra.mxu0 %v271
      %v369 = vpop.f32.mrf.mxu0
      %v370 = vadd.f32 0.0, %v369
      %v371 = vpop.f32.mrf.mxu0
      %372 = vmatprep.mubr.f32.mxu0 0.0
      %373 = vmatmul.mubr.f32.gmra.mxu0 %v272
      %v374 = vpop.f32.mrf.mxu0
      %v375 = vadd.f32 0.0, %v374
      %v376 = vpop.f32.mrf.mxu0
      %377 = vmatprep.mubr.f32.mxu0 0.0
      %378 = vmatmul.mubr.f32.gmra.mxu0 %v273
      %v379 = vpop.f32.mrf.mxu0
      %v380 = vadd.f32 0.0, %v379
      %v381 = vpop.f32.mrf.mxu0
      %382 = vmatprep.mubr.f32.mxu0 0.0
      %383 = vmatmul.mubr.f32.gmra.mxu0 %v274
      %v384 = vpop.f32.mrf.mxu0
      %v385 = vadd.f32 0.0, %v384
      %v386 = vpop.f32.mrf.mxu0
      %387 = vmatprep.mubr.f32.mxu0 0.0
      %388 = vmatmul.mubr.f32.gmra.mxu0 %v275
      %v389 = vpop.f32.mrf.mxu0
      %v390 = vadd.f32 0.0, %v389
      %v391 = vpop.f32.mrf.mxu0
      %392 = vmatprep.mubr.f32.mxu0 0.0
      %393 = vmatmul.mubr.f32.gmra.mxu0 %v276
      %v394 = vpop.f32.mrf.mxu0
      %v395 = vadd.f32 0.0, %v394
      %v396 = vpop.f32.mrf.mxu0
      %397 = vdwg.mxu0
      %398 = vmatprep.subr.mxu0 0.0
      %399 = vmatpush1.msra.mxu0 %v268
      %400 = vmatprep.subr.mxu0 0.0
      %401 = vmatpush1.msra.mxu0 %v267
      %402 = vmatprep.subr.mxu0 0.0
      %403 = vmatpush1.msra.mxu0 %v266
      %404 = vmatprep.subr.mxu0 0.0
      %405 = vmatpush1.msra.mxu0 %v265
      %406 = vmatprep.subr.mxu0 0.0
      %407 = vmatpush1.msra.mxu0 %v264
      %408 = vmatprep.subr.mxu0 0.0
      %409 = vmatpush1.msra.mxu0 %v263
      %410 = vmatprep.subr.mxu0 0.0
      %411 = vmatpush1.msra.mxu0 %v262
      %412 = vmatprep.subr.mxu0 0.0
      %413 = vmatpush1.msra.mxu0 %v261
      %414 = vmatprep.subr.mxu0 0.0
      %415 = vmatpush1.msra.mxu0 %v260
      %416 = vmatprep.subr.mxu0 0.0
      %417 = vmatpush1.msra.mxu0 %v259
      %418 = vmatprep.subr.mxu0 0.0
      %419 = vmatpush1.msra.mxu0 %v258
      %420 = vmatprep.subr.mxu0 0.0
      %421 = vmatpush1.msra.mxu0 %v257
      %422 = vmatprep.subr.mxu0 0.0
      %423 = vmatpush1.msra.mxu0 %v256
      %424 = vmatprep.subr.mxu0 0.0
      %425 = vmatpush1.msra.mxu0 %v255
      %426 = vmatprep.subr.mxu0 0.0
      %427 = vmatpush1.msra.mxu0 %v254
      %428 = vmatprep.subr.mxu0 0.0
      %429 = vmatpush1.msra.mxu0 %v253
      %430 = vmatprep.subr.mxu0 0.0
      %431 = vmatpush2.msra.mxu0 0.0
      %432 = vmatprep.subr.mxu0 0.0
      %433 = vmatpush2.msra.mxu0 0.0
      %434 = vmatprep.subr.mxu0 0.0
      %435 = vmatpush2.msra.mxu0 0.0
      %436 = vmatprep.subr.mxu0 0.0
      %437 = vmatpush2.msra.mxu0 0.0
      %438 = vmatprep.subr.mxu0 0.0
      %439 = vmatpush2.msra.mxu0 0.0
      %440 = vmatprep.subr.mxu0 0.0
      %441 = vmatpush2.msra.mxu0 0.0
      %442 = vmatprep.subr.mxu0 0.0
      %443 = vmatpush2.msra.mxu0 0.0
      %444 = vmatprep.subr.mxu0 0.0
      %445 = vmatpush2.msra.mxu0 0.0
      %446 = vmatprep.subr.mxu0 0.0
      %447 = vmatpush2.msra.mxu0 0.0
      %448 = vmatprep.subr.mxu0 0.0
      %449 = vmatpush2.msra.mxu0 0.0
      %450 = vmatprep.subr.mxu0 0.0
      %451 = vmatpush2.msra.mxu0 0.0
      %452 = vmatprep.subr.mxu0 0.0
      %453 = vmatpush2.msra.mxu0 0.0
      %454 = vmatprep.subr.mxu0 0.0
      %455 = vmatpush2.msra.mxu0 0.0
      %456 = vmatprep.subr.mxu0 0.0
      %457 = vmatpush2.msra.mxu0 0.0
      %458 = vmatprep.subr.mxu0 0.0
      %459 = vmatpush2.msra.mxu0 0.0
      %460 = vmatprep.subr.mxu0 0.0
      %461 = vmatpush2.msra.mxu0 0.0
      %462 = vmatprep.mubr.f32.mxu0 0.0
      %463 = vmatmul.mubr.f32.gmra.mxu0 %v245
      %v464 = vpop.f32.mrf.mxu0
      %v465 = vadd.f32 %v360, %v464
      %v466 = vpop.f32.mrf.mxu0
      %467 = vmatprep.mubr.f32.mxu0 0.0
      %468 = vmatmul.mubr.f32.gmra.mxu0 %v246
      %v469 = vpop.f32.mrf.mxu0
      %v470 = vadd.f32 %v365, %v469
      %v471 = vpop.f32.mrf.mxu0
      %472 = vmatprep.mubr.f32.mxu0 0.0
      %473 = vmatmul.mubr.f32.gmra.mxu0 %v247
      %v474 = vpop.f32.mrf.mxu0
      %v475 = vadd.f32 %v370, %v474
      %v476 = vpop.f32.mrf.mxu0
      %477 = vmatprep.mubr.f32.mxu0 0.0
      %478 = vmatmul.mubr.f32.gmra.mxu0 %v248
      %v479 = vpop.f32.mrf.mxu0
      %v480 = vadd.f32 %v375, %v479
      %v481 = vpop.f32.mrf.mxu0
      %482 = vmatprep.mubr.f32.mxu0 0.0
      %483 = vmatmul.mubr.f32.gmra.mxu0 %v249
      %v484 = vpop.f32.mrf.mxu0
      %v485 = vadd.f32 %v380, %v484
      %v486 = vpop.f32.mrf.mxu0
      %487 = vmatprep.mubr.f32.mxu0 0.0
      %488 = vmatmul.mubr.f32.gmra.mxu0 %v250
      %v489 = vpop.f32.mrf.mxu0
      %v490 = vadd.f32 %v385, %v489
      %v491 = vpop.f32.mrf.mxu0
      %492 = vmatprep.mubr.f32.mxu0 0.0
      %493 = vmatmul.mubr.f32.gmra.mxu0 %v251
      %v494 = vpop.f32.mrf.mxu0
      %v495 = vadd.f32 %v390, %v494
      %v496 = vpop.f32.mrf.mxu0
      %497 = vmatprep.mubr.f32.mxu0 0.0
      %498 = vmatmul.mubr.f32.gmra.mxu0 %v252
      %v499 = vpop.f32.mrf.mxu0
      %v500 = vadd.f32 %v395, %v499
      %v501 = vpop.f32.mrf.mxu0
      %502 = vdwg.mxu0
      %s503 = scalar_lea.vmem %s234, 144
      %v504 = vld [vmem:[%s503] sm:$0xff]
      %v505 = vld [vmem:[%s503 + $0x10] sm:$0xff]
      %v506 = vld [vmem:[%s503 + $0x20] sm:$0xff]
      %v507 = vld [vmem:[%s503 + $0x30] sm:$0xff]
      %v508 = vld [vmem:[%s503 + $0x40] sm:$0xff]
      %v509 = vld [vmem:[%s503 + $0x50] sm:$0xff]
      %v510 = vld [vmem:[%s503 + $0x60] sm:$0xff]
      %v511 = vld [vmem:[%s503 + $0x70] sm:$0xff]
      %v512 = vld [vmem:[%s1 + $0x80] sm:$0xff]
      %v513 = vld [vmem:[%s1 + $0x88] sm:$0xff]
      %v514 = vld [vmem:[%s1 + $0x90] sm:$0xff]
      %v515 = vld [vmem:[%s1 + $0x98] sm:$0xff]
      %v516 = vld [vmem:[%s1 + $0xa0] sm:$0xff]
      %v517 = vld [vmem:[%s1 + $0xa8] sm:$0xff]
      %v518 = vld [vmem:[%s1 + $0xb0] sm:$0xff]
      %v519 = vld [vmem:[%s1 + $0xb8] sm:$0xff]
      %v520 = vld [vmem:[%s1 + $0xc0] sm:$0xff]
      %v521 = vld [vmem:[%s1 + $0xc8] sm:$0xff]
      %v522 = vld [vmem:[%s1 + $0xd0] sm:$0xff]
      %v523 = vld [vmem:[%s1 + $0xd8] sm:$0xff]
      %v524 = vld [vmem:[%s1 + $0xe0] sm:$0xff]
      %v525 = vld [vmem:[%s1 + $0xe8] sm:$0xff]
      %v526 = vld [vmem:[%s1 + $0xf0] sm:$0xff]
      %v527 = vld [vmem:[%s1 + $0xf8] sm:$0xff]
      %528 = vmatprep.subr.mxu0 0.0
      %529 = vmatpush1.msra.mxu0 %v527
      %530 = vmatprep.subr.mxu0 0.0
      %531 = vmatpush1.msra.mxu0 %v526
      %532 = vmatprep.subr.mxu0 0.0
      %533 = vmatpush1.msra.mxu0 %v525
      %534 = vmatprep.subr.mxu0 0.0
      %535 = vmatpush1.msra.mxu0 %v524
      %536 = vmatprep.subr.mxu0 0.0
      %537 = vmatpush1.msra.mxu0 %v523
      %538 = vmatprep.subr.mxu0 0.0
      %539 = vmatpush1.msra.mxu0 %v522
      %540 = vmatprep.subr.mxu0 0.0
      %541 = vmatpush1.msra.mxu0 %v521
      %542 = vmatprep.subr.mxu0 0.0
      %543 = vmatpush1.msra.mxu0 %v520
      %544 = vmatprep.subr.mxu0 0.0
      %545 = vmatpush1.msra.mxu0 %v519
      %546 = vmatprep.subr.mxu0 0.0
      %547 = vmatpush1.msra.mxu0 %v518
      %548 = vmatprep.subr.mxu0 0.0
      %549 = vmatpush1.msra.mxu0 %v517
      %550 = vmatprep.subr.mxu0 0.0
      %551 = vmatpush1.msra.mxu0 %v516
      %552 = vmatprep.subr.mxu0 0.0
      %553 = vmatpush1.msra.mxu0 %v515
      %554 = vmatprep.subr.mxu0 0.0
      %555 = vmatpush1.msra.mxu0 %v514
      %556 = vmatprep.subr.mxu0 0.0
      %557 = vmatpush1.msra.mxu0 %v513
      %558 = vmatprep.subr.mxu0 0.0
      %559 = vmatpush1.msra.mxu0 %v512
      %560 = vmatprep.subr.mxu0 0.0
      %561 = vmatpush2.msra.mxu0 0.0
      %562 = vmatprep.subr.mxu0 0.0
      %563 = vmatpush2.msra.mxu0 0.0
      %564 = vmatprep.subr.mxu0 0.0
      %565 = vmatpush2.msra.mxu0 0.0
      %566 = vmatprep.subr.mxu0 0.0
      %567 = vmatpush2.msra.mxu0 0.0
      %568 = vmatprep.subr.mxu0 0.0
      %569 = vmatpush2.msra.mxu0 0.0
      %570 = vmatprep.subr.mxu0 0.0
      %571 = vmatpush2.msra.mxu0 0.0
      %572 = vmatprep.subr.mxu0 0.0
      %573 = vmatpush2.msra.mxu0 0.0
      %574 = vmatprep.subr.mxu0 0.0
      %575 = vmatpush2.msra.mxu0 0.0
      %576 = vmatprep.subr.mxu0 0.0
      %577 = vmatpush2.msra.mxu0 0.0
      %578 = vmatprep.subr.mxu0 0.0
      %579 = vmatpush2.msra.mxu0 0.0
      %580 = vmatprep.subr.mxu0 0.0
      %581 = vmatpush2.msra.mxu0 0.0
      %582 = vmatprep.subr.mxu0 0.0
      %583 = vmatpush2.msra.mxu0 0.0
      %584 = vmatprep.subr.mxu0 0.0
      %585 = vmatpush2.msra.mxu0 0.0
      %586 = vmatprep.subr.mxu0 0.0
      %587 = vmatpush2.msra.mxu0 0.0
      %588 = vmatprep.subr.mxu0 0.0
      %589 = vmatpush2.msra.mxu0 0.0
      %590 = vmatprep.subr.mxu0 0.0
      %591 = vmatpush2.msra.mxu0 0.0
      %592 = vmatprep.mubr.f32.mxu0 0.0
      %593 = vmatmul.mubr.f32.gmra.mxu0 %v504
      %v594 = vpop.f32.mrf.mxu0
      %v595 = vadd.f32 0.0, %v594
      %v596 = vpop.f32.mrf.mxu0
      %597 = vmatprep.mubr.f32.mxu0 0.0
      %598 = vmatmul.mubr.f32.gmra.mxu0 %v505
      %v599 = vpop.f32.mrf.mxu0
      %v600 = vadd.f32 0.0, %v599
      %v601 = vpop.f32.mrf.mxu0
      %602 = vmatprep.mubr.f32.mxu0 0.0
      %603 = vmatmul.mubr.f32.gmra.mxu0 %v506
      %v604 = vpop.f32.mrf.mxu0
      %v605 = vadd.f32 0.0, %v604
      %v606 = vpop.f32.mrf.mxu0
      %607 = vmatprep.mubr.f32.mxu0 0.0
      %608 = vmatmul.mubr.f32.gmra.mxu0 %v507
      %v609 = vpop.f32.mrf.mxu0
      %v610 = vadd.f32 0.0, %v609
      %v611 = vpop.f32.mrf.mxu0
      %612 = vmatprep.mubr.f32.mxu0 0.0
      %613 = vmatmul.mubr.f32.gmra.mxu0 %v508
      %v614 = vpop.f32.mrf.mxu0
      %v615 = vadd.f32 0.0, %v614
      %v616 = vpop.f32.mrf.mxu0
      %617 = vmatprep.mubr.f32.mxu0 0.0
      %618 = vmatmul.mubr.f32.gmra.mxu0 %v509
      %v619 = vpop.f32.mrf.mxu0
      %v620 = vadd.f32 0.0, %v619
      %v621 = vpop.f32.mrf.mxu0
      %622 = vmatprep.mubr.f32.mxu0 0.0
      %623 = vmatmul.mubr.f32.gmra.mxu0 %v510
      %v624 = vpop.f32.mrf.mxu0
      %v625 = vadd.f32 0.0, %v624
      %v626 = vpop.f32.mrf.mxu0
      %627 = vmatprep.mubr.f32.mxu0 0.0
      %628 = vmatmul.mubr.f32.gmra.mxu0 %v511
      %v629 = vpop.f32.mrf.mxu0
      %v630 = vadd.f32 0.0, %v629
      %v631 = vpop.f32.mrf.mxu0
      %632 = vdwg.mxu0
      %v633 = vadd.f32 %v465, %v595
      %v634 = vadd.f32 %v470, %v600
      %v635 = vadd.f32 %v475, %v605
      %v636 = vadd.f32 %v480, %v610
      %v637 = vadd.f32 %v485, %v615
      %v638 = vadd.f32 %v490, %v620
      %v639 = vadd.f32 %v495, %v625
      %v640 = vadd.f32 %v500, %v630
      %v641 = vld [vmem:[%s234 + $0x1] sm:$0xff]
      %v642 = vld [vmem:[%s234 + $0x11] sm:$0xff]
      %v643 = vld [vmem:[%s234 + $0x21] sm:$0xff]
      %v644 = vld [vmem:[%s234 + $0x31] sm:$0xff]
      %v645 = vld [vmem:[%s234 + $0x41] sm:$0xff]
      %v646 = vld [vmem:[%s234 + $0x51] sm:$0xff]
      %v647 = vld [vmem:[%s234 + $0x61] sm:$0xff]
      %v648 = vld [vmem:[%s234 + $0x71] sm:$0xff]
      %v649 = vld [vmem:[%s1 + $0x100] sm:$0xff]
      %v650 = vld [vmem:[%s1 + $0x108] sm:$0xff]
      %v651 = vld [vmem:[%s1 + $0x110] sm:$0xff]
      %v652 = vld [vmem:[%s1 + $0x118] sm:$0xff]
      %v653 = vld [vmem:[%s1 + $0x120] sm:$0xff]
      %v654 = vld [vmem:[%s1 + $0x128] sm:$0xff]
      %v655 = vld [vmem:[%s1 + $0x130] sm:$0xff]
      %v656 = vld [vmem:[%s1 + $0x138] sm:$0xff]
      %v657 = vld [vmem:[%s1 + $0x140] sm:$0xff]
      %v658 = vld [vmem:[%s1 + $0x148] sm:$0xff]
      %v659 = vld [vmem:[%s1 + $0x150] sm:$0xff]
      %v660 = vld [vmem:[%s1 + $0x158] sm:$0xff]
      %v661 = vld [vmem:[%s1 + $0x160] sm:$0xff]
      %v662 = vld [vmem:[%s1 + $0x168] sm:$0xff]
      %v663 = vld [vmem:[%s1 + $0x170] sm:$0xff]
      %v664 = vld [vmem:[%s1 + $0x178] sm:$0xff]
      %665 = vmatprep.subr.mxu0 0.0
      %666 = vmatpush1.msra.mxu0 %v664
      %667 = vmatprep.subr.mxu0 0.0
      %668 = vmatpush1.msra.mxu0 %v663
      %669 = vmatprep.subr.mxu0 0.0
      %670 = vmatpush1.msra.mxu0 %v662
      %671 = vmatprep.subr.mxu0 0.0
      %672 = vmatpush1.msra.mxu0 %v661
      %673 = vmatprep.subr.mxu0 0.0
      %674 = vmatpush1.msra.mxu0 %v660
      %675 = vmatprep.subr.mxu0 0.0
      %676 = vmatpush1.msra.mxu0 %v659
      %677 = vmatprep.subr.mxu0 0.0
      %678 = vmatpush1.msra.mxu0 %v658
      %679 = vmatprep.subr.mxu0 0.0
      %680 = vmatpush1.msra.mxu0 %v657
      %681 = vmatprep.subr.mxu0 0.0
      %682 = vmatpush1.msra.mxu0 %v656
      %683 = vmatprep.subr.mxu0 0.0
      %684 = vmatpush1.msra.mxu0 %v655
      %685 = vmatprep.subr.mxu0 0.0
      %686 = vmatpush1.msra.mxu0 %v654
      %687 = vmatprep.subr.mxu0 0.0
      %688 = vmatpush1.msra.mxu0 %v653
      %689 = vmatprep.subr.mxu0 0.0
      %690 = vmatpush1.msra.mxu0 %v652
      %691 = vmatprep.subr.mxu0 0.0
      %692 = vmatpush1.msra.mxu0 %v651
      %693 = vmatprep.subr.mxu0 0.0
      %694 = vmatpush1.msra.mxu0 %v650
      %695 = vmatprep.subr.mxu0 0.0
      %696 = vmatpush1.msra.mxu0 %v649
      %697 = vmatprep.subr.mxu0 0.0
      %698 = vmatpush2.msra.mxu0 0.0
      %699 = vmatprep.subr.mxu0 0.0
      %700 = vmatpush2.msra.mxu0 0.0
      %701 = vmatprep.subr.mxu0 0.0
      %702 = vmatpush2.msra.mxu0 0.0
      %703 = vmatprep.subr.mxu0 0.0
      %704 = vmatpush2.msra.mxu0 0.0
      %705 = vmatprep.subr.mxu0 0.0
      %706 = vmatpush2.msra.mxu0 0.0
      %707 = vmatprep.subr.mxu0 0.0
      %708 = vmatpush2.msra.mxu0 0.0
      %709 = vmatprep.subr.mxu0 0.0
      %710 = vmatpush2.msra.mxu0 0.0
      %711 = vmatprep.subr.mxu0 0.0
      %712 = vmatpush2.msra.mxu0 0.0
      %713 = vmatprep.subr.mxu0 0.0
      %714 = vmatpush2.msra.mxu0 0.0
      %715 = vmatprep.subr.mxu0 0.0
      %716 = vmatpush2.msra.mxu0 0.0
      %717 = vmatprep.subr.mxu0 0.0
      %718 = vmatpush2.msra.mxu0 0.0
      %719 = vmatprep.subr.mxu0 0.0
      %720 = vmatpush2.msra.mxu0 0.0
      %721 = vmatprep.subr.mxu0 0.0
      %722 = vmatpush2.msra.mxu0 0.0
      %723 = vmatprep.subr.mxu0 0.0
      %724 = vmatpush2.msra.mxu0 0.0
      %725 = vmatprep.subr.mxu0 0.0
      %726 = vmatpush2.msra.mxu0 0.0
      %727 = vmatprep.subr.mxu0 0.0
      %728 = vmatpush2.msra.mxu0 0.0
      %729 = vmatprep.mubr.f32.mxu0 0.0
      %730 = vmatmul.mubr.f32.gmra.mxu0 %v641
      %v731 = vpop.f32.mrf.mxu0
      %v732 = vadd.f32 0.0, %v731
      %v733 = vpop.f32.mrf.mxu0
      %734 = vmatprep.mubr.f32.mxu0 0.0
      %735 = vmatmul.mubr.f32.gmra.mxu0 %v642
      %v736 = vpop.f32.mrf.mxu0
      %v737 = vadd.f32 0.0, %v736
      %v738 = vpop.f32.mrf.mxu0
      %739 = vmatprep.mubr.f32.mxu0 0.0
      %740 = vmatmul.mubr.f32.gmra.mxu0 %v643
      %v741 = vpop.f32.mrf.mxu0
      %v742 = vadd.f32 0.0, %v741
      %v743 = vpop.f32.mrf.mxu0
      %744 = vmatprep.mubr.f32.mxu0 0.0
      %745 = vmatmul.mubr.f32.gmra.mxu0 %v644
      %v746 = vpop.f32.mrf.mxu0
      %v747 = vadd.f32 0.0, %v746
      %v748 = vpop.f32.mrf.mxu0
      %749 = vmatprep.mubr.f32.mxu0 0.0
      %750 = vmatmul.mubr.f32.gmra.mxu0 %v645
      %v751 = vpop.f32.mrf.mxu0
      %v752 = vadd.f32 0.0, %v751
      %v753 = vpop.f32.mrf.mxu0
      %754 = vmatprep.mubr.f32.mxu0 0.0
      %755 = vmatmul.mubr.f32.gmra.mxu0 %v646
      %v756 = vpop.f32.mrf.mxu0
      %v757 = vadd.f32 0.0, %v756
      %v758 = vpop.f32.mrf.mxu0
      %759 = vmatprep.mubr.f32.mxu0 0.0
      %760 = vmatmul.mubr.f32.gmra.mxu0 %v647
      %v761 = vpop.f32.mrf.mxu0
      %v762 = vadd.f32 0.0, %v761
      %v763 = vpop.f32.mrf.mxu0
      %764 = vmatprep.mubr.f32.mxu0 0.0
      %765 = vmatmul.mubr.f32.gmra.mxu0 %v648
      %v766 = vpop.f32.mrf.mxu0
      %v767 = vadd.f32 0.0, %v766
      %v768 = vpop.f32.mrf.mxu0
      %769 = vdwg.mxu0
      %v770 = vadd.f32 %v633, %v732
      %v771 = vadd.f32 %v634, %v737
      %v772 = vadd.f32 %v635, %v742
      %v773 = vadd.f32 %v636, %v747
      %v774 = vadd.f32 %v637, %v752
      %v775 = vadd.f32 %v638, %v757
      %v776 = vadd.f32 %v639, %v762
      %v777 = vadd.f32 %v640, %v767
      %s778 = scalar_lea.vmem %s234, 288
      %v779 = vld [vmem:[%s778] sm:$0xff]
      %v780 = vld [vmem:[%s778 + $0x10] sm:$0xff]
      %v781 = vld [vmem:[%s778 + $0x20] sm:$0xff]
      %v782 = vld [vmem:[%s778 + $0x30] sm:$0xff]
      %v783 = vld [vmem:[%s778 + $0x40] sm:$0xff]
      %v784 = vld [vmem:[%s778 + $0x50] sm:$0xff]
      %v785 = vld [vmem:[%s778 + $0x60] sm:$0xff]
      %v786 = vld [vmem:[%s778 + $0x70] sm:$0xff]
      %v787 = vld [vmem:[%s1 + $0x180] sm:$0xff]
      %v788 = vld [vmem:[%s1 + $0x188] sm:$0xff]
      %v789 = vld [vmem:[%s1 + $0x190] sm:$0xff]
      %v790 = vld [vmem:[%s1 + $0x198] sm:$0xff]
      %v791 = vld [vmem:[%s1 + $0x1a0] sm:$0xff]
      %v792 = vld [vmem:[%s1 + $0x1a8] sm:$0xff]
      %v793 = vld [vmem:[%s1 + $0x1b0] sm:$0xff]
      %v794 = vld [vmem:[%s1 + $0x1b8] sm:$0xff]
      %v795 = vld [vmem:[%s1 + $0x1c0] sm:$0xff]
      %v796 = vld [vmem:[%s1 + $0x1c8] sm:$0xff]
      %v797 = vld [vmem:[%s1 + $0x1d0] sm:$0xff]
      %v798 = vld [vmem:[%s1 + $0x1d8] sm:$0xff]
      %v799 = vld [vmem:[%s1 + $0x1e0] sm:$0xff]
      %v800 = vld [vmem:[%s1 + $0x1e8] sm:$0xff]
      %v801 = vld [vmem:[%s1 + $0x1f0] sm:$0xff]
      %v802 = vld [vmem:[%s1 + $0x1f8] sm:$0xff]
      %803 = vmatprep.subr.mxu0 0.0
      %804 = vmatpush1.msra.mxu0 %v802
      %805 = vmatprep.subr.mxu0 0.0
      %806 = vmatpush1.msra.mxu0 %v801
      %807 = vmatprep.subr.mxu0 0.0
      %808 = vmatpush1.msra.mxu0 %v800
      %809 = vmatprep.subr.mxu0 0.0
      %810 = vmatpush1.msra.mxu0 %v799
      %811 = vmatprep.subr.mxu0 0.0
      %812 = vmatpush1.msra.mxu0 %v798
      %813 = vmatprep.subr.mxu0 0.0
      %814 = vmatpush1.msra.mxu0 %v797
      %815 = vmatprep.subr.mxu0 0.0
      %816 = vmatpush1.msra.mxu0 %v796
      %817 = vmatprep.subr.mxu0 0.0
      %818 = vmatpush1.msra.mxu0 %v795
      %819 = vmatprep.subr.mxu0 0.0
      %820 = vmatpush1.msra.mxu0 %v794
      %821 = vmatprep.subr.mxu0 0.0
      %822 = vmatpush1.msra.mxu0 %v793
      %823 = vmatprep.subr.mxu0 0.0
      %824 = vmatpush1.msra.mxu0 %v792
      %825 = vmatprep.subr.mxu0 0.0
      %826 = vmatpush1.msra.mxu0 %v791
      %827 = vmatprep.subr.mxu0 0.0
      %828 = vmatpush1.msra.mxu0 %v790
      %829 = vmatprep.subr.mxu0 0.0
      %830 = vmatpush1.msra.mxu0 %v789
      %831 = vmatprep.subr.mxu0 0.0
      %832 = vmatpush1.msra.mxu0 %v788
      %833 = vmatprep.subr.mxu0 0.0
      %834 = vmatpush1.msra.mxu0 %v787
      %835 = vmatprep.subr.mxu0 0.0
      %836 = vmatpush2.msra.mxu0 0.0
      %837 = vmatprep.subr.mxu0 0.0
      %838 = vmatpush2.msra.mxu0 0.0
      %839 = vmatprep.subr.mxu0 0.0
      %840 = vmatpush2.msra.mxu0 0.0
      %841 = vmatprep.subr.mxu0 0.0
      %842 = vmatpush2.msra.mxu0 0.0
      %843 = vmatprep.subr.mxu0 0.0
      %844 = vmatpush2.msra.mxu0 0.0
      %845 = vmatprep.subr.mxu0 0.0
      %846 = vmatpush2.msra.mxu0 0.0
      %847 = vmatprep.subr.mxu0 0.0
      %848 = vmatpush2.msra.mxu0 0.0
      %849 = vmatprep.subr.mxu0 0.0
      %850 = vmatpush2.msra.mxu0 0.0
      %851 = vmatprep.subr.mxu0 0.0
      %852 = vmatpush2.msra.mxu0 0.0
      %853 = vmatprep.subr.mxu0 0.0
      %854 = vmatpush2.msra.mxu0 0.0
      %855 = vmatprep.subr.mxu0 0.0
      %856 = vmatpush2.msra.mxu0 0.0
      %857 = vmatprep.subr.mxu0 0.0
      %858 = vmatpush2.msra.mxu0 0.0
      %859 = vmatprep.subr.mxu0 0.0
      %860 = vmatpush2.msra.mxu0 0.0
      %861 = vmatprep.subr.mxu0 0.0
      %862 = vmatpush2.msra.mxu0 0.0
      %863 = vmatprep.subr.mxu0 0.0
      %864 = vmatpush2.msra.mxu0 0.0
      %865 = vmatprep.subr.mxu0 0.0
      %866 = vmatpush2.msra.mxu0 0.0
      %867 = vmatprep.mubr.f32.mxu0 0.0
      %868 = vmatmul.mubr.f32.gmra.mxu0 %v779
      %v869 = vpop.f32.mrf.mxu0
      %v870 = vadd.f32 0.0, %v869
      %v871 = vpop.f32.mrf.mxu0
      %872 = vmatprep.mubr.f32.mxu0 0.0
      %873 = vmatmul.mubr.f32.gmra.mxu0 %v780
      %v874 = vpop.f32.mrf.mxu0
      %v875 = vadd.f32 0.0, %v874
      %v876 = vpop.f32.mrf.mxu0
      %877 = vmatprep.mubr.f32.mxu0 0.0
      %878 = vmatmul.mubr.f32.gmra.mxu0 %v781
      %v879 = vpop.f32.mrf.mxu0
      %v880 = vadd.f32 0.0, %v879
      %v881 = vpop.f32.mrf.mxu0
      %882 = vmatprep.mubr.f32.mxu0 0.0
      %883 = vmatmul.mubr.f32.gmra.mxu0 %v782
      %v884 = vpop.f32.mrf.mxu0
      %v885 = vadd.f32 0.0, %v884
      %v886 = vpop.f32.mrf.mxu0
      %887 = vmatprep.mubr.f32.mxu0 0.0
      %888 = vmatmul.mubr.f32.gmra.mxu0 %v783
      %v889 = vpop.f32.mrf.mxu0
      %v890 = vadd.f32 0.0, %v889
      %v891 = vpop.f32.mrf.mxu0
      %892 = vmatprep.mubr.f32.mxu0 0.0
      %893 = vmatmul.mubr.f32.gmra.mxu0 %v784
      %v894 = vpop.f32.mrf.mxu0
      %v895 = vadd.f32 0.0, %v894
      %v896 = vpop.f32.mrf.mxu0
      %897 = vmatprep.mubr.f32.mxu0 0.0
      %898 = vmatmul.mubr.f32.gmra.mxu0 %v785
      %v899 = vpop.f32.mrf.mxu0
      %v900 = vadd.f32 0.0, %v899
      %v901 = vpop.f32.mrf.mxu0
      %902 = vmatprep.mubr.f32.mxu0 0.0
      %903 = vmatmul.mubr.f32.gmra.mxu0 %v786
      %v904 = vpop.f32.mrf.mxu0
      %v905 = vadd.f32 0.0, %v904
      %v906 = vpop.f32.mrf.mxu0
      %907 = vdwg.mxu0
      %v908 = vadd.f32 %v770, %v870
      %v909 = vadd.f32 %v771, %v875
      %v910 = vadd.f32 %v772, %v880
      %v911 = vadd.f32 %v773, %v885
      %v912 = vadd.f32 %v774, %v890
      %v913 = vadd.f32 %v775, %v895
      %v914 = vadd.f32 %v776, %v900
      %v915 = vadd.f32 %v777, %v905
      %s916 = scalar_lea.vmem %s234, 432
      %v917 = vld [vmem:[%s916] sm:$0xff]
      %v918 = vld [vmem:[%s916 + $0x10] sm:$0xff]
      %v919 = vld [vmem:[%s916 + $0x20] sm:$0xff]
      %v920 = vld [vmem:[%s916 + $0x30] sm:$0xff]
      %v921 = vld [vmem:[%s916 + $0x40] sm:$0xff]
      %v922 = vld [vmem:[%s916 + $0x50] sm:$0xff]
      %v923 = vld [vmem:[%s916 + $0x60] sm:$0xff]
      %v924 = vld [vmem:[%s916 + $0x70] sm:$0xff]
      %v925 = vld [vmem:[%s1 + $0x200] sm:$0xff]
      %v926 = vld [vmem:[%s1 + $0x208] sm:$0xff]
      %v927 = vld [vmem:[%s1 + $0x210] sm:$0xff]
      %v928 = vld [vmem:[%s1 + $0x218] sm:$0xff]
      %v929 = vld [vmem:[%s1 + $0x220] sm:$0xff]
      %v930 = vld [vmem:[%s1 + $0x228] sm:$0xff]
      %v931 = vld [vmem:[%s1 + $0x230] sm:$0xff]
      %v932 = vld [vmem:[%s1 + $0x238] sm:$0xff]
      %v933 = vld [vmem:[%s1 + $0x240] sm:$0xff]
      %v934 = vld [vmem:[%s1 + $0x248] sm:$0xff]
      %v935 = vld [vmem:[%s1 + $0x250] sm:$0xff]
      %v936 = vld [vmem:[%s1 + $0x258] sm:$0xff]
      %v937 = vld [vmem:[%s1 + $0x260] sm:$0xff]
      %v938 = vld [vmem:[%s1 + $0x268] sm:$0xff]
      %v939 = vld [vmem:[%s1 + $0x270] sm:$0xff]
      %v940 = vld [vmem:[%s1 + $0x278] sm:$0xff]
      %941 = vmatprep.subr.mxu0 0.0
      %942 = vmatpush1.msra.mxu0 %v940
      %943 = vmatprep.subr.mxu0 0.0
      %944 = vmatpush1.msra.mxu0 %v939
      %945 = vmatprep.subr.mxu0 0.0
      %946 = vmatpush1.msra.mxu0 %v938
      %947 = vmatprep.subr.mxu0 0.0
      %948 = vmatpush1.msra.mxu0 %v937
      %949 = vmatprep.subr.mxu0 0.0
      %950 = vmatpush1.msra.mxu0 %v936
      %951 = vmatprep.subr.mxu0 0.0
      %952 = vmatpush1.msra.mxu0 %v935
      %953 = vmatprep.subr.mxu0 0.0
      %954 = vmatpush1.msra.mxu0 %v934
      %955 = vmatprep.subr.mxu0 0.0
      %956 = vmatpush1.msra.mxu0 %v933
      %957 = vmatprep.subr.mxu0 0.0
      %958 = vmatpush1.msra.mxu0 %v932
      %959 = vmatprep.subr.mxu0 0.0
      %960 = vmatpush1.msra.mxu0 %v931
      %961 = vmatprep.subr.mxu0 0.0
      %962 = vmatpush1.msra.mxu0 %v930
      %963 = vmatprep.subr.mxu0 0.0
      %964 = vmatpush1.msra.mxu0 %v929
      %965 = vmatprep.subr.mxu0 0.0
      %966 = vmatpush1.msra.mxu0 %v928
      %967 = vmatprep.subr.mxu0 0.0
      %968 = vmatpush1.msra.mxu0 %v927
      %969 = vmatprep.subr.mxu0 0.0
      %970 = vmatpush1.msra.mxu0 %v926
      %971 = vmatprep.subr.mxu0 0.0
      %972 = vmatpush1.msra.mxu0 %v925
      %973 = vmatprep.subr.mxu0 0.0
      %974 = vmatpush2.msra.mxu0 0.0
      %975 = vmatprep.subr.mxu0 0.0
      %976 = vmatpush2.msra.mxu0 0.0
      %977 = vmatprep.subr.mxu0 0.0
      %978 = vmatpush2.msra.mxu0 0.0
      %979 = vmatprep.subr.mxu0 0.0
      %980 = vmatpush2.msra.mxu0 0.0
      %981 = vmatprep.subr.mxu0 0.0
      %982 = vmatpush2.msra.mxu0 0.0
      %983 = vmatprep.subr.mxu0 0.0
      %984 = vmatpush2.msra.mxu0 0.0
      %985 = vmatprep.subr.mxu0 0.0
      %986 = vmatpush2.msra.mxu0 0.0
      %987 = vmatprep.subr.mxu0 0.0
      %988 = vmatpush2.msra.mxu0 0.0
      %989 = vmatprep.subr.mxu0 0.0
      %990 = vmatpush2.msra.mxu0 0.0
      %991 = vmatprep.subr.mxu0 0.0
      %992 = vmatpush2.msra.mxu0 0.0
      %993 = vmatprep.subr.mxu0 0.0
      %994 = vmatpush2.msra.mxu0 0.0
      %995 = vmatprep.subr.mxu0 0.0
      %996 = vmatpush2.msra.mxu0 0.0
      %997 = vmatprep.subr.mxu0 0.0
      %998 = vmatpush2.msra.mxu0 0.0
      %999 = vmatprep.subr.mxu0 0.0
      %1000 = vmatpush2.msra.mxu0 0.0
      %1001 = vmatprep.subr.mxu0 0.0
      %1002 = vmatpush2.msra.mxu0 0.0
      %1003 = vmatprep.subr.mxu0 0.0
      %1004 = vmatpush2.msra.mxu0 0.0
      %1005 = vmatprep.mubr.f32.mxu0 0.0
      %1006 = vmatmul.mubr.f32.gmra.mxu0 %v917
      %v1007 = vpop.f32.mrf.mxu0
      %v1008 = vadd.f32 0.0, %v1007
      %v1009 = vpop.f32.mrf.mxu0
      %1010 = vmatprep.mubr.f32.mxu0 0.0
      %1011 = vmatmul.mubr.f32.gmra.mxu0 %v918
      %v1012 = vpop.f32.mrf.mxu0
      %v1013 = vadd.f32 0.0, %v1012
      %v1014 = vpop.f32.mrf.mxu0
      %1015 = vmatprep.mubr.f32.mxu0 0.0
      %1016 = vmatmul.mubr.f32.gmra.mxu0 %v919
      %v1017 = vpop.f32.mrf.mxu0
      %v1018 = vadd.f32 0.0, %v1017
      %v1019 = vpop.f32.mrf.mxu0
      %1020 = vmatprep.mubr.f32.mxu0 0.0
      %1021 = vmatmul.mubr.f32.gmra.mxu0 %v920
      %v1022 = vpop.f32.mrf.mxu0
      %v1023 = vadd.f32 0.0, %v1022
      %v1024 = vpop.f32.mrf.mxu0
      %1025 = vmatprep.mubr.f32.mxu0 0.0
      %1026 = vmatmul.mubr.f32.gmra.mxu0 %v921
      %v1027 = vpop.f32.mrf.mxu0
      %v1028 = vadd.f32 0.0, %v1027
      %v1029 = vpop.f32.mrf.mxu0
      %1030 = vmatprep.mubr.f32.mxu0 0.0
      %1031 = vmatmul.mubr.f32.gmra.mxu0 %v922
      %v1032 = vpop.f32.mrf.mxu0
      %v1033 = vadd.f32 0.0, %v1032
      %v1034 = vpop.f32.mrf.mxu0
      %1035 = vmatprep.mubr.f32.mxu0 0.0
      %1036 = vmatmul.mubr.f32.gmra.mxu0 %v923
      %v1037 = vpop.f32.mrf.mxu0
      %v1038 = vadd.f32 0.0, %v1037
      %v1039 = vpop.f32.mrf.mxu0
      %1040 = vmatprep.mubr.f32.mxu0 0.0
      %1041 = vmatmul.mubr.f32.gmra.mxu0 %v924
      %v1042 = vpop.f32.mrf.mxu0
      %v1043 = vadd.f32 0.0, %v1042
      %v1044 = vpop.f32.mrf.mxu0
      %1045 = vdwg.mxu0
      %v1046 = vadd.f32 %v908, %v1008
      %v1047 = vadd.f32 %v909, %v1013
      %v1048 = vadd.f32 %v910, %v1018
      %v1049 = vadd.f32 %v911, %v1023
      %v1050 = vadd.f32 %v912, %v1028
      %v1051 = vadd.f32 %v913, %v1033
      %v1052 = vadd.f32 %v914, %v1038
      %v1053 = vadd.f32 %v915, %v1043
      %v1054 = vld [vmem:[%s778 + $0x1] sm:$0xff]
      %v1055 = vld [vmem:[%s778 + $0x11] sm:$0xff]
      %v1056 = vld [vmem:[%s778 + $0x21] sm:$0xff]
      %v1057 = vld [vmem:[%s778 + $0x31] sm:$0xff]
      %v1058 = vld [vmem:[%s778 + $0x41] sm:$0xff]
      %v1059 = vld [vmem:[%s778 + $0x51] sm:$0xff]
      %v1060 = vld [vmem:[%s778 + $0x61] sm:$0xff]
      %v1061 = vld [vmem:[%s778 + $0x71] sm:$0xff]
      %v1062 = vld [vmem:[%s1 + $0x280] sm:$0xff]
      %v1063 = vld [vmem:[%s1 + $0x288] sm:$0xff]
      %v1064 = vld [vmem:[%s1 + $0x290] sm:$0xff]
      %v1065 = vld [vmem:[%s1 + $0x298] sm:$0xff]
      %v1066 = vld [vmem:[%s1 + $0x2a0] sm:$0xff]
      %v1067 = vld [vmem:[%s1 + $0x2a8] sm:$0xff]
      %v1068 = vld [vmem:[%s1 + $0x2b0] sm:$0xff]
      %v1069 = vld [vmem:[%s1 + $0x2b8] sm:$0xff]
      %v1070 = vld [vmem:[%s1 + $0x2c0] sm:$0xff]
      %v1071 = vld [vmem:[%s1 + $0x2c8] sm:$0xff]
      %v1072 = vld [vmem:[%s1 + $0x2d0] sm:$0xff]
      %v1073 = vld [vmem:[%s1 + $0x2d8] sm:$0xff]
      %v1074 = vld [vmem:[%s1 + $0x2e0] sm:$0xff]
      %v1075 = vld [vmem:[%s1 + $0x2e8] sm:$0xff]
      %v1076 = vld [vmem:[%s1 + $0x2f0] sm:$0xff]
      %v1077 = vld [vmem:[%s1 + $0x2f8] sm:$0xff]
      %1078 = vmatprep.subr.mxu0 0.0
      %1079 = vmatpush1.msra.mxu0 %v1077
      %1080 = vmatprep.subr.mxu0 0.0
      %1081 = vmatpush1.msra.mxu0 %v1076
      %1082 = vmatprep.subr.mxu0 0.0
      %1083 = vmatpush1.msra.mxu0 %v1075
      %1084 = vmatprep.subr.mxu0 0.0
      %1085 = vmatpush1.msra.mxu0 %v1074
      %1086 = vmatprep.subr.mxu0 0.0
      %1087 = vmatpush1.msra.mxu0 %v1073
      %1088 = vmatprep.subr.mxu0 0.0
      %1089 = vmatpush1.msra.mxu0 %v1072
      %1090 = vmatprep.subr.mxu0 0.0
      %1091 = vmatpush1.msra.mxu0 %v1071
      %1092 = vmatprep.subr.mxu0 0.0
      %1093 = vmatpush1.msra.mxu0 %v1070
      %1094 = vmatprep.subr.mxu0 0.0
      %1095 = vmatpush1.msra.mxu0 %v1069
      %1096 = vmatprep.subr.mxu0 0.0
      %1097 = vmatpush1.msra.mxu0 %v1068
      %1098 = vmatprep.subr.mxu0 0.0
      %1099 = vmatpush1.msra.mxu0 %v1067
      %1100 = vmatprep.subr.mxu0 0.0
      %1101 = vmatpush1.msra.mxu0 %v1066
      %1102 = vmatprep.subr.mxu0 0.0
      %1103 = vmatpush1.msra.mxu0 %v1065
      %1104 = vmatprep.subr.mxu0 0.0
      %1105 = vmatpush1.msra.mxu0 %v1064
      %1106 = vmatprep.subr.mxu0 0.0
      %1107 = vmatpush1.msra.mxu0 %v1063
      %1108 = vmatprep.subr.mxu0 0.0
      %1109 = vmatpush1.msra.mxu0 %v1062
      %1110 = vmatprep.subr.mxu0 0.0
      %1111 = vmatpush2.msra.mxu0 0.0
      %1112 = vmatprep.subr.mxu0 0.0
      %1113 = vmatpush2.msra.mxu0 0.0
      %1114 = vmatprep.subr.mxu0 0.0
      %1115 = vmatpush2.msra.mxu0 0.0
      %1116 = vmatprep.subr.mxu0 0.0
      %1117 = vmatpush2.msra.mxu0 0.0
      %1118 = vmatprep.subr.mxu0 0.0
      %1119 = vmatpush2.msra.mxu0 0.0
      %1120 = vmatprep.subr.mxu0 0.0
      %1121 = vmatpush2.msra.mxu0 0.0
      %1122 = vmatprep.subr.mxu0 0.0
      %1123 = vmatpush2.msra.mxu0 0.0
      %1124 = vmatprep.subr.mxu0 0.0
      %1125 = vmatpush2.msra.mxu0 0.0
      %1126 = vmatprep.subr.mxu0 0.0
      %1127 = vmatpush2.msra.mxu0 0.0
      %1128 = vmatprep.subr.mxu0 0.0
      %1129 = vmatpush2.msra.mxu0 0.0
      %1130 = vmatprep.subr.mxu0 0.0
      %1131 = vmatpush2.msra.mxu0 0.0
      %1132 = vmatprep.subr.mxu0 0.0
      %1133 = vmatpush2.msra.mxu0 0.0
      %1134 = vmatprep.subr.mxu0 0.0
      %1135 = vmatpush2.msra.mxu0 0.0
      %1136 = vmatprep.subr.mxu0 0.0
      %1137 = vmatpush2.msra.mxu0 0.0
      %1138 = vmatprep.subr.mxu0 0.0
      %1139 = vmatpush2.msra.mxu0 0.0
      %1140 = vmatprep.subr.mxu0 0.0
      %1141 = vmatpush2.msra.mxu0 0.0
      %1142 = vmatprep.mubr.f32.mxu0 0.0
      %1143 = vmatmul.mubr.f32.gmra.mxu0 %v1054
      %v1144 = vpop.f32.mrf.mxu0
      %v1145 = vadd.f32 0.0, %v1144
      %v1146 = vpop.f32.mrf.mxu0
      %1147 = vmatprep.mubr.f32.mxu0 0.0
      %1148 = vmatmul.mubr.f32.gmra.mxu0 %v1055
      %v1149 = vpop.f32.mrf.mxu0
      %v1150 = vadd.f32 0.0, %v1149
      %v1151 = vpop.f32.mrf.mxu0
      %1152 = vmatprep.mubr.f32.mxu0 0.0
      %1153 = vmatmul.mubr.f32.gmra.mxu0 %v1056
      %v1154 = vpop.f32.mrf.mxu0
      %v1155 = vadd.f32 0.0, %v1154
      %v1156 = vpop.f32.mrf.mxu0
      %1157 = vmatprep.mubr.f32.mxu0 0.0
      %1158 = vmatmul.mubr.f32.gmra.mxu0 %v1057
      %v1159 = vpop.f32.mrf.mxu0
      %v1160 = vadd.f32 0.0, %v1159
      %v1161 = vpop.f32.mrf.mxu0
      %1162 = vmatprep.mubr.f32.mxu0 0.0
      %1163 = vmatmul.mubr.f32.gmra.mxu0 %v1058
      %v1164 = vpop.f32.mrf.mxu0
      %v1165 = vadd.f32 0.0, %v1164
      %v1166 = vpop.f32.mrf.mxu0
      %1167 = vmatprep.mubr.f32.mxu0 0.0
      %1168 = vmatmul.mubr.f32.gmra.mxu0 %v1059
      %v1169 = vpop.f32.mrf.mxu0
      %v1170 = vadd.f32 0.0, %v1169
      %v1171 = vpop.f32.mrf.mxu0
      %1172 = vmatprep.mubr.f32.mxu0 0.0
      %1173 = vmatmul.mubr.f32.gmra.mxu0 %v1060
      %v1174 = vpop.f32.mrf.mxu0
      %v1175 = vadd.f32 0.0, %v1174
      %v1176 = vpop.f32.mrf.mxu0
      %1177 = vmatprep.mubr.f32.mxu0 0.0
      %1178 = vmatmul.mubr.f32.gmra.mxu0 %v1061
      %v1179 = vpop.f32.mrf.mxu0
      %v1180 = vadd.f32 0.0, %v1179
      %v1181 = vpop.f32.mrf.mxu0
      %1182 = vdwg.mxu0
      %v1183 = vadd.f32 %v1046, %v1145
      %v1184 = vadd.f32 %v1047, %v1150
      %v1185 = vadd.f32 %v1048, %v1155
      %v1186 = vadd.f32 %v1049, %v1160
      %v1187 = vadd.f32 %v1050, %v1165
      %v1188 = vadd.f32 %v1051, %v1170
      %v1189 = vadd.f32 %v1052, %v1175
      %v1190 = vadd.f32 %v1053, %v1180
      %s1191 = scalar_lea.vmem %s234, 16
      %v1192 = vld [vmem:[%s1191] sm:$0xff]
      %v1193 = vld [vmem:[%s1191 + $0x10] sm:$0xff]
      %v1194 = vld [vmem:[%s1191 + $0x20] sm:$0xff]
      %v1195 = vld [vmem:[%s1191 + $0x30] sm:$0xff]
      %v1196 = vld [vmem:[%s1191 + $0x40] sm:$0xff]
      %v1197 = vld [vmem:[%s1191 + $0x50] sm:$0xff]
      %v1198 = vld [vmem:[%s1191 + $0x60] sm:$0xff]
      %v1199 = vld [vmem:[%s1191 + $0x70] sm:$0xff]
      %v1200 = vld [vmem:[%s1 + $0x300] sm:$0xff]
      %v1201 = vld [vmem:[%s1 + $0x308] sm:$0xff]
      %v1202 = vld [vmem:[%s1 + $0x310] sm:$0xff]
      %v1203 = vld [vmem:[%s1 + $0x318] sm:$0xff]
      %v1204 = vld [vmem:[%s1 + $0x320] sm:$0xff]
      %v1205 = vld [vmem:[%s1 + $0x328] sm:$0xff]
      %v1206 = vld [vmem:[%s1 + $0x330] sm:$0xff]
      %v1207 = vld [vmem:[%s1 + $0x338] sm:$0xff]
      %v1208 = vld [vmem:[%s1 + $0x340] sm:$0xff]
      %v1209 = vld [vmem:[%s1 + $0x348] sm:$0xff]
      %v1210 = vld [vmem:[%s1 + $0x350] sm:$0xff]
      %v1211 = vld [vmem:[%s1 + $0x358] sm:$0xff]
      %v1212 = vld [vmem:[%s1 + $0x360] sm:$0xff]
      %v1213 = vld [vmem:[%s1 + $0x368] sm:$0xff]
      %v1214 = vld [vmem:[%s1 + $0x370] sm:$0xff]
      %v1215 = vld [vmem:[%s1 + $0x378] sm:$0xff]
      %1216 = vmatprep.subr.mxu0 0.0
      %1217 = vmatpush1.msra.mxu0 %v1215
      %1218 = vmatprep.subr.mxu0 0.0
      %1219 = vmatpush1.msra.mxu0 %v1214
      %1220 = vmatprep.subr.mxu0 0.0
      %1221 = vmatpush1.msra.mxu0 %v1213
      %1222 = vmatprep.subr.mxu0 0.0
      %1223 = vmatpush1.msra.mxu0 %v1212
      %1224 = vmatprep.subr.mxu0 0.0
      %1225 = vmatpush1.msra.mxu0 %v1211
      %1226 = vmatprep.subr.mxu0 0.0
      %1227 = vmatpush1.msra.mxu0 %v1210
      %1228 = vmatprep.subr.mxu0 0.0
      %1229 = vmatpush1.msra.mxu0 %v1209
      %1230 = vmatprep.subr.mxu0 0.0
      %1231 = vmatpush1.msra.mxu0 %v1208
      %1232 = vmatprep.subr.mxu0 0.0
      %1233 = vmatpush1.msra.mxu0 %v1207
      %1234 = vmatprep.subr.mxu0 0.0
      %1235 = vmatpush1.msra.mxu0 %v1206
      %1236 = vmatprep.subr.mxu0 0.0
      %1237 = vmatpush1.msra.mxu0 %v1205
      %1238 = vmatprep.subr.mxu0 0.0
      %1239 = vmatpush1.msra.mxu0 %v1204
      %1240 = vmatprep.subr.mxu0 0.0
      %1241 = vmatpush1.msra.mxu0 %v1203
      %1242 = vmatprep.subr.mxu0 0.0
      %1243 = vmatpush1.msra.mxu0 %v1202
      %1244 = vmatprep.subr.mxu0 0.0
      %1245 = vmatpush1.msra.mxu0 %v1201
      %1246 = vmatprep.subr.mxu0 0.0
      %1247 = vmatpush1.msra.mxu0 %v1200
      %1248 = vmatprep.subr.mxu0 0.0
      %1249 = vmatpush2.msra.mxu0 0.0
      %1250 = vmatprep.subr.mxu0 0.0
      %1251 = vmatpush2.msra.mxu0 0.0
      %1252 = vmatprep.subr.mxu0 0.0
      %1253 = vmatpush2.msra.mxu0 0.0
      %1254 = vmatprep.subr.mxu0 0.0
      %1255 = vmatpush2.msra.mxu0 0.0
      %1256 = vmatprep.subr.mxu0 0.0
      %1257 = vmatpush2.msra.mxu0 0.0
      %1258 = vmatprep.subr.mxu0 0.0
      %1259 = vmatpush2.msra.mxu0 0.0
      %1260 = vmatprep.subr.mxu0 0.0
      %1261 = vmatpush2.msra.mxu0 0.0
      %1262 = vmatprep.subr.mxu0 0.0
      %1263 = vmatpush2.msra.mxu0 0.0
      %1264 = vmatprep.subr.mxu0 0.0
      %1265 = vmatpush2.msra.mxu0 0.0
      %1266 = vmatprep.subr.mxu0 0.0
      %1267 = vmatpush2.msra.mxu0 0.0
      %1268 = vmatprep.subr.mxu0 0.0
      %1269 = vmatpush2.msra.mxu0 0.0
      %1270 = vmatprep.subr.mxu0 0.0
      %1271 = vmatpush2.msra.mxu0 0.0
      %1272 = vmatprep.subr.mxu0 0.0
      %1273 = vmatpush2.msra.mxu0 0.0
      %1274 = vmatprep.subr.mxu0 0.0
      %1275 = vmatpush2.msra.mxu0 0.0
      %1276 = vmatprep.subr.mxu0 0.0
      %1277 = vmatpush2.msra.mxu0 0.0
      %1278 = vmatprep.subr.mxu0 0.0
      %1279 = vmatpush2.msra.mxu0 0.0
      %1280 = vmatprep.mubr.f32.mxu0 0.0
      %1281 = vmatmul.mubr.f32.gmra.mxu0 %v1192
      %v1282 = vpop.f32.mrf.mxu0
      %v1283 = vadd.f32 0.0, %v1282
      %v1284 = vpop.f32.mrf.mxu0
      %1285 = vmatprep.mubr.f32.mxu0 0.0
      %1286 = vmatmul.mubr.f32.gmra.mxu0 %v1193
      %v1287 = vpop.f32.mrf.mxu0
      %v1288 = vadd.f32 0.0, %v1287
      %v1289 = vpop.f32.mrf.mxu0
      %1290 = vmatprep.mubr.f32.mxu0 0.0
      %1291 = vmatmul.mubr.f32.gmra.mxu0 %v1194
      %v1292 = vpop.f32.mrf.mxu0
      %v1293 = vadd.f32 0.0, %v1292
      %v1294 = vpop.f32.mrf.mxu0
      %1295 = vmatprep.mubr.f32.mxu0 0.0
      %1296 = vmatmul.mubr.f32.gmra.mxu0 %v1195
      %v1297 = vpop.f32.mrf.mxu0
      %v1298 = vadd.f32 0.0, %v1297
      %v1299 = vpop.f32.mrf.mxu0
      %1300 = vmatprep.mubr.f32.mxu0 0.0
      %1301 = vmatmul.mubr.f32.gmra.mxu0 %v1196
      %v1302 = vpop.f32.mrf.mxu0
      %v1303 = vadd.f32 0.0, %v1302
      %v1304 = vpop.f32.mrf.mxu0
      %1305 = vmatprep.mubr.f32.mxu0 0.0
      %1306 = vmatmul.mubr.f32.gmra.mxu0 %v1197
      %v1307 = vpop.f32.mrf.mxu0
      %v1308 = vadd.f32 0.0, %v1307
      %v1309 = vpop.f32.mrf.mxu0
      %1310 = vmatprep.mubr.f32.mxu0 0.0
      %1311 = vmatmul.mubr.f32.gmra.mxu0 %v1198
      %v1312 = vpop.f32.mrf.mxu0
      %v1313 = vadd.f32 0.0, %v1312
      %v1314 = vpop.f32.mrf.mxu0
      %1315 = vmatprep.mubr.f32.mxu0 0.0
      %1316 = vmatmul.mubr.f32.gmra.mxu0 %v1199
      %v1317 = vpop.f32.mrf.mxu0
      %v1318 = vadd.f32 0.0, %v1317
      %v1319 = vpop.f32.mrf.mxu0
      %1320 = vdwg.mxu0
      %v1321 = vadd.f32 %v1183, %v1283
      %v1322 = vadd.f32 %v1184, %v1288
      %v1323 = vadd.f32 %v1185, %v1293
      %v1324 = vadd.f32 %v1186, %v1298
      %v1325 = vadd.f32 %v1187, %v1303
      %v1326 = vadd.f32 %v1188, %v1308
      %v1327 = vadd.f32 %v1189, %v1313
      %v1328 = vadd.f32 %v1190, %v1318
      %s1329 = scalar_lea.vmem %s234, 160
      %v1330 = vld [vmem:[%s1329] sm:$0xff]
      %v1331 = vld [vmem:[%s1329 + $0x10] sm:$0xff]
      %v1332 = vld [vmem:[%s1329 + $0x20] sm:$0xff]
      %v1333 = vld [vmem:[%s1329 + $0x30] sm:$0xff]
      %v1334 = vld [vmem:[%s1329 + $0x40] sm:$0xff]
      %v1335 = vld [vmem:[%s1329 + $0x50] sm:$0xff]
      %v1336 = vld [vmem:[%s1329 + $0x60] sm:$0xff]
      %v1337 = vld [vmem:[%s1329 + $0x70] sm:$0xff]
      %v1338 = vld [vmem:[%s1 + $0x380] sm:$0xff]
      %v1339 = vld [vmem:[%s1 + $0x388] sm:$0xff]
      %v1340 = vld [vmem:[%s1 + $0x390] sm:$0xff]
      %v1341 = vld [vmem:[%s1 + $0x398] sm:$0xff]
      %v1342 = vld [vmem:[%s1 + $0x3a0] sm:$0xff]
      %v1343 = vld [vmem:[%s1 + $0x3a8] sm:$0xff]
      %v1344 = vld [vmem:[%s1 + $0x3b0] sm:$0xff]
      %v1345 = vld [vmem:[%s1 + $0x3b8] sm:$0xff]
      %v1346 = vld [vmem:[%s1 + $0x3c0] sm:$0xff]
      %v1347 = vld [vmem:[%s1 + $0x3c8] sm:$0xff]
      %v1348 = vld [vmem:[%s1 + $0x3d0] sm:$0xff]
      %v1349 = vld [vmem:[%s1 + $0x3d8] sm:$0xff]
      %v1350 = vld [vmem:[%s1 + $0x3e0] sm:$0xff]
      %v1351 = vld [vmem:[%s1 + $0x3e8] sm:$0xff]
      %v1352 = vld [vmem:[%s1 + $0x3f0] sm:$0xff]
      %v1353 = vld [vmem:[%s1 + $0x3f8] sm:$0xff]
      %1354 = vmatprep.subr.mxu0 0.0
      %1355 = vmatpush1.msra.mxu0 %v1353
      %1356 = vmatprep.subr.mxu0 0.0
      %1357 = vmatpush1.msra.mxu0 %v1352
      %1358 = vmatprep.subr.mxu0 0.0
      %1359 = vmatpush1.msra.mxu0 %v1351
      %1360 = vmatprep.subr.mxu0 0.0
      %1361 = vmatpush1.msra.mxu0 %v1350
      %1362 = vmatprep.subr.mxu0 0.0
      %1363 = vmatpush1.msra.mxu0 %v1349
      %1364 = vmatprep.subr.mxu0 0.0
      %1365 = vmatpush1.msra.mxu0 %v1348
      %1366 = vmatprep.subr.mxu0 0.0
      %1367 = vmatpush1.msra.mxu0 %v1347
      %1368 = vmatprep.subr.mxu0 0.0
      %1369 = vmatpush1.msra.mxu0 %v1346
      %1370 = vmatprep.subr.mxu0 0.0
      %1371 = vmatpush1.msra.mxu0 %v1345
      %1372 = vmatprep.subr.mxu0 0.0
      %1373 = vmatpush1.msra.mxu0 %v1344
      %1374 = vmatprep.subr.mxu0 0.0
      %1375 = vmatpush1.msra.mxu0 %v1343
      %1376 = vmatprep.subr.mxu0 0.0
      %1377 = vmatpush1.msra.mxu0 %v1342
      %1378 = vmatprep.subr.mxu0 0.0
      %1379 = vmatpush1.msra.mxu0 %v1341
      %1380 = vmatprep.subr.mxu0 0.0
      %1381 = vmatpush1.msra.mxu0 %v1340
      %1382 = vmatprep.subr.mxu0 0.0
      %1383 = vmatpush1.msra.mxu0 %v1339
      %1384 = vmatprep.subr.mxu0 0.0
      %1385 = vmatpush1.msra.mxu0 %v1338
      %1386 = vmatprep.subr.mxu0 0.0
      %1387 = vmatpush2.msra.mxu0 0.0
      %1388 = vmatprep.subr.mxu0 0.0
      %1389 = vmatpush2.msra.mxu0 0.0
      %1390 = vmatprep.subr.mxu0 0.0
      %1391 = vmatpush2.msra.mxu0 0.0
      %1392 = vmatprep.subr.mxu0 0.0
      %1393 = vmatpush2.msra.mxu0 0.0
      %1394 = vmatprep.subr.mxu0 0.0
      %1395 = vmatpush2.msra.mxu0 0.0
      %1396 = vmatprep.subr.mxu0 0.0
      %1397 = vmatpush2.msra.mxu0 0.0
      %1398 = vmatprep.subr.mxu0 0.0
      %1399 = vmatpush2.msra.mxu0 0.0
      %1400 = vmatprep.subr.mxu0 0.0
      %1401 = vmatpush2.msra.mxu0 0.0
      %1402 = vmatprep.subr.mxu0 0.0
      %1403 = vmatpush2.msra.mxu0 0.0
      %1404 = vmatprep.subr.mxu0 0.0
      %1405 = vmatpush2.msra.mxu0 0.0
      %1406 = vmatprep.subr.mxu0 0.0
      %1407 = vmatpush2.msra.mxu0 0.0
      %1408 = vmatprep.subr.mxu0 0.0
      %1409 = vmatpush2.msra.mxu0 0.0
      %1410 = vmatprep.subr.mxu0 0.0
      %1411 = vmatpush2.msra.mxu0 0.0
      %1412 = vmatprep.subr.mxu0 0.0
      %1413 = vmatpush2.msra.mxu0 0.0
      %1414 = vmatprep.subr.mxu0 0.0
      %1415 = vmatpush2.msra.mxu0 0.0
      %1416 = vmatprep.subr.mxu0 0.0
      %1417 = vmatpush2.msra.mxu0 0.0
      %1418 = vmatprep.mubr.f32.mxu0 0.0
      %1419 = vmatmul.mubr.f32.gmra.mxu0 %v1330
      %v1420 = vpop.f32.mrf.mxu0
      %v1421 = vadd.f32 0.0, %v1420
      %v1422 = vpop.f32.mrf.mxu0
      %1423 = vmatprep.mubr.f32.mxu0 0.0
      %1424 = vmatmul.mubr.f32.gmra.mxu0 %v1331
      %v1425 = vpop.f32.mrf.mxu0
      %v1426 = vadd.f32 0.0, %v1425
      %v1427 = vpop.f32.mrf.mxu0
      %1428 = vmatprep.mubr.f32.mxu0 0.0
      %1429 = vmatmul.mubr.f32.gmra.mxu0 %v1332
      %v1430 = vpop.f32.mrf.mxu0
      %v1431 = vadd.f32 0.0, %v1430
      %v1432 = vpop.f32.mrf.mxu0
      %1433 = vmatprep.mubr.f32.mxu0 0.0
      %1434 = vmatmul.mubr.f32.gmra.mxu0 %v1333
      %v1435 = vpop.f32.mrf.mxu0
      %v1436 = vadd.f32 0.0, %v1435
      %v1437 = vpop.f32.mrf.mxu0
      %1438 = vmatprep.mubr.f32.mxu0 0.0
      %1439 = vmatmul.mubr.f32.gmra.mxu0 %v1334
      %v1440 = vpop.f32.mrf.mxu0
      %v1441 = vadd.f32 0.0, %v1440
      %v1442 = vpop.f32.mrf.mxu0
      %1443 = vmatprep.mubr.f32.mxu0 0.0
      %1444 = vmatmul.mubr.f32.gmra.mxu0 %v1335
      %v1445 = vpop.f32.mrf.mxu0
      %v1446 = vadd.f32 0.0, %v1445
      %v1447 = vpop.f32.mrf.mxu0
      %1448 = vmatprep.mubr.f32.mxu0 0.0
      %1449 = vmatmul.mubr.f32.gmra.mxu0 %v1336
      %v1450 = vpop.f32.mrf.mxu0
      %v1451 = vadd.f32 0.0, %v1450
      %v1452 = vpop.f32.mrf.mxu0
      %1453 = vmatprep.mubr.f32.mxu0 0.0
      %1454 = vmatmul.mubr.f32.gmra.mxu0 %v1337
      %v1455 = vpop.f32.mrf.mxu0
      %v1456 = vadd.f32 0.0, %v1455
      %v1457 = vpop.f32.mrf.mxu0
      %1458 = vdwg.mxu0
      %v1459 = vadd.f32 %v1321, %v1421
      %v1460 = vadd.f32 %v1322, %v1426
      %v1461 = vadd.f32 %v1323, %v1431
      %v1462 = vadd.f32 %v1324, %v1436
      %v1463 = vadd.f32 %v1325, %v1441
      %v1464 = vadd.f32 %v1326, %v1446
      %v1465 = vadd.f32 %v1327, %v1451
      %v1466 = vadd.f32 %v1328, %v1456
      %v1467 = vld [vmem:[%s1191 + $0x1] sm:$0xff]
      %v1468 = vld [vmem:[%s1191 + $0x11] sm:$0xff]
      %v1469 = vld [vmem:[%s1191 + $0x21] sm:$0xff]
      %v1470 = vld [vmem:[%s1191 + $0x31] sm:$0xff]
      %v1471 = vld [vmem:[%s1191 + $0x41] sm:$0xff]
      %v1472 = vld [vmem:[%s1191 + $0x51] sm:$0xff]
      %v1473 = vld [vmem:[%s1191 + $0x61] sm:$0xff]
      %v1474 = vld [vmem:[%s1191 + $0x71] sm:$0xff]
      %v1475 = vld [vmem:[%s1 + $0x400] sm:$0xff]
      %v1476 = vld [vmem:[%s1 + $0x408] sm:$0xff]
      %v1477 = vld [vmem:[%s1 + $0x410] sm:$0xff]
      %v1478 = vld [vmem:[%s1 + $0x418] sm:$0xff]
      %v1479 = vld [vmem:[%s1 + $0x420] sm:$0xff]
      %v1480 = vld [vmem:[%s1 + $0x428] sm:$0xff]
      %v1481 = vld [vmem:[%s1 + $0x430] sm:$0xff]
      %v1482 = vld [vmem:[%s1 + $0x438] sm:$0xff]
      %v1483 = vld [vmem:[%s1 + $0x440] sm:$0xff]
      %v1484 = vld [vmem:[%s1 + $0x448] sm:$0xff]
      %v1485 = vld [vmem:[%s1 + $0x450] sm:$0xff]
      %v1486 = vld [vmem:[%s1 + $0x458] sm:$0xff]
      %v1487 = vld [vmem:[%s1 + $0x460] sm:$0xff]
      %v1488 = vld [vmem:[%s1 + $0x468] sm:$0xff]
      %v1489 = vld [vmem:[%s1 + $0x470] sm:$0xff]
      %v1490 = vld [vmem:[%s1 + $0x478] sm:$0xff]
      %1491 = vmatprep.subr.mxu0 0.0
      %1492 = vmatpush1.msra.mxu0 %v1490
      %1493 = vmatprep.subr.mxu0 0.0
      %1494 = vmatpush1.msra.mxu0 %v1489
      %1495 = vmatprep.subr.mxu0 0.0
      %1496 = vmatpush1.msra.mxu0 %v1488
      %1497 = vmatprep.subr.mxu0 0.0
      %1498 = vmatpush1.msra.mxu0 %v1487
      %1499 = vmatprep.subr.mxu0 0.0
      %1500 = vmatpush1.msra.mxu0 %v1486
      %1501 = vmatprep.subr.mxu0 0.0
      %1502 = vmatpush1.msra.mxu0 %v1485
      %1503 = vmatprep.subr.mxu0 0.0
      %1504 = vmatpush1.msra.mxu0 %v1484
      %1505 = vmatprep.subr.mxu0 0.0
      %1506 = vmatpush1.msra.mxu0 %v1483
      %1507 = vmatprep.subr.mxu0 0.0
      %1508 = vmatpush1.msra.mxu0 %v1482
      %1509 = vmatprep.subr.mxu0 0.0
      %1510 = vmatpush1.msra.mxu0 %v1481
      %1511 = vmatprep.subr.mxu0 0.0
      %1512 = vmatpush1.msra.mxu0 %v1480
      %1513 = vmatprep.subr.mxu0 0.0
      %1514 = vmatpush1.msra.mxu0 %v1479
      %1515 = vmatprep.subr.mxu0 0.0
      %1516 = vmatpush1.msra.mxu0 %v1478
      %1517 = vmatprep.subr.mxu0 0.0
      %1518 = vmatpush1.msra.mxu0 %v1477
      %1519 = vmatprep.subr.mxu0 0.0
      %1520 = vmatpush1.msra.mxu0 %v1476
      %1521 = vmatprep.subr.mxu0 0.0
      %1522 = vmatpush1.msra.mxu0 %v1475
      %1523 = vmatprep.subr.mxu0 0.0
      %1524 = vmatpush2.msra.mxu0 0.0
      %1525 = vmatprep.subr.mxu0 0.0
      %1526 = vmatpush2.msra.mxu0 0.0
      %1527 = vmatprep.subr.mxu0 0.0
      %1528 = vmatpush2.msra.mxu0 0.0
      %1529 = vmatprep.subr.mxu0 0.0
      %1530 = vmatpush2.msra.mxu0 0.0
      %1531 = vmatprep.subr.mxu0 0.0
      %1532 = vmatpush2.msra.mxu0 0.0
      %1533 = vmatprep.subr.mxu0 0.0
      %1534 = vmatpush2.msra.mxu0 0.0
      %1535 = vmatprep.subr.mxu0 0.0
      %1536 = vmatpush2.msra.mxu0 0.0
      %1537 = vmatprep.subr.mxu0 0.0
      %1538 = vmatpush2.msra.mxu0 0.0
      %1539 = vmatprep.subr.mxu0 0.0
      %1540 = vmatpush2.msra.mxu0 0.0
      %1541 = vmatprep.subr.mxu0 0.0
      %1542 = vmatpush2.msra.mxu0 0.0
      %1543 = vmatprep.subr.mxu0 0.0
      %1544 = vmatpush2.msra.mxu0 0.0
      %1545 = vmatprep.subr.mxu0 0.0
      %1546 = vmatpush2.msra.mxu0 0.0
      %1547 = vmatprep.subr.mxu0 0.0
      %1548 = vmatpush2.msra.mxu0 0.0
      %1549 = vmatprep.subr.mxu0 0.0
      %1550 = vmatpush2.msra.mxu0 0.0
      %1551 = vmatprep.subr.mxu0 0.0
      %1552 = vmatpush2.msra.mxu0 0.0
      %1553 = vmatprep.subr.mxu0 0.0
      %1554 = vmatpush2.msra.mxu0 0.0
      %1555 = vmatprep.mubr.f32.mxu0 0.0
      %1556 = vmatmul.mubr.f32.gmra.mxu0 %v1467
      %v1557 = vpop.f32.mrf.mxu0
      %v1558 = vadd.f32 0.0, %v1557
      %v1559 = vpop.f32.mrf.mxu0
      %1560 = vmatprep.mubr.f32.mxu0 0.0
      %1561 = vmatmul.mubr.f32.gmra.mxu0 %v1468
      %v1562 = vpop.f32.mrf.mxu0
      %v1563 = vadd.f32 0.0, %v1562
      %v1564 = vpop.f32.mrf.mxu0
      %1565 = vmatprep.mubr.f32.mxu0 0.0
      %1566 = vmatmul.mubr.f32.gmra.mxu0 %v1469
      %v1567 = vpop.f32.mrf.mxu0
      %v1568 = vadd.f32 0.0, %v1567
      %v1569 = vpop.f32.mrf.mxu0
      %1570 = vmatprep.mubr.f32.mxu0 0.0
      %1571 = vmatmul.mubr.f32.gmra.mxu0 %v1470
      %v1572 = vpop.f32.mrf.mxu0
      %v1573 = vadd.f32 0.0, %v1572
      %v1574 = vpop.f32.mrf.mxu0
      %1575 = vmatprep.mubr.f32.mxu0 0.0
      %1576 = vmatmul.mubr.f32.gmra.mxu0 %v1471
      %v1577 = vpop.f32.mrf.mxu0
      %v1578 = vadd.f32 0.0, %v1577
      %v1579 = vpop.f32.mrf.mxu0
      %1580 = vmatprep.mubr.f32.mxu0 0.0
      %1581 = vmatmul.mubr.f32.gmra.mxu0 %v1472
      %v1582 = vpop.f32.mrf.mxu0
      %v1583 = vadd.f32 0.0, %v1582
      %v1584 = vpop.f32.mrf.mxu0
      %1585 = vmatprep.mubr.f32.mxu0 0.0
      %1586 = vmatmul.mubr.f32.gmra.mxu0 %v1473
      %v1587 = vpop.f32.mrf.mxu0
      %v1588 = vadd.f32 0.0, %v1587
      %v1589 = vpop.f32.mrf.mxu0
      %1590 = vmatprep.mubr.f32.mxu0 0.0
      %1591 = vmatmul.mubr.f32.gmra.mxu0 %v1474
      %v1592 = vpop.f32.mrf.mxu0
      %v1593 = vadd.f32 0.0, %v1592
      %v1594 = vpop.f32.mrf.mxu0
      %1595 = vdwg.mxu0
      %v1596 = vadd.f32 %v1459, %v1558
      %v1597 = vadd.f32 %v1460, %v1563
      %v1598 = vadd.f32 %v1461, %v1568
      %v1599 = vadd.f32 %v1462, %v1573
      %v1600 = vadd.f32 %v1463, %v1578
      %v1601 = vadd.f32 %v1464, %v1583
      %v1602 = vadd.f32 %v1465, %v1588
      %v1603 = vadd.f32 %v1466, %v1593
      %v1604 = vld [vmem:[%s2] sm:$0x1]
      %v1606 = vlaneseq
      %v1607 = vshrl.u32 %v1606, 7
      %v1608 = vsub.s32 0, %v1607
      %v1609 = vrot.slane %v1604, %v1608
      %v1611 = vadd.f32 %v1596, %v1609
      %v1612 = vadd.f32 %v1597, %v1609
      %v1613 = vadd.f32 %v1598, %v1609
      %v1614 = vadd.f32 %v1599, %v1609
      %v1615 = vadd.f32 %v1600, %v1609
      %v1616 = vadd.f32 %v1601, %v1609
      %v1617 = vadd.f32 %v1602, %v1609
      %v1618 = vadd.f32 %v1603, %v1609
      %1619 = vst [vmem:[%s244] sm:$0xff] %v1611
      %1620 = vst [vmem:[%s244 + $0x8] sm:$0xff] %v1612
      %1621 = vst [vmem:[%s244 + $0x10] sm:$0xff] %v1613
      %1622 = vst [vmem:[%s244 + $0x18] sm:$0xff] %v1614
      %1623 = vst [vmem:[%s244 + $0x20] sm:$0xff] %v1615
      %1624 = vst [vmem:[%s244 + $0x28] sm:$0xff] %v1616
      %1625 = vst [vmem:[%s244 + $0x30] sm:$0xff] %v1617
      %1626 = vst [vmem:[%s244 + $0x38] sm:$0xff] %v1618
      %p1627 = scmp.lt.s32.totalorder %s16, 1
      %s1628 = scalar_select %p1627, %s16, 1
      %s1629 = smul.addr %s1628, 8
      %s1630 = smul.addr %s1629, 8
      %s1631 = scalar_lea.vmem %s5, %s1630
      // Predicated region
      $region41: #{bottleneck_ir_udp_forward.3} parent=39 // pred_check
        %p1632 = pneg %p149
      $region42: #{bottleneck_ir_udp_forward.3} parent=39 // pred_check_branch
        %1634 = sbr.rel (%p1632) target = $region44
      $region43: #{bottleneck_ir_udp_forward.3} parent=39 // pred_region
        _
      $region44: #{bottleneck_ir_udp_forward.3} parent=39 // pred_fallthru
        _
    $region40: #{bottleneck_ir_udp_forward.3} parent=5 // pred_fallthru
      _
    %p1635 = scmp.le.s32.totalorder 2, %s11
    // Predicated region
    $region45: #{bottleneck_ir_udp_forward.3} parent=5 // pred_check
      %p1636 = pneg %p1635
    $region46: #{bottleneck_ir_udp_forward.3} parent=5 // pred_check_branch
      %1638 = sbr.rel (%p1636) target = $region48
    $region47: #{bottleneck_ir_udp_forward.3} parent=5 // pred_region
      %s1639 = ssub.s32 %s11, 2
      // Predicated region
      $region49: #{bottleneck_ir_udp_forward.3} parent=47 // pred_check
        %p1640 = pneg %p155
      $region50: #{bottleneck_ir_udp_forward.3} parent=47 // pred_check_branch
        %1642 = sbr.rel (%p1640) target = $region52
      $region51: #{bottleneck_ir_udp_forward.3} parent=47 // pred_region
        %p1643 = scmp.lt.s32.totalorder %s17, 1
        %s1644 = scalar_select %p1643, %s17, 1
        %s1645 = smul.addr %s1644, 8
        %s1646 = smul.addr %s1645, 8
        %s1647 = scalar_lea.vmem %s5, %s1646
      $region52: #{bottleneck_ir_udp_forward.3} parent=47 // pred_fallthru
        _
    $region48: #{bottleneck_ir_udp_forward.3} parent=5 // pred_fallthru
      _
  $region6: #{bottleneck_ir_udp_forward.3} parent=0 // loop_footer
    %s15 = sadd.s32 1, %s11
  $region7: #{bottleneck_ir_udp_forward.3} parent=0 // loop_footer_branch
    %10 = sbr.rel target = $region3
  $region8: #{bottleneck_ir_udp_forward.3} parent=0 // loop_exit
    _

</llo_original>
